<compile_context>
chip_gen: v7x
topology: tpu7x:2x2x1
jax: 0.10.0
libtpu: 0.0.40
codegen_flags: <defaults>
</compile_context>

<pallas_src>
import jax
import jax.numpy as jnp
from jax import lax
from jax.experimental import pallas as pl
from jax.experimental.pallas import tpu as pltpu

# ---- model dimensions (small, consistent with the module's forward) ----
B = 2          # batch
L = 8          # context length
D = 32         # transformer width
H = 4          # attention heads
DH = D // H    # head dim
E = 16         # text embedding dim
N_LAYERS = 2   # transformer depth
EPS = 1e-5     # nn.LayerNorm default eps
BL = B * L

# ---- packed per-layer weight slab (lane width 128), row map ----
R_WQKV = 0                        # rows   0..31  lanes 0..95 : [Wq|Wk|Wv]  (q pre-scaled)
R_WFC = 32                        # rows  32..63  lanes 0..127: c_fc weight   (D, 4D)
R_WPROJ = 64                      # rows 64..191  lanes 0..31 : c_proj weight (4D, D)
R_WO = 192                        # rows 192..223 lanes 0..31 : out_proj weight (D, D)
R_BQKV = 224                      # lanes 0..95  (q part pre-scaled)
R_BO = 225                        # lanes 0..31
R_BFC = 226                       # lanes 0..127
R_BPROJ = 227                     # lanes 0..31
R_LN1W, R_LN1B, R_LN2W, R_LN2B = 228, 229, 230, 231
WROWS = 232                       # multiple of 8

# ---- constant "misc" slab, row map ----
M_BIAS = 0                        # rows 0..15  lanes 0..15 : fused-batch causal bias
M_TPROJ = 16                      # rows 16..47 lanes 0..15 : text_projection (D, E)
M_LNFW, M_LNFB = 48, 49           # lanes 0..31
MROWS = 56

# ---- per-call "dyn" slab, row map ----
DYN_X = 0                         # rows 0..15 : prompts + pos_emb, flattened (B*L, D)
DYN_G = BL                        # rows 16..17 lanes 0..15 : EOT one-hot gather (B, B*L)
DROWS = 24


def _ln(v, w, b):
    # single-pass stats: sum(v) and sum(v*v) are independent lane reductions,
    # so the XLU does not see a serial two-reduction chain.
    mu = jnp.mean(v, axis=-1, keepdims=True)
    var = jnp.mean(v * v, axis=-1, keepdims=True) - mu * mu
    return (v - mu) * lax.rsqrt(var + EPS) * w + b


# ---------------------------------------------------------------------------
# Single fused kernel: the entire TextEncoder forward.  Grid-less; all three
# input slabs (~0.3 MB total) are VMEM-resident for the whole call.
# ---------------------------------------------------------------------------
def _text_encoder_kernel(dyn_ref, misc_ref, w_ref, out_ref, o_scr):
    x = dyn_ref[DYN_X:DYN_X + BL, :]                    # (B*L, D)
    gather = dyn_ref[DYN_G:DYN_G + B, 0:BL]             # (B, B*L) EOT one-hot
    bias = misc_ref[M_BIAS:M_BIAS + BL, 0:BL]           # (B*L, B*L) causal+batch mask

    for l in range(N_LAYERS):                           # static unroll
        # ---------------- attention branch ----------------
        h = _ln(x, w_ref[l, R_LN1W:R_LN1W + 1, 0:D],
                w_ref[l, R_LN1B:R_LN1B + 1, 0:D])
        # fused QKV projection: one (B*L, D) @ (D, 3D) MXU push per layer
        qkv = (jnp.dot(h, w_ref[l, R_WQKV:R_WQKV + D, 0:3 * D],
                       preferred_element_type=jnp.float32)
               + w_ref[l, R_BQKV:R_BQKV + 1, 0:3 * D])
        for hd in range(H):                              # 8-lane sub-slices per head
            q = qkv[:, hd * DH:(hd + 1) * DH]
            k = qkv[:, D + hd * DH:D + (hd + 1) * DH]
            v = qkv[:, 2 * D + hd * DH:2 * D + (hd + 1) * DH]
            s = lax.dot_general(q, k, (((1,), (1,)), ((), ())),
                                preferred_element_type=jnp.float32) + bias
            s = s - jnp.max(s, axis=-1, keepdims=True)
            p = jnp.exp(s)
            p = p / jnp.sum(p, axis=-1, keepdims=True)   # exact division (f32)
            # park head output at lane offset hd*DH; single out-proj afterwards
            o_scr[:, hd * DH:(hd + 1) * DH] = jnp.dot(
                p, v, preferred_element_type=jnp.float32)
        attn = (jnp.dot(o_scr[...], w_ref[l, R_WO:R_WO + D, 0:D],
                        preferred_element_type=jnp.float32)
                + w_ref[l, R_BO:R_BO + 1, 0:D])
        x = x + attn

        # ---------------- MLP branch (QuickGELU) ----------------
        h2 = _ln(x, w_ref[l, R_LN2W:R_LN2W + 1, 0:D],
                 w_ref[l, R_LN2B:R_LN2B + 1, 0:D])
        f = (jnp.dot(h2, w_ref[l, R_WFC:R_WFC + D, 0:4 * D],
                     preferred_element_type=jnp.float32)
             + w_ref[l, R_BFC:R_BFC + 1, 0:4 * D])
        f = f * jax.nn.sigmoid(1.702 * f)
        x = x + (jnp.dot(f, w_ref[l, R_WPROJ:R_WPROJ + 4 * D, 0:D],
                         preferred_element_type=jnp.float32)
                 + w_ref[l, R_BPROJ:R_BPROJ + 1, 0:D])

    # -------- EOT gather (one-hot matmul) + ln_final + text_projection --------
    sel = jnp.dot(gather, x, preferred_element_type=jnp.float32)        # (B, D)
    sel = _ln(sel, misc_ref[M_LNFW:M_LNFW + 1, 0:D],
              misc_ref[M_LNFB:M_LNFB + 1, 0:D])
    # NOTE: (B, E)=(2,16) store is a masked vst; negligible at this size.
    out_ref[...] = jnp.dot(sel, misc_ref[M_TPROJ:M_TPROJ + D, 0:E],
                           preferred_element_type=jnp.float32)


_fused_call = pl.pallas_call(
    _text_encoder_kernel,
    out_shape=jax.ShapeDtypeStruct((B, E), jnp.float32),
    in_specs=[pl.BlockSpec(memory_space=pltpu.MemorySpace.VMEM)] * 3,
    out_specs=pl.BlockSpec(memory_space=pltpu.MemorySpace.VMEM),
    scratch_shapes=[pltpu.VMEM((BL, D), jnp.float32)],   # per-layer head-concat buffer
)
# TODO(synk): if B or depth grows, add a batch grid with
# dimension_semantics=("parallel",) so both v7x TensorCores are used.


@jax.jit
def text_encoder_forward(prompts, tokenized_prompts, kp):
    # Wrapper-side layout plumbing (free XLA ops): pos add + flatten, EOT one-hot.
    x0 = (prompts + kp["pos_emb"][None]).reshape(BL, D)
    eot = jnp.argmax(tokenized_prompts, axis=-1)
    gather = jax.nn.one_hot(jnp.arange(B) * L + eot, BL, dtype=jnp.float32)
    dyn = jnp.zeros((DROWS, D), jnp.float32)
    dyn = dyn.at[DYN_X:DYN_X + BL, :].set(x0)
    dyn = dyn.at[DYN_G:DYN_G + B, 0:BL].set(gather)
    return _fused_call(dyn, kp["misc"], kp["wslab"])


# ---------------------------------------------------------------------------
# Deterministic synthetic parameters ("PyTorch-like" layout)
# ---------------------------------------------------------------------------
def init_params(key):
    kit = iter(jax.random.split(key, 32))

    def nrm(shape, scale):
        return jax.random.normal(next(kit), shape, jnp.float32) * scale

    return {
        "pos_emb": nrm((L, D), 0.01),
        "ln1_w": jnp.ones((N_LAYERS, D), jnp.float32),
        "ln1_b": jnp.zeros((N_LAYERS, D), jnp.float32),
        "wqkv": nrm((N_LAYERS, D, 3 * D), D ** -0.5),        # = in_proj_weight.T
        "bqkv": nrm((N_LAYERS, 3 * D), 0.01),
        "wo": nrm((N_LAYERS, D, D), D ** -0.5),               # = out_proj.weight.T
        "bo": nrm((N_LAYERS, D), 0.01),
        "ln2_w": jnp.ones((N_LAYERS, D), jnp.float32),
        "ln2_b": jnp.zeros((N_LAYERS, D), jnp.float32),
        "wfc": nrm((N_LAYERS, D, 4 * D), D ** -0.5),           # = c_fc.weight.T
        "bfc": nrm((N_LAYERS, 4 * D), 0.01),
        "wproj": nrm((N_LAYERS, 4 * D, D), (4 * D) ** -0.5),   # = c_proj.weight.T
        "bproj": nrm((N_LAYERS, D), 0.01),
        "lnf_w": jnp.ones((D,), jnp.float32),
        "lnf_b": jnp.zeros((D,), jnp.float32),
        "text_proj": nrm((D, E), D ** -0.5),
    }


def prepare_kernel_params(p):
    """One-time wrapper-side packing into lane-dense slabs (free layout plumbing)."""
    scale = DH ** -0.5
    # NOTE: the reference applies the 1/sqrt(DH) scale AFTER the q bias add, so
    # folding it into both W_q and b_q is exact.  Do not reuse this prep for a
    # model that scales q before adding the bias.
    wqkv = p["wqkv"].at[:, :, 0:D].multiply(scale)
    bqkv = p["bqkv"].at[:, 0:D].multiply(scale)

    wslab = jnp.zeros((N_LAYERS, WROWS, 128), jnp.float32)
    wslab = wslab.at[:, R_WQKV:R_WQKV + D, 0:3 * D].set(wqkv)
    wslab = wslab.at[:, R_WFC:R_WFC + D, 0:4 * D].set(p["wfc"])
    wslab = wslab.at[:, R_WPROJ:R_WPROJ + 4 * D, 0:D].set(p["wproj"])
    wslab = wslab.at[:, R_WO:R_WO + D, 0:D].set(p["wo"])
    wslab = wslab.at[:, R_BQKV, 0:3 * D].set(bqkv)
    wslab = wslab.at[:, R_BO, 0:D].set(p["bo"])
    wslab = wslab.at[:, R_BFC, 0:4 * D].set(p["bfc"])
    wslab = wslab.at[:, R_BPROJ, 0:D].set(p["bproj"])
    wslab = wslab.at[:, R_LN1W, 0:D].set(p["ln1_w"])
    wslab = wslab.at[:, R_LN1B, 0:D].set(p["ln1_b"])
    wslab = wslab.at[:, R_LN2W, 0:D].set(p["ln2_w"])
    wslab = wslab.at[:, R_LN2B, 0:D].set(p["ln2_b"])

    # Attention bias over the fused (B*L) row axis: causal within a sequence,
    # masked across batches.  Large finite negative (not -inf) so an all-masked
    # row can never produce NaN via exp(-inf - (-inf)); diag entries are 0 here.
    row = jnp.arange(BL)
    same_batch = (row[:, None] // L) == (row[None, :] // L)
    causal = (row[None, :] % L) <= (row[:, None] % L)
    bias = jnp.where(same_batch & causal, 0.0, -1e30).astype(jnp.float32)

    misc = jnp.zeros((MROWS, 128), jnp.float32)
    misc = misc.at[M_BIAS:M_BIAS + BL, 0:BL].set(bias)
    misc = misc.at[M_TPROJ:M_TPROJ + D, 0:E].set(p["text_proj"])
    misc = misc.at[M_LNFW, 0:D].set(p["lnf_w"])
    misc = misc.at[M_LNFB, 0:D].set(p["lnf_b"])

    return {"pos_emb": p["pos_emb"], "wslab": wslab, "misc": misc}


# ---------------------------------------------------------------------------
# Pure-JAX reference (independent, two-pass LayerNorm, -inf mask)
# ---------------------------------------------------------------------------
def _ln_ref(v, w, b):
    mu = jnp.mean(v, axis=-1, keepdims=True)
    var = jnp.mean((v - mu) ** 2, axis=-1, keepdims=True)
    return (v - mu) * lax.rsqrt(var + EPS) * w + b


def reference_forward(prompts, tokenized_prompts, p):
    x = prompts + p["pos_emb"][None]
    causal = jnp.triu(jnp.full((L, L), -jnp.inf, jnp.float32), k=1)
    for l in range(N_LAYERS):
        h = _ln_ref(x, p["ln1_w"][l], p["ln1_b"][l])
        qkv = h @ p["wqkv"][l] + p["bqkv"][l]
        q, k, v = jnp.split(qkv, 3, axis=-1)
        q = q.reshape(B, L, H, DH).transpose(0, 2, 1, 3) * DH ** -0.5
        k = k.reshape(B, L, H, DH).transpose(0, 2, 1, 3)
        v = v.reshape(B, L, H, DH).transpose(0, 2, 1, 3)
        s = jnp.einsum("bhqd,bhkd->bhqk", q, k) + causal
        a = jax.nn.softmax(s, axis=-1)
        o = jnp.einsum("bhqk,bhkd->bhqd", a, v).transpose(0, 2, 1, 3).reshape(B, L, D)
        x = x + (o @ p["wo"][l] + p["bo"][l])
        h2 = _ln_ref(x, p["ln2_w"][l], p["ln2_b"][l])
        f = h2 @ p["wfc"][l] + p["bfc"][l]
        f = f * jax.nn.sigmoid(1.702 * f)
        x = x + (f @ p["wproj"][l] + p["bproj"][l])
    eot = jnp.argmax(tokenized_prompts, axis=-1)
    sel = x[jnp.arange(B), eot]
    sel = _ln_ref(sel, p["lnf_w"], p["lnf_b"])
    return sel @ p["text_proj"]


if __name__ == "__main__":
    key = jax.random.PRNGKey(0)
    k_params, k_prompts, k_tok = jax.random.split(key, 3)

    params = init_params(k_params)
    kparams = prepare_kernel_params(params)      # one-time layout plumbing

    prompts = jax.random.normal(k_prompts, (B, L, D), jnp.float32)
    tokenized_prompts = jax.random.randint(k_tok, (B, L), 0, 1000, jnp.int32)

    out = jax.block_until_ready(text_encoder_forward(prompts, tokenized_prompts, kparams))
    ref = reference_forward(prompts, tokenized_prompts, params)

    if out.shape != (B, E):
        raise AssertionError(f"bad output shape {out.shape}")
    if not jnp.allclose(out, ref, atol=5e-4, rtol=5e-4):
        err = jnp.max(jnp.abs(out - ref))
        raise AssertionError(f"Pallas output does not match JAX reference (max err {err})")

    print("KERNEL_OK")
</pallas_src>

<mosaic_0001>
module attributes {stable_mosaic.version = 11 : i64} {
  func.func @_text_encoder_kernel(%arg0: memref<24x32xf32, #tpu.memory_space<vmem>>, %arg1: memref<56x128xf32, #tpu.memory_space<vmem>>, %arg2: memref<2x232x128xf32, #tpu.memory_space<vmem>>, %arg3: memref<2x16xf32, #tpu.memory_space<vmem>>, %arg4: memref<16x32xf32, #tpu.memory_space<vmem>>) attributes {dimension_semantics = [], scalar_prefetch = 0 : i64, scratch_operands = 1 : i64, tpu.core_type = #tpu.core_type<tc>} {
    %c0 = arith.constant 0 : index
    %c0_0 = arith.constant 0 : index
    %0 = vector.load %arg0[%c0, %c0_0] : memref<24x32xf32, #tpu.memory_space<vmem>>, vector<16x32xf32>
    %c16 = arith.constant 16 : index
    %c0_1 = arith.constant 0 : index
    %1 = vector.load %arg0[%c16, %c0_1] : memref<24x32xf32, #tpu.memory_space<vmem>>, vector<2x16xf32>
    %c0_2 = arith.constant 0 : index
    %c0_3 = arith.constant 0 : index
    %2 = vector.load %arg1[%c0_2, %c0_3] : memref<56x128xf32, #tpu.memory_space<vmem>>, vector<16x16xf32>
    %c0_4 = arith.constant 0 : index
    %c228 = arith.constant 228 : index
    %c0_5 = arith.constant 0 : index
    %3 = vector.load %arg2[%c0_4, %c228, %c0_5] : memref<2x232x128xf32, #tpu.memory_space<vmem>>, vector<1x1x32xf32>
    %4 = vector.shape_cast %3 : vector<1x1x32xf32> to vector<1x32xf32>
    %c0_6 = arith.constant 0 : index
    %c229 = arith.constant 229 : index
    %c0_7 = arith.constant 0 : index
    %5 = vector.load %arg2[%c0_6, %c229, %c0_7] : memref<2x232x128xf32, #tpu.memory_space<vmem>>, vector<1x1x32xf32>
    %6 = vector.shape_cast %5 : vector<1x1x32xf32> to vector<1x32xf32>
    %cst = arith.constant dense<0.000000e+00> : vector<16xf32>
    %7 = vector.multi_reduction <add>, %0, %cst [1] : vector<16x32xf32> to vector<16xf32>
    %8 = vector.shape_cast %7 : vector<16xf32> to vector<16x1xf32>
    %cst_8 = arith.constant 3.200000e+01 : f32
    %9 = vector.broadcast %cst_8 : f32 to vector<16x1xf32>
    %10 = arith.divf %8, %9 : vector<16x1xf32>
    %11 = arith.mulf %0, %0 : vector<16x32xf32>
    %cst_9 = arith.constant dense<0.000000e+00> : vector<16xf32>
    %12 = vector.multi_reduction <add>, %11, %cst_9 [1] : vector<16x32xf32> to vector<16xf32>
    %13 = vector.shape_cast %12 : vector<16xf32> to vector<16x1xf32>
    %cst_10 = arith.constant 3.200000e+01 : f32
    %14 = vector.broadcast %cst_10 : f32 to vector<16x1xf32>
    %15 = arith.divf %13, %14 : vector<16x1xf32>
    %16 = arith.mulf %10, %10 : vector<16x1xf32>
    %17 = arith.subf %15, %16 : vector<16x1xf32>
    %18 = vector.broadcast %10 : vector<16x1xf32> to vector<16x32xf32>
    %19 = arith.subf %0, %18 : vector<16x32xf32>
    %cst_11 = arith.constant 9.99999974E-6 : f32
    %20 = vector.broadcast %cst_11 : f32 to vector<16x1xf32>
    %21 = arith.addf %17, %20 : vector<16x1xf32>
    %22 = math.rsqrt %21 : vector<16x1xf32>
    %23 = vector.broadcast %22 : vector<16x1xf32> to vector<16x32xf32>
    %24 = arith.mulf %19, %23 : vector<16x32xf32>
    %25 = vector.broadcast %4 : vector<1x32xf32> to vector<16x32xf32>
    %26 = arith.mulf %24, %25 : vector<16x32xf32>
    %27 = vector.broadcast %6 : vector<1x32xf32> to vector<16x32xf32>
    %28 = arith.addf %26, %27 : vector<16x32xf32>
    %c0_12 = arith.constant 0 : index
    %c0_13 = arith.constant 0 : index
    %c0_14 = arith.constant 0 : index
    %29 = vector.load %arg2[%c0_12, %c0_13, %c0_14] : memref<2x232x128xf32, #tpu.memory_space<vmem>>, vector<1x32x96xf32>
    %30 = vector.shape_cast %29 : vector<1x32x96xf32> to vector<32x96xf32>
    %cst_15 = arith.constant dense<0.000000e+00> : vector<16x96xf32>
    %31 = tpu.matmul %28, %30, %cst_15 {dimension_numbers = #tpu.dot_dimension_numbers<[1], [0], [0], [1], [0, 0, 1, 1], [], []>} : vector<16x32xf32>, vector<32x96xf32>, vector<16x96xf32> -> vector<16x96xf32>
    %c0_16 = arith.constant 0 : index
    %c224 = arith.constant 224 : index
    %c0_17 = arith.constant 0 : index
    %32 = vector.load %arg2[%c0_16, %c224, %c0_17] : memref<2x232x128xf32, #tpu.memory_space<vmem>>, vector<1x1x96xf32>
    %33 = vector.shape_cast %32 : vector<1x1x96xf32> to vector<1x96xf32>
    %34 = vector.broadcast %33 : vector<1x96xf32> to vector<16x96xf32>
    %35 = arith.addf %31, %34 : vector<16x96xf32>
    %36 = vector.extract_strided_slice %35 {offsets = [0, 0], sizes = [16, 8], strides = [1, 1]} : vector<16x96xf32> to vector<16x8xf32>
    %37 = vector.extract_strided_slice %35 {offsets = [0, 32], sizes = [16, 8], strides = [1, 1]} : vector<16x96xf32> to vector<16x8xf32>
    %38 = vector.extract_strided_slice %35 {offsets = [0, 64], sizes = [16, 8], strides = [1, 1]} : vector<16x96xf32> to vector<16x8xf32>
    %cst_18 = arith.constant dense<0.000000e+00> : vector<16x16xf32>
    %39 = tpu.matmul %36, %37, %cst_18 {dimension_numbers = #tpu.dot_dimension_numbers<[1], [1], [0], [0], [0, 0, 1, 0], [], []>} : vector<16x8xf32>, vector<16x8xf32>, vector<16x16xf32> -> vector<16x16xf32>
    %40 = arith.addf %39, %2 : vector<16x16xf32>
    %cst_19 = arith.constant dense<0xFF800000> : vector<16xf32>
    %41 = vector.multi_reduction <maximumf>, %40, %cst_19 [1] : vector<16x16xf32> to vector<16xf32>
    %42 = vector.shape_cast %41 : vector<16xf32> to vector<16x1xf32>
    %43 = vector.broadcast %42 : vector<16x1xf32> to vector<16x16xf32>
    %44 = arith.subf %40, %43 : vector<16x16xf32>
    %45 = math.exp %44 : vector<16x16xf32>
    %cst_20 = arith.constant dense<0.000000e+00> : vector<16xf32>
    %46 = vector.multi_reduction <add>, %45, %cst_20 [1] : vector<16x16xf32> to vector<16xf32>
    %47 = vector.shape_cast %46 : vector<16xf32> to vector<16x1xf32>
    %48 = vector.broadcast %47 : vector<16x1xf32> to vector<16x16xf32>
    %49 = arith.divf %45, %48 : vector<16x16xf32>
    %cst_21 = arith.constant dense<0.000000e+00> : vector<16x8xf32>
    %50 = tpu.matmul %49, %38, %cst_21 {dimension_numbers = #tpu.dot_dimension_numbers<[1], [0], [0], [1], [0, 0, 1, 1], [], []>} : vector<16x16xf32>, vector<16x8xf32>, vector<16x8xf32> -> vector<16x8xf32>
    %c0_22 = arith.constant 0 : index
    %c0_23 = arith.constant 0 : index
    %51 = vector.load %arg4[%c0_22, %c0_23] : memref<16x32xf32, #tpu.memory_space<vmem>>, vector<16x8xf32>
    tpu.vector_store %arg4[%c0_22, %c0_23], %50 {strides = array<i32>} : memref<16x32xf32, #tpu.memory_space<vmem>>, vector<16x8xf32>,
    %52 = vector.extract_strided_slice %35 {offsets = [0, 8], sizes = [16, 8], strides = [1, 1]} : vector<16x96xf32> to vector<16x8xf32>
    %53 = vector.extract_strided_slice %35 {offsets = [0, 40], sizes = [16, 8], strides = [1, 1]} : vector<16x96xf32> to vector<16x8xf32>
    %54 = vector.extract_strided_slice %35 {offsets = [0, 72], sizes = [16, 8], strides = [1, 1]} : vector<16x96xf32> to vector<16x8xf32>
    %cst_24 = arith.constant dense<0.000000e+00> : vector<16x16xf32>
    %55 = tpu.matmul %52, %53, %cst_24 {dimension_numbers = #tpu.dot_dimension_numbers<[1], [1], [0], [0], [0, 0, 1, 0], [], []>} : vector<16x8xf32>, vector<16x8xf32>, vector<16x16xf32> -> vector<16x16xf32>
    %56 = arith.addf %55, %2 : vector<16x16xf32>
    %cst_25 = arith.constant dense<0xFF800000> : vector<16xf32>
    %57 = vector.multi_reduction <maximumf>, %56, %cst_25 [1] : vector<16x16xf32> to vector<16xf32>
    %58 = vector.shape_cast %57 : vector<16xf32> to vector<16x1xf32>
    %59 = vector.broadcast %58 : vector<16x1xf32> to vector<16x16xf32>
    %60 = arith.subf %56, %59 : vector<16x16xf32>
    %61 = math.exp %60 : vector<16x16xf32>
    %cst_26 = arith.constant dense<0.000000e+00> : vector<16xf32>
    %62 = vector.multi_reduction <add>, %61, %cst_26 [1] : vector<16x16xf32> to vector<16xf32>
    %63 = vector.shape_cast %62 : vector<16xf32> to vector<16x1xf32>
    %64 = vector.broadcast %63 : vector<16x1xf32> to vector<16x16xf32>
    %65 = arith.divf %61, %64 : vector<16x16xf32>
    %cst_27 = arith.constant dense<0.000000e+00> : vector<16x8xf32>
    %66 = tpu.matmul %65, %54, %cst_27 {dimension_numbers = #tpu.dot_dimension_numbers<[1], [0], [0], [1], [0, 0, 1, 1], [], []>} : vector<16x16xf32>, vector<16x8xf32>, vector<16x8xf32> -> vector<16x8xf32>
    %c0_28 = arith.constant 0 : index
    %c8 = arith.constant 8 : index
    %67 = vector.load %arg4[%c0_28, %c8] : memref<16x32xf32, #tpu.memory_space<vmem>>, vector<16x8xf32>
    tpu.vector_store %arg4[%c0_28, %c8], %66 {strides = array<i32>} : memref<16x32xf32, #tpu.memory_space<vmem>>, vector<16x8xf32>,
    %68 = vector.extract_strided_slice %35 {offsets = [0, 16], sizes = [16, 8], strides = [1, 1]} : vector<16x96xf32> to vector<16x8xf32>
    %69 = vector.extract_strided_slice %35 {offsets = [0, 48], sizes = [16, 8], strides = [1, 1]} : vector<16x96xf32> to vector<16x8xf32>
    %70 = vector.extract_strided_slice %35 {offsets = [0, 80], sizes = [16, 8], strides = [1, 1]} : vector<16x96xf32> to vector<16x8xf32>
    %cst_29 = arith.constant dense<0.000000e+00> : vector<16x16xf32>
    %71 = tpu.matmul %68, %69, %cst_29 {dimension_numbers = #tpu.dot_dimension_numbers<[1], [1], [0], [0], [0, 0, 1, 0], [], []>} : vector<16x8xf32>, vector<16x8xf32>, vector<16x16xf32> -> vector<16x16xf32>
    %72 = arith.addf %71, %2 : vector<16x16xf32>
    %cst_30 = arith.constant dense<0xFF800000> : vector<16xf32>
    %73 = vector.multi_reduction <maximumf>, %72, %cst_30 [1] : vector<16x16xf32> to vector<16xf32>
    %74 = vector.shape_cast %73 : vector<16xf32> to vector<16x1xf32>
    %75 = vector.broadcast %74 : vector<16x1xf32> to vector<16x16xf32>
    %76 = arith.subf %72, %75 : vector<16x16xf32>
    %77 = math.exp %76 : vector<16x16xf32>
    %cst_31 = arith.constant dense<0.000000e+00> : vector<16xf32>
    %78 = vector.multi_reduction <add>, %77, %cst_31 [1] : vector<16x16xf32> to vector<16xf32>
    %79 = vector.shape_cast %78 : vector<16xf32> to vector<16x1xf32>
    %80 = vector.broadcast %79 : vector<16x1xf32> to vector<16x16xf32>
    %81 = arith.divf %77, %80 : vector<16x16xf32>
    %cst_32 = arith.constant dense<0.000000e+00> : vector<16x8xf32>
    %82 = tpu.matmul %81, %70, %cst_32 {dimension_numbers = #tpu.dot_dimension_numbers<[1], [0], [0], [1], [0, 0, 1, 1], [], []>} : vector<16x16xf32>, vector<16x8xf32>, vector<16x8xf32> -> vector<16x8xf32>
    %c0_33 = arith.constant 0 : index
    %c16_34 = arith.constant 16 : index
    %83 = vector.load %arg4[%c0_33, %c16_34] : memref<16x32xf32, #tpu.memory_space<vmem>>, vector<16x8xf32>
    tpu.vector_store %arg4[%c0_33, %c16_34], %82 {strides = array<i32>} : memref<16x32xf32, #tpu.memory_space<vmem>>, vector<16x8xf32>,
    %84 = vector.extract_strided_slice %35 {offsets = [0, 24], sizes = [16, 8], strides = [1, 1]} : vector<16x96xf32> to vector<16x8xf32>
    %85 = vector.extract_strided_slice %35 {offsets = [0, 56], sizes = [16, 8], strides = [1, 1]} : vector<16x96xf32> to vector<16x8xf32>
    %86 = vector.extract_strided_slice %35 {offsets = [0, 88], sizes = [16, 8], strides = [1, 1]} : vector<16x96xf32> to vector<16x8xf32>
    %cst_35 = arith.constant dense<0.000000e+00> : vector<16x16xf32>
    %87 = tpu.matmul %84, %85, %cst_35 {dimension_numbers = #tpu.dot_dimension_numbers<[1], [1], [0], [0], [0, 0, 1, 0], [], []>} : vector<16x8xf32>, vector<16x8xf32>, vector<16x16xf32> -> vector<16x16xf32>
    %88 = arith.addf %87, %2 : vector<16x16xf32>
    %cst_36 = arith.constant dense<0xFF800000> : vector<16xf32>
    %89 = vector.multi_reduction <maximumf>, %88, %cst_36 [1] : vector<16x16xf32> to vector<16xf32>
    %90 = vector.shape_cast %89 : vector<16xf32> to vector<16x1xf32>
    %91 = vector.broadcast %90 : vector<16x1xf32> to vector<16x16xf32>
    %92 = arith.subf %88, %91 : vector<16x16xf32>
    %93 = math.exp %92 : vector<16x16xf32>
    %cst_37 = arith.constant dense<0.000000e+00> : vector<16xf32>
    %94 = vector.multi_reduction <add>, %93, %cst_37 [1] : vector<16x16xf32> to vector<16xf32>
    %95 = vector.shape_cast %94 : vector<16xf32> to vector<16x1xf32>
    %96 = vector.broadcast %95 : vector<16x1xf32> to vector<16x16xf32>
    %97 = arith.divf %93, %96 : vector<16x16xf32>
    %cst_38 = arith.constant dense<0.000000e+00> : vector<16x8xf32>
    %98 = tpu.matmul %97, %86, %cst_38 {dimension_numbers = #tpu.dot_dimension_numbers<[1], [0], [0], [1], [0, 0, 1, 1], [], []>} : vector<16x16xf32>, vector<16x8xf32>, vector<16x8xf32> -> vector<16x8xf32>
    %c0_39 = arith.constant 0 : index
    %c24 = arith.constant 24 : index
    %99 = vector.load %arg4[%c0_39, %c24] : memref<16x32xf32, #tpu.memory_space<vmem>>, vector<16x8xf32>
    tpu.vector_store %arg4[%c0_39, %c24], %98 {strides = array<i32>} : memref<16x32xf32, #tpu.memory_space<vmem>>, vector<16x8xf32>,
    %c0_40 = arith.constant 0 : index
    %c0_41 = arith.constant 0 : index
    %100 = vector.load %arg4[%c0_40, %c0_41] : memref<16x32xf32, #tpu.memory_space<vmem>>, vector<16x32xf32>
    %c0_42 = arith.constant 0 : index
    %c192 = arith.constant 192 : index
    %c0_43 = arith.constant 0 : index
    %101 = vector.load %arg2[%c0_42, %c192, %c0_43] : memref<2x232x128xf32, #tpu.memory_space<vmem>>, vector<1x32x32xf32>
    %102 = vector.shape_cast %101 : vector<1x32x32xf32> to vector<32x32xf32>
    %cst_44 = arith.constant dense<0.000000e+00> : vector<16x32xf32>
    %103 = tpu.matmul %100, %102, %cst_44 {dimension_numbers = #tpu.dot_dimension_numbers<[1], [0], [0], [1], [0, 0, 1, 1], [], []>} : vector<16x32xf32>, vector<32x32xf32>, vector<16x32xf32> -> vector<16x32xf32>
    %c0_45 = arith.constant 0 : index
    %c225 = arith.constant 225 : index
    %c0_46 = arith.constant 0 : index
    %104 = vector.load %arg2[%c0_45, %c225, %c0_46] : memref<2x232x128xf32, #tpu.memory_space<vmem>>, vector<1x1x32xf32>
    %105 = vector.shape_cast %104 : vector<1x1x32xf32> to vector<1x32xf32>
    %106 = vector.broadcast %105 : vector<1x32xf32> to vector<16x32xf32>
    %107 = arith.addf %103, %106 : vector<16x32xf32>
    %108 = arith.addf %0, %107 : vector<16x32xf32>
    %c0_47 = arith.constant 0 : index
    %c230 = arith.constant 230 : index
    %c0_48 = arith.constant 0 : index
    %109 = vector.load %arg2[%c0_47, %c230, %c0_48] : memref<2x232x128xf32, #tpu.memory_space<vmem>>, vector<1x1x32xf32>
    %110 = vector.shape_cast %109 : vector<1x1x32xf32> to vector<1x32xf32>
    %c0_49 = arith.constant 0 : index
    %c231 = arith.constant 231 : index
    %c0_50 = arith.constant 0 : index
    %111 = vector.load %arg2[%c0_49, %c231, %c0_50] : memref<2x232x128xf32, #tpu.memory_space<vmem>>, vector<1x1x32xf32>
    %112 = vector.shape_cast %111 : vector<1x1x32xf32> to vector<1x32xf32>
    %cst_51 = arith.constant dense<0.000000e+00> : vector<16xf32>
    %113 = vector.multi_reduction <add>, %108, %cst_51 [1] : vector<16x32xf32> to vector<16xf32>
    %114 = vector.shape_cast %113 : vector<16xf32> to vector<16x1xf32>
    %cst_52 = arith.constant 3.200000e+01 : f32
    %115 = vector.broadcast %cst_52 : f32 to vector<16x1xf32>
    %116 = arith.divf %114, %115 : vector<16x1xf32>
    %117 = arith.mulf %108, %108 : vector<16x32xf32>
    %cst_53 = arith.constant dense<0.000000e+00> : vector<16xf32>
    %118 = vector.multi_reduction <add>, %117, %cst_53 [1] : vector<16x32xf32> to vector<16xf32>
    %119 = vector.shape_cast %118 : vector<16xf32> to vector<16x1xf32>
    %cst_54 = arith.constant 3.200000e+01 : f32
    %120 = vector.broadcast %cst_54 : f32 to vector<16x1xf32>
    %121 = arith.divf %119, %120 : vector<16x1xf32>
    %122 = arith.mulf %116, %116 : vector<16x1xf32>
    %123 = arith.subf %121, %122 : vector<16x1xf32>
    %124 = vector.broadcast %116 : vector<16x1xf32> to vector<16x32xf32>
    %125 = arith.subf %108, %124 : vector<16x32xf32>
    %cst_55 = arith.constant 9.99999974E-6 : f32
    %126 = vector.broadcast %cst_55 : f32 to vector<16x1xf32>
    %127 = arith.addf %123, %126 : vector<16x1xf32>
    %128 = math.rsqrt %127 : vector<16x1xf32>
    %129 = vector.broadcast %128 : vector<16x1xf32> to vector<16x32xf32>
    %130 = arith.mulf %125, %129 : vector<16x32xf32>
    %131 = vector.broadcast %110 : vector<1x32xf32> to vector<16x32xf32>
    %132 = arith.mulf %130, %131 : vector<16x32xf32>
    %133 = vector.broadcast %112 : vector<1x32xf32> to vector<16x32xf32>
    %134 = arith.addf %132, %133 : vector<16x32xf32>
    %c0_56 = arith.constant 0 : index
    %c32 = arith.constant 32 : index
    %c0_57 = arith.constant 0 : index
    %135 = vector.load %arg2[%c0_56, %c32, %c0_57] : memref<2x232x128xf32, #tpu.memory_space<vmem>>, vector<1x32x128xf32>
    %136 = vector.shape_cast %135 : vector<1x32x128xf32> to vector<32x128xf32>
    %cst_58 = arith.constant dense<0.000000e+00> : vector<16x128xf32>
    %137 = tpu.matmul %134, %136, %cst_58 {dimension_numbers = #tpu.dot_dimension_numbers<[1], [0], [0], [1], [0, 0, 1, 1], [], []>} : vector<16x32xf32>, vector<32x128xf32>, vector<16x128xf32> -> vector<16x128xf32>
    %c0_59 = arith.constant 0 : index
    %c226 = arith.constant 226 : index
    %c0_60 = arith.constant 0 : index
    %138 = vector.load %arg2[%c0_59, %c226, %c0_60] : memref<2x232x128xf32, #tpu.memory_space<vmem>>, vector<1x1x128xf32>
    %139 = vector.shape_cast %138 : vector<1x1x128xf32> to vector<1x128xf32>
    %140 = vector.broadcast %139 : vector<1x128xf32> to vector<16x128xf32>
    %141 = arith.addf %137, %140 : vector<16x128xf32>
    %cst_61 = arith.constant 1.702000e+00 : f32
    %142 = vector.broadcast %cst_61 : f32 to vector<16x128xf32>
    %143 = arith.mulf %142, %141 : vector<16x128xf32>
    %144 = arith.negf %143 : vector<16x128xf32>
    %145 = math.exp %144 : vector<16x128xf32>
    %cst_62 = arith.constant 1.000000e+00 : f32
    %146 = vector.broadcast %cst_62 : f32 to vector<16x128xf32>
    %147 = arith.addf %146, %145 : vector<16x128xf32>
    %148 = arith.divf %146, %147 : vector<16x128xf32>
    %149 = arith.mulf %141, %148 : vector<16x128xf32>
    %c0_63 = arith.constant 0 : index
    %c64 = arith.constant 64 : index
    %c0_64 = arith.constant 0 : index
    %150 = vector.load %arg2[%c0_63, %c64, %c0_64] : memref<2x232x128xf32, #tpu.memory_space<vmem>>, vector<1x128x32xf32>
    %151 = vector.shape_cast %150 : vector<1x128x32xf32> to vector<128x32xf32>
    %cst_65 = arith.constant dense<0.000000e+00> : vector<16x32xf32>
    %152 = tpu.matmul %149, %151, %cst_65 {dimension_numbers = #tpu.dot_dimension_numbers<[1], [0], [0], [1], [0, 0, 1, 1], [], []>} : vector<16x128xf32>, vector<128x32xf32>, vector<16x32xf32> -> vector<16x32xf32>
    %c0_66 = arith.constant 0 : index
    %c227 = arith.constant 227 : index
    %c0_67 = arith.constant 0 : index
    %153 = vector.load %arg2[%c0_66, %c227, %c0_67] : memref<2x232x128xf32, #tpu.memory_space<vmem>>, vector<1x1x32xf32>
    %154 = vector.shape_cast %153 : vector<1x1x32xf32> to vector<1x32xf32>
    %155 = vector.broadcast %154 : vector<1x32xf32> to vector<16x32xf32>
    %156 = arith.addf %152, %155 : vector<16x32xf32>
    %157 = arith.addf %108, %156 : vector<16x32xf32>
    %c1 = arith.constant 1 : index
    %c228_68 = arith.constant 228 : index
    %c0_69 = arith.constant 0 : index
    %158 = vector.load %arg2[%c1, %c228_68, %c0_69] : memref<2x232x128xf32, #tpu.memory_space<vmem>>, vector<1x1x32xf32>
    %159 = vector.shape_cast %158 : vector<1x1x32xf32> to vector<1x32xf32>
    %c1_70 = arith.constant 1 : index
    %c229_71 = arith.constant 229 : index
    %c0_72 = arith.constant 0 : index
    %160 = vector.load %arg2[%c1_70, %c229_71, %c0_72] : memref<2x232x128xf32, #tpu.memory_space<vmem>>, vector<1x1x32xf32>
    %161 = vector.shape_cast %160 : vector<1x1x32xf32> to vector<1x32xf32>
    %cst_73 = arith.constant dense<0.000000e+00> : vector<16xf32>
    %162 = vector.multi_reduction <add>, %157, %cst_73 [1] : vector<16x32xf32> to vector<16xf32>
    %163 = vector.shape_cast %162 : vector<16xf32> to vector<16x1xf32>
    %cst_74 = arith.constant 3.200000e+01 : f32
    %164 = vector.broadcast %cst_74 : f32 to vector<16x1xf32>
    %165 = arith.divf %163, %164 : vector<16x1xf32>
    %166 = arith.mulf %157, %157 : vector<16x32xf32>
    %cst_75 = arith.constant dense<0.000000e+00> : vector<16xf32>
    %167 = vector.multi_reduction <add>, %166, %cst_75 [1] : vector<16x32xf32> to vector<16xf32>
    %168 = vector.shape_cast %167 : vector<16xf32> to vector<16x1xf32>
    %cst_76 = arith.constant 3.200000e+01 : f32
    %169 = vector.broadcast %cst_76 : f32 to vector<16x1xf32>
    %170 = arith.divf %168, %169 : vector<16x1xf32>
    %171 = arith.mulf %165, %165 : vector<16x1xf32>
    %172 = arith.subf %170, %171 : vector<16x1xf32>
    %173 = vector.broadcast %165 : vector<16x1xf32> to vector<16x32xf32>
    %174 = arith.subf %157, %173 : vector<16x32xf32>
    %cst_77 = arith.constant 9.99999974E-6 : f32
    %175 = vector.broadcast %cst_77 : f32 to vector<16x1xf32>
    %176 = arith.addf %172, %175 : vector<16x1xf32>
    %177 = math.rsqrt %176 : vector<16x1xf32>
    %178 = vector.broadcast %177 : vector<16x1xf32> to vector<16x32xf32>
    %179 = arith.mulf %174, %178 : vector<16x32xf32>
    %180 = vector.broadcast %159 : vector<1x32xf32> to vector<16x32xf32>
    %181 = arith.mulf %179, %180 : vector<16x32xf32>
    %182 = vector.broadcast %161 : vector<1x32xf32> to vector<16x32xf32>
    %183 = arith.addf %181, %182 : vector<16x32xf32>
    %c1_78 = arith.constant 1 : index
    %c0_79 = arith.constant 0 : index
    %c0_80 = arith.constant 0 : index
    %184 = vector.load %arg2[%c1_78, %c0_79, %c0_80] : memref<2x232x128xf32, #tpu.memory_space<vmem>>, vector<1x32x96xf32>
    %185 = vector.shape_cast %184 : vector<1x32x96xf32> to vector<32x96xf32>
    %cst_81 = arith.constant dense<0.000000e+00> : vector<16x96xf32>
    %186 = tpu.matmul %183, %185, %cst_81 {dimension_numbers = #tpu.dot_dimension_numbers<[1], [0], [0], [1], [0, 0, 1, 1], [], []>} : vector<16x32xf32>, vector<32x96xf32>, vector<16x96xf32> -> vector<16x96xf32>
    %c1_82 = arith.constant 1 : index
    %c224_83 = arith.constant 224 : index
    %c0_84 = arith.constant 0 : index
    %187 = vector.load %arg2[%c1_82, %c224_83, %c0_84] : memref<2x232x128xf32, #tpu.memory_space<vmem>>, vector<1x1x96xf32>
    %188 = vector.shape_cast %187 : vector<1x1x96xf32> to vector<1x96xf32>
    %189 = vector.broadcast %188 : vector<1x96xf32> to vector<16x96xf32>
    %190 = arith.addf %186, %189 : vector<16x96xf32>
    %191 = vector.extract_strided_slice %190 {offsets = [0, 0], sizes = [16, 8], strides = [1, 1]} : vector<16x96xf32> to vector<16x8xf32>
    %192 = vector.extract_strided_slice %190 {offsets = [0, 32], sizes = [16, 8], strides = [1, 1]} : vector<16x96xf32> to vector<16x8xf32>
    %193 = vector.extract_strided_slice %190 {offsets = [0, 64], sizes = [16, 8], strides = [1, 1]} : vector<16x96xf32> to vector<16x8xf32>
    %cst_85 = arith.constant dense<0.000000e+00> : vector<16x16xf32>
    %194 = tpu.matmul %191, %192, %cst_85 {dimension_numbers = #tpu.dot_dimension_numbers<[1], [1], [0], [0], [0, 0, 1, 0], [], []>} : vector<16x8xf32>, vector<16x8xf32>, vector<16x16xf32> -> vector<16x16xf32>
    %195 = arith.addf %194, %2 : vector<16x16xf32>
    %cst_86 = arith.constant dense<0xFF800000> : vector<16xf32>
    %196 = vector.multi_reduction <maximumf>, %195, %cst_86 [1] : vector<16x16xf32> to vector<16xf32>
    %197 = vector.shape_cast %196 : vector<16xf32> to vector<16x1xf32>
    %198 = vector.broadcast %197 : vector<16x1xf32> to vector<16x16xf32>
    %199 = arith.subf %195, %198 : vector<16x16xf32>
    %200 = math.exp %199 : vector<16x16xf32>
    %cst_87 = arith.constant dense<0.000000e+00> : vector<16xf32>
    %201 = vector.multi_reduction <add>, %200, %cst_87 [1] : vector<16x16xf32> to vector<16xf32>
    %202 = vector.shape_cast %201 : vector<16xf32> to vector<16x1xf32>
    %203 = vector.broadcast %202 : vector<16x1xf32> to vector<16x16xf32>
    %204 = arith.divf %200, %203 : vector<16x16xf32>
    %cst_88 = arith.constant dense<0.000000e+00> : vector<16x8xf32>
    %205 = tpu.matmul %204, %193, %cst_88 {dimension_numbers = #tpu.dot_dimension_numbers<[1], [0], [0], [1], [0, 0, 1, 1], [], []>} : vector<16x16xf32>, vector<16x8xf32>, vector<16x8xf32> -> vector<16x8xf32>
    %c0_89 = arith.constant 0 : index
    %c0_90 = arith.constant 0 : index
    %206 = vector.load %arg4[%c0_89, %c0_90] : memref<16x32xf32, #tpu.memory_space<vmem>>, vector<16x8xf32>
    tpu.vector_store %arg4[%c0_89, %c0_90], %205 {strides = array<i32>} : memref<16x32xf32, #tpu.memory_space<vmem>>, vector<16x8xf32>,
    %207 = vector.extract_strided_slice %190 {offsets = [0, 8], sizes = [16, 8], strides = [1, 1]} : vector<16x96xf32> to vector<16x8xf32>
    %208 = vector.extract_strided_slice %190 {offsets = [0, 40], sizes = [16, 8], strides = [1, 1]} : vector<16x96xf32> to vector<16x8xf32>
    %209 = vector.extract_strided_slice %190 {offsets = [0, 72], sizes = [16, 8], strides = [1, 1]} : vector<16x96xf32> to vector<16x8xf32>
    %cst_91 = arith.constant dense<0.000000e+00> : vector<16x16xf32>
    %210 = tpu.matmul %207, %208, %cst_91 {dimension_numbers = #tpu.dot_dimension_numbers<[1], [1], [0], [0], [0, 0, 1, 0], [], []>} : vector<16x8xf32>, vector<16x8xf32>, vector<16x16xf32> -> vector<16x16xf32>
    %211 = arith.addf %210, %2 : vector<16x16xf32>
    %cst_92 = arith.constant dense<0xFF800000> : vector<16xf32>
    %212 = vector.multi_reduction <maximumf>, %211, %cst_92 [1] : vector<16x16xf32> to vector<16xf32>
    %213 = vector.shape_cast %212 : vector<16xf32> to vector<16x1xf32>
    %214 = vector.broadcast %213 : vector<16x1xf32> to vector<16x16xf32>
    %215 = arith.subf %211, %214 : vector<16x16xf32>
    %216 = math.exp %215 : vector<16x16xf32>
    %cst_93 = arith.constant dense<0.000000e+00> : vector<16xf32>
    %217 = vector.multi_reduction <add>, %216, %cst_93 [1] : vector<16x16xf32> to vector<16xf32>
    %218 = vector.shape_cast %217 : vector<16xf32> to vector<16x1xf32>
    %219 = vector.broadcast %218 : vector<16x1xf32> to vector<16x16xf32>
    %220 = arith.divf %216, %219 : vector<16x16xf32>
    %cst_94 = arith.constant dense<0.000000e+00> : vector<16x8xf32>
    %221 = tpu.matmul %220, %209, %cst_94 {dimension_numbers = #tpu.dot_dimension_numbers<[1], [0], [0], [1], [0, 0, 1, 1], [], []>} : vector<16x16xf32>, vector<16x8xf32>, vector<16x8xf32> -> vector<16x8xf32>
    %c0_95 = arith.constant 0 : index
    %c8_96 = arith.constant 8 : index
    %222 = vector.load %arg4[%c0_95, %c8_96] : memref<16x32xf32, #tpu.memory_space<vmem>>, vector<16x8xf32>
    tpu.vector_store %arg4[%c0_95, %c8_96], %221 {strides = array<i32>} : memref<16x32xf32, #tpu.memory_space<vmem>>, vector<16x8xf32>,
    %223 = vector.extract_strided_slice %190 {offsets = [0, 16], sizes = [16, 8], strides = [1, 1]} : vector<16x96xf32> to vector<16x8xf32>
    %224 = vector.extract_strided_slice %190 {offsets = [0, 48], sizes = [16, 8], strides = [1, 1]} : vector<16x96xf32> to vector<16x8xf32>
    %225 = vector.extract_strided_slice %190 {offsets = [0, 80], sizes = [16, 8], strides = [1, 1]} : vector<16x96xf32> to vector<16x8xf32>
    %cst_97 = arith.constant dense<0.000000e+00> : vector<16x16xf32>
    %226 = tpu.matmul %223, %224, %cst_97 {dimension_numbers = #tpu.dot_dimension_numbers<[1], [1], [0], [0], [0, 0, 1, 0], [], []>} : vector<16x8xf32>, vector<16x8xf32>, vector<16x16xf32> -> vector<16x16xf32>
    %227 = arith.addf %226, %2 : vector<16x16xf32>
    %cst_98 = arith.constant dense<0xFF800000> : vector<16xf32>
    %228 = vector.multi_reduction <maximumf>, %227, %cst_98 [1] : vector<16x16xf32> to vector<16xf32>
    %229 = vector.shape_cast %228 : vector<16xf32> to vector<16x1xf32>
    %230 = vector.broadcast %229 : vector<16x1xf32> to vector<16x16xf32>
    %231 = arith.subf %227, %230 : vector<16x16xf32>
    %232 = math.exp %231 : vector<16x16xf32>
    %cst_99 = arith.constant dense<0.000000e+00> : vector<16xf32>
    %233 = vector.multi_reduction <add>, %232, %cst_99 [1] : vector<16x16xf32> to vector<16xf32>
    %234 = vector.shape_cast %233 : vector<16xf32> to vector<16x1xf32>
    %235 = vector.broadcast %234 : vector<16x1xf32> to vector<16x16xf32>
    %236 = arith.divf %232, %235 : vector<16x16xf32>
    %cst_100 = arith.constant dense<0.000000e+00> : vector<16x8xf32>
    %237 = tpu.matmul %236, %225, %cst_100 {dimension_numbers = #tpu.dot_dimension_numbers<[1], [0], [0], [1], [0, 0, 1, 1], [], []>} : vector<16x16xf32>, vector<16x8xf32>, vector<16x8xf32> -> vector<16x8xf32>
    %c0_101 = arith.constant 0 : index
    %c16_102 = arith.constant 16 : index
    %238 = vector.load %arg4[%c0_101, %c16_102] : memref<16x32xf32, #tpu.memory_space<vmem>>, vector<16x8xf32>
    tpu.vector_store %arg4[%c0_101, %c16_102], %237 {strides = array<i32>} : memref<16x32xf32, #tpu.memory_space<vmem>>, vector<16x8xf32>,
    %239 = vector.extract_strided_slice %190 {offsets = [0, 24], sizes = [16, 8], strides = [1, 1]} : vector<16x96xf32> to vector<16x8xf32>
    %240 = vector.extract_strided_slice %190 {offsets = [0, 56], sizes = [16, 8], strides = [1, 1]} : vector<16x96xf32> to vector<16x8xf32>
    %241 = vector.extract_strided_slice %190 {offsets = [0, 88], sizes = [16, 8], strides = [1, 1]} : vector<16x96xf32> to vector<16x8xf32>
    %cst_103 = arith.constant dense<0.000000e+00> : vector<16x16xf32>
    %242 = tpu.matmul %239, %240, %cst_103 {dimension_numbers = #tpu.dot_dimension_numbers<[1], [1], [0], [0], [0, 0, 1, 0], [], []>} : vector<16x8xf32>, vector<16x8xf32>, vector<16x16xf32> -> vector<16x16xf32>
    %243 = arith.addf %242, %2 : vector<16x16xf32>
    %cst_104 = arith.constant dense<0xFF800000> : vector<16xf32>
    %244 = vector.multi_reduction <maximumf>, %243, %cst_104 [1] : vector<16x16xf32> to vector<16xf32>
    %245 = vector.shape_cast %244 : vector<16xf32> to vector<16x1xf32>
    %246 = vector.broadcast %245 : vector<16x1xf32> to vector<16x16xf32>
    %247 = arith.subf %243, %246 : vector<16x16xf32>
    %248 = math.exp %247 : vector<16x16xf32>
    %cst_105 = arith.constant dense<0.000000e+00> : vector<16xf32>
    %249 = vector.multi_reduction <add>, %248, %cst_105 [1] : vector<16x16xf32> to vector<16xf32>
    %250 = vector.shape_cast %249 : vector<16xf32> to vector<16x1xf32>
    %251 = vector.broadcast %250 : vector<16x1xf32> to vector<16x16xf32>
    %252 = arith.divf %248, %251 : vector<16x16xf32>
    %cst_106 = arith.constant dense<0.000000e+00> : vector<16x8xf32>
    %253 = tpu.matmul %252, %241, %cst_106 {dimension_numbers = #tpu.dot_dimension_numbers<[1], [0], [0], [1], [0, 0, 1, 1], [], []>} : vector<16x16xf32>, vector<16x8xf32>, vector<16x8xf32> -> vector<16x8xf32>
    %c0_107 = arith.constant 0 : index
    %c24_108 = arith.constant 24 : index
    %254 = vector.load %arg4[%c0_107, %c24_108] : memref<16x32xf32, #tpu.memory_space<vmem>>, vector<16x8xf32>
    tpu.vector_store %arg4[%c0_107, %c24_108], %253 {strides = array<i32>} : memref<16x32xf32, #tpu.memory_space<vmem>>, vector<16x8xf32>,
    %c0_109 = arith.constant 0 : index
    %c0_110 = arith.constant 0 : index
    %255 = vector.load %arg4[%c0_109, %c0_110] : memref<16x32xf32, #tpu.memory_space<vmem>>, vector<16x32xf32>
    %c1_111 = arith.constant 1 : index
    %c192_112 = arith.constant 192 : index
    %c0_113 = arith.constant 0 : index
    %256 = vector.load %arg2[%c1_111, %c192_112, %c0_113] : memref<2x232x128xf32, #tpu.memory_space<vmem>>, vector<1x32x32xf32>
    %257 = vector.shape_cast %256 : vector<1x32x32xf32> to vector<32x32xf32>
    %cst_114 = arith.constant dense<0.000000e+00> : vector<16x32xf32>
    %258 = tpu.matmul %255, %257, %cst_114 {dimension_numbers = #tpu.dot_dimension_numbers<[1], [0], [0], [1], [0, 0, 1, 1], [], []>} : vector<16x32xf32>, vector<32x32xf32>, vector<16x32xf32> -> vector<16x32xf32>
    %c1_115 = arith.constant 1 : index
    %c225_116 = arith.constant 225 : index
    %c0_117 = arith.constant 0 : index
    %259 = vector.load %arg2[%c1_115, %c225_116, %c0_117] : memref<2x232x128xf32, #tpu.memory_space<vmem>>, vector<1x1x32xf32>
    %260 = vector.shape_cast %259 : vector<1x1x32xf32> to vector<1x32xf32>
    %261 = vector.broadcast %260 : vector<1x32xf32> to vector<16x32xf32>
    %262 = arith.addf %258, %261 : vector<16x32xf32>
    %263 = arith.addf %157, %262 : vector<16x32xf32>
    %c1_118 = arith.constant 1 : index
    %c230_119 = arith.constant 230 : index
    %c0_120 = arith.constant 0 : index
    %264 = vector.load %arg2[%c1_118, %c230_119, %c0_120] : memref<2x232x128xf32, #tpu.memory_space<vmem>>, vector<1x1x32xf32>
    %265 = vector.shape_cast %264 : vector<1x1x32xf32> to vector<1x32xf32>
    %c1_121 = arith.constant 1 : index
    %c231_122 = arith.constant 231 : index
    %c0_123 = arith.constant 0 : index
    %266 = vector.load %arg2[%c1_121, %c231_122, %c0_123] : memref<2x232x128xf32, #tpu.memory_space<vmem>>, vector<1x1x32xf32>
    %267 = vector.shape_cast %266 : vector<1x1x32xf32> to vector<1x32xf32>
    %cst_124 = arith.constant dense<0.000000e+00> : vector<16xf32>
    %268 = vector.multi_reduction <add>, %263, %cst_124 [1] : vector<16x32xf32> to vector<16xf32>
    %269 = vector.shape_cast %268 : vector<16xf32> to vector<16x1xf32>
    %cst_125 = arith.constant 3.200000e+01 : f32
    %270 = vector.broadcast %cst_125 : f32 to vector<16x1xf32>
    %271 = arith.divf %269, %270 : vector<16x1xf32>
    %272 = arith.mulf %263, %263 : vector<16x32xf32>
    %cst_126 = arith.constant dense<0.000000e+00> : vector<16xf32>
    %273 = vector.multi_reduction <add>, %272, %cst_126 [1] : vector<16x32xf32> to vector<16xf32>
    %274 = vector.shape_cast %273 : vector<16xf32> to vector<16x1xf32>
    %cst_127 = arith.constant 3.200000e+01 : f32
    %275 = vector.broadcast %cst_127 : f32 to vector<16x1xf32>
    %276 = arith.divf %274, %275 : vector<16x1xf32>
    %277 = arith.mulf %271, %271 : vector<16x1xf32>
    %278 = arith.subf %276, %277 : vector<16x1xf32>
    %279 = vector.broadcast %271 : vector<16x1xf32> to vector<16x32xf32>
    %280 = arith.subf %263, %279 : vector<16x32xf32>
    %cst_128 = arith.constant 9.99999974E-6 : f32
    %281 = vector.broadcast %cst_128 : f32 to vector<16x1xf32>
    %282 = arith.addf %278, %281 : vector<16x1xf32>
    %283 = math.rsqrt %282 : vector<16x1xf32>
    %284 = vector.broadcast %283 : vector<16x1xf32> to vector<16x32xf32>
    %285 = arith.mulf %280, %284 : vector<16x32xf32>
    %286 = vector.broadcast %265 : vector<1x32xf32> to vector<16x32xf32>
    %287 = arith.mulf %285, %286 : vector<16x32xf32>
    %288 = vector.broadcast %267 : vector<1x32xf32> to vector<16x32xf32>
    %289 = arith.addf %287, %288 : vector<16x32xf32>
    %c1_129 = arith.constant 1 : index
    %c32_130 = arith.constant 32 : index
    %c0_131 = arith.constant 0 : index
    %290 = vector.load %arg2[%c1_129, %c32_130, %c0_131] : memref<2x232x128xf32, #tpu.memory_space<vmem>>, vector<1x32x128xf32>
    %291 = vector.shape_cast %290 : vector<1x32x128xf32> to vector<32x128xf32>
    %cst_132 = arith.constant dense<0.000000e+00> : vector<16x128xf32>
    %292 = tpu.matmul %289, %291, %cst_132 {dimension_numbers = #tpu.dot_dimension_numbers<[1], [0], [0], [1], [0, 0, 1, 1], [], []>} : vector<16x32xf32>, vector<32x128xf32>, vector<16x128xf32> -> vector<16x128xf32>
    %c1_133 = arith.constant 1 : index
    %c226_134 = arith.constant 226 : index
    %c0_135 = arith.constant 0 : index
    %293 = vector.load %arg2[%c1_133, %c226_134, %c0_135] : memref<2x232x128xf32, #tpu.memory_space<vmem>>, vector<1x1x128xf32>
    %294 = vector.shape_cast %293 : vector<1x1x128xf32> to vector<1x128xf32>
    %295 = vector.broadcast %294 : vector<1x128xf32> to vector<16x128xf32>
    %296 = arith.addf %292, %295 : vector<16x128xf32>
    %cst_136 = arith.constant 1.702000e+00 : f32
    %297 = vector.broadcast %cst_136 : f32 to vector<16x128xf32>
    %298 = arith.mulf %297, %296 : vector<16x128xf32>
    %299 = arith.negf %298 : vector<16x128xf32>
    %300 = math.exp %299 : vector<16x128xf32>
    %cst_137 = arith.constant 1.000000e+00 : f32
    %301 = vector.broadcast %cst_137 : f32 to vector<16x128xf32>
    %302 = arith.addf %301, %300 : vector<16x128xf32>
    %303 = arith.divf %301, %302 : vector<16x128xf32>
    %304 = arith.mulf %296, %303 : vector<16x128xf32>
    %c1_138 = arith.constant 1 : index
    %c64_139 = arith.constant 64 : index
    %c0_140 = arith.constant 0 : index
    %305 = vector.load %arg2[%c1_138, %c64_139, %c0_140] : memref<2x232x128xf32, #tpu.memory_space<vmem>>, vector<1x128x32xf32>
    %306 = vector.shape_cast %305 : vector<1x128x32xf32> to vector<128x32xf32>
    %cst_141 = arith.constant dense<0.000000e+00> : vector<16x32xf32>
    %307 = tpu.matmul %304, %306, %cst_141 {dimension_numbers = #tpu.dot_dimension_numbers<[1], [0], [0], [1], [0, 0, 1, 1], [], []>} : vector<16x128xf32>, vector<128x32xf32>, vector<16x32xf32> -> vector<16x32xf32>
    %c1_142 = arith.constant 1 : index
    %c227_143 = arith.constant 227 : index
    %c0_144 = arith.constant 0 : index
    %308 = vector.load %arg2[%c1_142, %c227_143, %c0_144] : memref<2x232x128xf32, #tpu.memory_space<vmem>>, vector<1x1x32xf32>
    %309 = vector.shape_cast %308 : vector<1x1x32xf32> to vector<1x32xf32>
    %310 = vector.broadcast %309 : vector<1x32xf32> to vector<16x32xf32>
    %311 = arith.addf %307, %310 : vector<16x32xf32>
    %312 = arith.addf %263, %311 : vector<16x32xf32>
    %cst_145 = arith.constant dense<0.000000e+00> : vector<2x32xf32>
    %313 = tpu.matmul %1, %312, %cst_145 {dimension_numbers = #tpu.dot_dimension_numbers<[1], [0], [0], [1], [0, 0, 1, 1], [], []>} : vector<2x16xf32>, vector<16x32xf32>, vector<2x32xf32> -> vector<2x32xf32>
    %c48 = arith.constant 48 : index
    %c0_146 = arith.constant 0 : index
    %314 = vector.load %arg1[%c48, %c0_146] : memref<56x128xf32, #tpu.memory_space<vmem>>, vector<1x32xf32>
    %c49 = arith.constant 49 : index
    %c0_147 = arith.constant 0 : index
    %315 = vector.load %arg1[%c49, %c0_147] : memref<56x128xf32, #tpu.memory_space<vmem>>, vector<1x32xf32>
    %cst_148 = arith.constant dense<0.000000e+00> : vector<2xf32>
    %316 = vector.multi_reduction <add>, %313, %cst_148 [1] : vector<2x32xf32> to vector<2xf32>
    %317 = vector.shape_cast %316 : vector<2xf32> to vector<2x1xf32>
    %cst_149 = arith.constant 3.200000e+01 : f32
    %318 = vector.broadcast %cst_149 : f32 to vector<2x1xf32>
    %319 = arith.divf %317, %318 : vector<2x1xf32>
    %320 = arith.mulf %313, %313 : vector<2x32xf32>
    %cst_150 = arith.constant dense<0.000000e+00> : vector<2xf32>
    %321 = vector.multi_reduction <add>, %320, %cst_150 [1] : vector<2x32xf32> to vector<2xf32>
    %322 = vector.shape_cast %321 : vector<2xf32> to vector<2x1xf32>
    %cst_151 = arith.constant 3.200000e+01 : f32
    %323 = vector.broadcast %cst_151 : f32 to vector<2x1xf32>
    %324 = arith.divf %322, %323 : vector<2x1xf32>
    %325 = arith.mulf %319, %319 : vector<2x1xf32>
    %326 = arith.subf %324, %325 : vector<2x1xf32>
    %327 = vector.broadcast %319 : vector<2x1xf32> to vector<2x32xf32>
    %328 = arith.subf %313, %327 : vector<2x32xf32>
    %cst_152 = arith.constant 9.99999974E-6 : f32
    %329 = vector.broadcast %cst_152 : f32 to vector<2x1xf32>
    %330 = arith.addf %326, %329 : vector<2x1xf32>
    %331 = math.rsqrt %330 : vector<2x1xf32>
    %332 = vector.broadcast %331 : vector<2x1xf32> to vector<2x32xf32>
    %333 = arith.mulf %328, %332 : vector<2x32xf32>
    %334 = vector.broadcast %314 : vector<1x32xf32> to vector<2x32xf32>
    %335 = arith.mulf %333, %334 : vector<2x32xf32>
    %336 = vector.broadcast %315 : vector<1x32xf32> to vector<2x32xf32>
    %337 = arith.addf %335, %336 : vector<2x32xf32>
    %c16_153 = arith.constant 16 : index
    %c0_154 = arith.constant 0 : index
    %338 = vector.load %arg1[%c16_153, %c0_154] : memref<56x128xf32, #tpu.memory_space<vmem>>, vector<32x16xf32>
    %cst_155 = arith.constant dense<0.000000e+00> : vector<2x16xf32>
    %339 = tpu.matmul %337, %338, %cst_155 {dimension_numbers = #tpu.dot_dimension_numbers<[1], [0], [0], [1], [0, 0, 1, 1], [], []>} : vector<2x32xf32>, vector<32x16xf32>, vector<2x16xf32> -> vector<2x16xf32>
    %c0_156 = arith.constant 0 : index
    %c0_157 = arith.constant 0 : index
    %340 = vector.load %arg3[%c0_156, %c0_157] : memref<2x16xf32, #tpu.memory_space<vmem>>, vector<2x16xf32>
    tpu.vector_store %arg3[%c0_156, %c0_157], %339 {strides = array<i32>} : memref<2x16xf32, #tpu.memory_space<vmem>>, vector<2x16xf32>,
    return
  }
}

</mosaic_0001>

<llo_original>
// kernel: text_encoder_forward.1
$region0: #{text_encoder_forward.1}
  #allocation0 [shape = 'u32[]', space=smem, size = 0x4, offset = 0x4, fixed_abs, tag = 'smem constant byte address 0x4 - core index']
  #allocation1 [shape = 'u32[144,128]{1,0:T(1,128)}', space=vmem, size = 0x12000, scoped, tag = 'internal scratch']
  #allocation2 [shape = 'f32[16,32]{1,0:T(8,128)}', space=vmem, size = 0x2000, scoped, tag = 'scratch operand']
  %s0 = inlined_call_operand.vmem [shape: f32[24,32], index: 0, kind: input, shape index: {}]
  %s1 = inlined_call_operand.vmem [shape: f32[56,128], index: 1, kind: input, shape index: {}]
  %s2 = inlined_call_operand.hbm [shape: f32[2,232,128], index: 2, kind: input, shape index: {}]
  %s3 = inlined_call_operand.hbm [shape: f32[2,16], index: 3, kind: output, shape index: {}]
  %s4 = sld [smem:[#allocation0]]
  $region26: #{text_encoder_forward.1} parent=0
    _
  %s6 = ssub.s32 1, %s4
  %s7 = scalar_select 0, %s6, %s4
  $region1: #{text_encoder_forward.1} parent=0
    #allocation3 [shape = 'u8[237568]{0}', space=vmem, size = 0x3a000, scoped, tag = 'input window, operand 2, single buffered']
    #allocation4 [shape = 's32[1]{0}', space=sflag, size = 0x4, scoped, tag = 'scoped memory for text_encoder_forward.1']
    #allocation5 [shape = 's32[1]{0}', space=sflag, size = 0x4, scoped, tag = 'scoped memory for text_encoder_forward.1']
    #allocation6 [shape = 'u8[1024]{0}', space=vmem, size = 0x400, scoped, tag = 'output window, operand 0, single buffered']
    %8 = vsyncpa [#allocation4], 0
    %9 = vsyncpa [#allocation5], 0
    // Predicated region
    $region2: #{text_encoder_forward.1} parent=1 // pred_check
      _
    $region3: #{text_encoder_forward.1} parent=1 // pred_check_branch
      %11 = sbr.rel (0) target = $region5
    $region4: #{text_encoder_forward.1} parent=1 // pred_region
      _
    $region5: #{text_encoder_forward.1} parent=1 // pred_fallthru
      _
    // Predicated region
    $region6: #{text_encoder_forward.1} parent=1 // pred_check
      _
    $region7: #{text_encoder_forward.1} parent=1 // pred_check_branch
      %13 = sbr.rel (0) target = $region9
    $region8: #{text_encoder_forward.1} parent=1 // pred_region
      _
    $region9: #{text_encoder_forward.1} parent=1 // pred_fallthru
      _
    // Predicated region
    $region10: #{text_encoder_forward.1} parent=1 // pred_check
      _
    $region11: #{text_encoder_forward.1} parent=1 // pred_check_branch
      %15 = sbr.rel (0) target = $region13
    $region12: #{text_encoder_forward.1} parent=1 // pred_region
      %s17 = ssub.s32 7424, 7424
      %18 = vsyncadd [#allocation4], %s17
      %s19 = sshll.u32 [#allocation3], 4
      %s20 = int_to_ptr.vmem [resolvable:$true] %s19
      %25 = dma.hbm_to_vmem [thread:$0]  %s2, 7424, %s20, [#allocation4], 128, 128, 8
    $region13: #{text_encoder_forward.1} parent=1 // pred_fallthru
      _
    // Predicated region
    $region14: #{text_encoder_forward.1} parent=1 // pred_check
      _
    $region15: #{text_encoder_forward.1} parent=1 // pred_check_branch
      %27 = sbr.rel (0) target = $region17
    $region16: #{text_encoder_forward.1} parent=1 // pred_region
      %28 = dma.done [#allocation4], 7424
    $region17: #{text_encoder_forward.1} parent=1 // pred_fallthru
      _
    %v29 = vld [vmem:[%s0] sm:$0xff]
    %v30 = vld [vmem:[%s0 + $0x8] sm:$0xff]
    %v31 = vld [vmem:[%s0 + $0x10] sm:$0x3]
    %v32 = vld [vmem:[%s1] sm:$0xff]
    %v33 = vld [vmem:[%s1 + $0x8] sm:$0xff]
    %v34 = vld [vmem:[#allocation3 + $0xe4] sm:$0x1]
    %v35 = vld [vmem:[#allocation3 + $0xe5] sm:$0x1]
    %vm36 = vcmask 261120
    %v37 = vsel %vm36, %v29, 0.0
    %38 = vadd.xlane.f32.xlu0 %v37
    %v39 = vpop.xlane.xlu0 %38
    %v40 = vsel %vm36, %v30, 0.0
    %41 = vadd.xlane.f32.xlu0 %v40
    %v42 = vpop.xlane.xlu0 %41
    %v43 = vrcp.pop 32.0
    %v44 = vmul.f32 %v39, %v43
    %v45 = vmul.f32 %v42, %v43
    %v46 = vmul.f32 %v29, %v29
    %v47 = vmul.f32 %v30, %v30
    %v48 = vsel %vm36, %v46, 0.0
    %49 = vadd.xlane.f32.xlu0 %v48
    %v50 = vpop.xlane.xlu0 %49
    %v51 = vsel %vm36, %v47, 0.0
    %52 = vadd.xlane.f32.xlu0 %v51
    %v53 = vpop.xlane.xlu0 %52
    %v54 = vmul.f32 %v50, %v43
    %v55 = vmul.f32 %v53, %v43
    %v56 = vmul.f32 %v44, %v44
    %v57 = vmul.f32 %v45, %v45
    %v58 = vsub.f32 %v54, %v56
    %v59 = vsub.f32 %v55, %v57
    %v60 = vsub.f32 %v29, %v44
    %v61 = vsub.f32 %v30, %v45
    %v62 = vadd.f32 %v58, 1e-05
    %v63 = vadd.f32 %v59, 1e-05
    %v64 = vrsqrt.pop %v62
    %v65 = vrsqrt.pop %v63
    %v66 = vmul.f32 %v60, %v64
    %v67 = vmul.f32 %v61, %v65
    %v68 = vlaneseq
    %v69 = vshrl.u32 %v68, 7
    %v70 = vsub.s32 0, %v69
    %v71 = vrot.slane %v34, %v70
    %v72 = vmul.f32 %v66, %v71
    %v73 = vmul.f32 %v67, %v71
    %v74 = vlaneseq
    %v75 = vshrl.u32 %v74, 7
    %v76 = vsub.s32 0, %v75
    %v77 = vrot.slane %v35, %v76
    %v78 = vadd.f32 %v72, %v77
    %v79 = vadd.f32 %v73, %v77
    %v80 = vld [vmem:[#allocation3] sm:$0xff]
    %v81 = vld [vmem:[#allocation3 + $0x8] sm:$0xff]
    %v82 = vld [vmem:[#allocation3 + $0x10] sm:$0xff]
    %v83 = vld [vmem:[#allocation3 + $0x18] sm:$0xff]
    %v84 = vld [vmem:[#allocation3 + $0xe0] sm:$0x1]
    %v85 = vlaneseq
    %v86 = vshrl.u32 %v85, 7
    %v87 = vsub.s32 0, %v86
    %v88 = vrot.slane %v84, %v87
    %v90 = vsel %vm36, %v78, 0
    %v93 = vsel %vm36, %v79, 0
    %95 = vmatprep.subr.mxu0 0.0
    %96 = vmatpush1.msra.mxu0 %v80
    %97 = vmatprep.subr.mxu0 0.0
    %98 = vmatpush1.msra.mxu0 %v81
    %99 = vmatprep.subr.mxu0 0.0
    %100 = vmatpush1.msra.mxu0 %v82
    %101 = vmatprep.subr.mxu0 0.0
    %102 = vmatpush1.msra.mxu0 %v83
    %103 = vmatprep.subr.mxu0 0.0
    %104 = vmatpush1.msra.mxu0 0.0
    %105 = vmatprep.subr.mxu0 0.0
    %106 = vmatpush1.msra.mxu0 0.0
    %107 = vmatprep.subr.mxu0 0.0
    %108 = vmatpush1.msra.mxu0 0.0
    %109 = vmatprep.subr.mxu0 0.0
    %110 = vmatpush1.msra.mxu0 0.0
    %111 = vmatprep.subr.mxu0 0.0
    %112 = vmatpush1.msra.mxu0 0.0
    %113 = vmatprep.subr.mxu0 0.0
    %114 = vmatpush1.msra.mxu0 0.0
    %115 = vmatprep.subr.mxu0 0.0
    %116 = vmatpush1.msra.mxu0 0.0
    %117 = vmatprep.subr.mxu0 0.0
    %118 = vmatpush1.msra.mxu0 0.0
    %119 = vmatprep.subr.mxu0 0.0
    %120 = vmatpush1.msra.mxu0 0.0
    %121 = vmatprep.subr.mxu0 0.0
    %122 = vmatpush1.msra.mxu0 0.0
    %123 = vmatprep.subr.mxu0 0.0
    %124 = vmatpush1.msra.mxu0 0.0
    %125 = vmatprep.subr.mxu0 0.0
    %126 = vmatpush1.msra.mxu0 0.0
    %127 = vmatprep.subr.mxu0 0.0
    %128 = vmatpush1.msra.mxu0 0.0
    %129 = vmatprep.subr.mxu0 0.0
    %130 = vmatpush1.msra.mxu0 0.0
    %131 = vmatprep.subr.mxu0 0.0
    %132 = vmatpush1.msra.mxu0 0.0
    %133 = vmatprep.subr.mxu0 0.0
    %134 = vmatpush1.msra.mxu0 0.0
    %135 = vmatprep.subr.mxu0 0.0
    %136 = vmatpush1.msra.mxu0 0.0
    %137 = vmatprep.subr.mxu0 0.0
    %138 = vmatpush1.msra.mxu0 0.0
    %139 = vmatprep.subr.mxu0 0.0
    %140 = vmatpush1.msra.mxu0 0.0
    %141 = vmatprep.subr.mxu0 0.0
    %142 = vmatpush1.msra.mxu0 0.0
    %143 = vmatprep.subr.mxu0 0.0
    %144 = vmatpush1.msra.mxu0 0.0
    %145 = vmatprep.subr.mxu0 0.0
    %146 = vmatpush1.msra.mxu0 0.0
    %147 = vmatprep.subr.mxu0 0.0
    %148 = vmatpush1.msra.mxu0 0.0
    %149 = vmatprep.subr.mxu0 0.0
    %150 = vmatpush1.msra.mxu0 0.0
    %151 = vmatprep.subr.mxu0 0.0
    %152 = vmatpush1.msra.mxu0 0.0
    %153 = vmatprep.subr.mxu0 0.0
    %154 = vmatpush1.msra.mxu0 0.0
    %155 = vmatprep.subr.mxu0 0.0
    %156 = vmatpush1.msra.mxu0 0.0
    %157 = vmatprep.subr.mxu0 0.0
    %158 = vmatpush1.msra.mxu0 0.0
    %159 = vmatprep.mubr.f32.mxu0 0.0
    %160 = vmatmul.mubr.f32.gmra.mrb[0].mxu0 %v90
    %v161 = vpop.f32.mrb[0].mxu0
    %v162 = vadd.f32 %v88, %v161
    %v163 = vpop.f32.mrb[0].mxu0
    %164 = vmatprep.mubr.f32.mxu0 0.0
    %165 = vmatmul.mubr.f32.gmra.mrb[0].mxu0 %v93
    %v166 = vpop.f32.mrb[0].mxu0
    %v167 = vadd.f32 %v88, %v166
    %v168 = vpop.f32.mrb[0].mxu0
    %169 = vdwg.mxu0
    %172 = vrot.lane.b32.xlu0 %v162, 96
    %v173 = vpop.permute.xlu0 %172
    %174 = vrot.lane.b32.xlu0 %v167, 96
    %v175 = vpop.permute.xlu0 %174
    %vm176 = vcmask 64512
    %v177 = vsel %vm176, %v162, 0
    %v179 = vsel %vm176, %v167, 0
    %v181 = vsel %vm176, %v173, 0
    %v183 = vsel %vm176, %v175, 0
    %185 = vmatprep.subr.mxu0 0.0
    %186 = vmatpush1.xpose.msra.mxu0 %v181
    %187 = vmatprep.subr.mxu0 0.0
    %188 = vmatpush1.xpose.msra.mxu0 %v183
    %189 = vmatprep.subr.mxu0 0.0
    %190 = vmatpush1.xpose.msra.mxu0 0.0
    %191 = vmatprep.subr.mxu0 0.0
    %192 = vmatpush1.xpose.msra.mxu0 0.0
    %193 = vmatprep.subr.mxu0 0.0
    %194 = vmatpush1.xpose.msra.mxu0 0.0
    %195 = vmatprep.subr.mxu0 0.0
    %196 = vmatpush1.xpose.msra.mxu0 0.0
    %197 = vmatprep.subr.mxu0 0.0
    %198 = vmatpush1.xpose.msra.mxu0 0.0
    %199 = vmatprep.subr.mxu0 0.0
    %200 = vmatpush1.xpose.msra.mxu0 0.0
    %201 = vmatprep.subr.mxu0 0.0
    %202 = vmatpush1.xpose.msra.mxu0 0.0
    %203 = vmatprep.subr.mxu0 0.0
    %204 = vmatpush1.xpose.msra.mxu0 0.0
    %205 = vmatprep.subr.mxu0 0.0
    %206 = vmatpush1.xpose.msra.mxu0 0.0
    %207 = vmatprep.subr.mxu0 0.0
    %208 = vmatpush1.xpose.msra.mxu0 0.0
    %209 = vmatprep.subr.mxu0 0.0
    %210 = vmatpush1.xpose.msra.mxu0 0.0
    %211 = vmatprep.subr.mxu0 0.0
    %212 = vmatpush1.xpose.msra.mxu0 0.0
    %213 = vmatprep.subr.mxu0 0.0
    %214 = vmatpush1.xpose.msra.mxu0 0.0
    %215 = vmatprep.subr.mxu0 0.0
    %216 = vmatpush1.xpose.msra.mxu0 0.0
    %217 = vmatprep.subr.mxu0 0.0
    %218 = vmatpush1.xpose.msra.mxu0 0.0
    %219 = vmatprep.subr.mxu0 0.0
    %220 = vmatpush1.xpose.msra.mxu0 0.0
    %221 = vmatprep.subr.mxu0 0.0
    %222 = vmatpush1.xpose.msra.mxu0 0.0
    %223 = vmatprep.subr.mxu0 0.0
    %224 = vmatpush1.xpose.msra.mxu0 0.0
    %225 = vmatprep.subr.mxu0 0.0
    %226 = vmatpush1.xpose.msra.mxu0 0.0
    %227 = vmatprep.subr.mxu0 0.0
    %228 = vmatpush1.xpose.msra.mxu0 0.0
    %229 = vmatprep.subr.mxu0 0.0
    %230 = vmatpush1.xpose.msra.mxu0 0.0
    %231 = vmatprep.subr.mxu0 0.0
    %232 = vmatpush1.xpose.msra.mxu0 0.0
    %233 = vmatprep.subr.mxu0 0.0
    %234 = vmatpush1.xpose.msra.mxu0 0.0
    %235 = vmatprep.subr.mxu0 0.0
    %236 = vmatpush1.xpose.msra.mxu0 0.0
    %237 = vmatprep.subr.mxu0 0.0
    %238 = vmatpush1.xpose.msra.mxu0 0.0
    %239 = vmatprep.subr.mxu0 0.0
    %240 = vmatpush1.xpose.msra.mxu0 0.0
    %241 = vmatprep.subr.mxu0 0.0
    %242 = vmatpush1.xpose.msra.mxu0 0.0
    %243 = vmatprep.subr.mxu0 0.0
    %244 = vmatpush1.xpose.msra.mxu0 0.0
    %245 = vmatprep.subr.mxu0 0.0
    %246 = vmatpush1.xpose.msra.mxu0 0.0
    %247 = vmatprep.subr.mxu0 0.0
    %248 = vmatpush1.xpose.msra.mxu0 0.0
    %249 = vmatprep.mubr.f32.mxu0 0.0
    %250 = vmatmul.mubr.f32.gmra.mrb[0].mxu0 %v177
    %v251 = vpop.f32.mrb[0].mxu0
    %v252 = vadd.f32 %v32, %v251
    %v253 = vpop.f32.mrb[0].mxu0
    %254 = vmatprep.mubr.f32.mxu0 0.0
    %255 = vmatmul.mubr.f32.gmra.mrb[0].mxu0 %v179
    %v256 = vpop.f32.mrb[0].mxu0
    %v257 = vadd.f32 %v33, %v256
    %v258 = vpop.f32.mrb[0].mxu0
    %259 = vdwg.mxu0
    %vm260 = vcmask 130048
    %v261 = vsel %vm260, %v252, -inf
    %262 = vmax.xlane.f32.xlu0 %v261
    %v263 = vpop.xlane.xlu0 %262
    %v264 = vsel %vm260, %v257, -inf
    %265 = vmax.xlane.f32.xlu0 %v264
    %v266 = vpop.xlane.xlu0 %265
    %v267 = vsub.f32 %v252, %v263
    %v268 = vsub.f32 %v257, %v266
    %v269 = vmul.f32 %v267, 1.442695
    %v270 = vpow.pop %v269
    %v271 = vmul.f32 %v268, 1.442695
    %v272 = vpow.pop %v271
    %v273 = vsel %vm260, %v270, 0.0
    %274 = vadd.xlane.f32.xlu0 %v273
    %v275 = vpop.xlane.xlu0 %274
    %v276 = vsel %vm260, %v272, 0.0
    %277 = vadd.xlane.f32.xlu0 %v276
    %v278 = vpop.xlane.xlu0 %277
    %v279 = vrcp.pop %v275
    %v280 = vmul.f32 %v270, %v279
    %v281 = vrcp.pop %v278
    %v282 = vmul.f32 %v272, %v281
    %283 = vrot.lane.b32.xlu0 %v162, 64
    %v284 = vpop.permute.xlu0 %283
    %285 = vrot.lane.b32.xlu0 %v167, 64
    %v286 = vpop.permute.xlu0 %285
    %v290 = vsel %vm260, %v280, 0
    %v293 = vsel %vm260, %v282, 0
    %295 = vmatprep.subr.mxu0 0.0
    %296 = vmatpush1.msra.mxu0 %v284
    %297 = vmatprep.subr.mxu0 0.0
    %298 = vmatpush1.msra.mxu0 %v286
    %299 = vmatprep.subr.mxu0 0.0
    %300 = vmatpush1.msra.mxu0 0.0
    %301 = vmatprep.subr.mxu0 0.0
    %302 = vmatpush1.msra.mxu0 0.0
    %303 = vmatprep.subr.mxu0 0.0
    %304 = vmatpush1.msra.mxu0 0.0
    %305 = vmatprep.subr.mxu0 0.0
    %306 = vmatpush1.msra.mxu0 0.0
    %307 = vmatprep.subr.mxu0 0.0
    %308 = vmatpush1.msra.mxu0 0.0
    %309 = vmatprep.subr.mxu0 0.0
    %310 = vmatpush1.msra.mxu0 0.0
    %311 = vmatprep.subr.mxu0 0.0
    %312 = vmatpush1.msra.mxu0 0.0
    %313 = vmatprep.subr.mxu0 0.0
    %314 = vmatpush1.msra.mxu0 0.0
    %315 = vmatprep.subr.mxu0 0.0
    %316 = vmatpush1.msra.mxu0 0.0
    %317 = vmatprep.subr.mxu0 0.0
    %318 = vmatpush1.msra.mxu0 0.0
    %319 = vmatprep.subr.mxu0 0.0
    %320 = vmatpush1.msra.mxu0 0.0
    %321 = vmatprep.subr.mxu0 0.0
    %322 = vmatpush1.msra.mxu0 0.0
    %323 = vmatprep.subr.mxu0 0.0
    %324 = vmatpush1.msra.mxu0 0.0
    %325 = vmatprep.subr.mxu0 0.0
    %326 = vmatpush1.msra.mxu0 0.0
    %327 = vmatprep.subr.mxu0 0.0
    %328 = vmatpush1.msra.mxu0 0.0
    %329 = vmatprep.subr.mxu0 0.0
    %330 = vmatpush1.msra.mxu0 0.0
    %331 = vmatprep.subr.mxu0 0.0
    %332 = vmatpush1.msra.mxu0 0.0
    %333 = vmatprep.subr.mxu0 0.0
    %334 = vmatpush1.msra.mxu0 0.0
    %335 = vmatprep.subr.mxu0 0.0
    %336 = vmatpush1.msra.mxu0 0.0
    %337 = vmatprep.subr.mxu0 0.0
    %338 = vmatpush1.msra.mxu0 0.0
    %339 = vmatprep.subr.mxu0 0.0
    %340 = vmatpush1.msra.mxu0 0.0
    %341 = vmatprep.subr.mxu0 0.0
    %342 = vmatpush1.msra.mxu0 0.0
    %343 = vmatprep.subr.mxu0 0.0
    %344 = vmatpush1.msra.mxu0 0.0
    %345 = vmatprep.subr.mxu0 0.0
    %346 = vmatpush1.msra.mxu0 0.0
    %347 = vmatprep.subr.mxu0 0.0
    %348 = vmatpush1.msra.mxu0 0.0
    %349 = vmatprep.subr.mxu0 0.0
    %350 = vmatpush1.msra.mxu0 0.0
    %351 = vmatprep.subr.mxu0 0.0
    %352 = vmatpush1.msra.mxu0 0.0
    %353 = vmatprep.subr.mxu0 0.0
    %354 = vmatpush1.msra.mxu0 0.0
    %355 = vmatprep.subr.mxu0 0.0
    %356 = vmatpush1.msra.mxu0 0.0
    %357 = vmatprep.subr.mxu0 0.0
    %358 = vmatpush1.msra.mxu0 0.0
    %359 = vmatprep.mubr.f32.mxu0 0.0
    %360 = vmatmul.mubr.f32.gmra.mrb[0].mxu0 %v290
    %v361 = vpop.f32.mrb[0].mxu0
    %v362 = vadd.f32 0.0, %v361
    %v363 = vpop.f32.mrb[0].mxu0
    %364 = vmatprep.mubr.f32.mxu0 0.0
    %365 = vmatmul.mubr.f32.gmra.mrb[0].mxu0 %v293
    %v366 = vpop.f32.mrb[0].mxu0
    %v367 = vadd.f32 0.0, %v366
    %v368 = vpop.f32.mrb[0].mxu0
    %369 = vdwg.mxu0
    %370 = vst.msk [vmem:[#allocation2] sm:$0xff] %vm176, %v362
    %371 = vst.msk [vmem:[#allocation2 + $0x8] sm:$0xff] %vm176, %v367
    %372 = vrot.lane.b32.xlu0 %v162, 120
    %v373 = vpop.permute.xlu0 %372
    %374 = vrot.lane.b32.xlu0 %v167, 120
    %v375 = vpop.permute.xlu0 %374
    %376 = vrot.lane.b32.xlu0 %v162, 88
    %v377 = vpop.permute.xlu0 %376
    %378 = vrot.lane.b32.xlu0 %v167, 88
    %v379 = vpop.permute.xlu0 %378
    %v380 = vsel %vm176, %v373, 0
    %v382 = vsel %vm176, %v375, 0
    %v384 = vsel %vm176, %v377, 0
    %v386 = vsel %vm176, %v379, 0
    %388 = vmatprep.subr.mxu0 0.0
    %389 = vmatpush1.xpose.msra.mxu0 %v384
    %390 = vmatprep.subr.mxu0 0.0
    %391 = vmatpush1.xpose.msra.mxu0 %v386
    %392 = vmatprep.subr.mxu0 0.0
    %393 = vmatpush1.xpose.msra.mxu0 0.0
    %394 = vmatprep.subr.mxu0 0.0
    %395 = vmatpush1.xpose.msra.mxu0 0.0
    %396 = vmatprep.subr.mxu0 0.0
    %397 = vmatpush1.xpose.msra.mxu0 0.0
    %398 = vmatprep.subr.mxu0 0.0
    %399 = vmatpush1.xpose.msra.mxu0 0.0
    %400 = vmatprep.subr.mxu0 0.0
    %401 = vmatpush1.xpose.msra.mxu0 0.0
    %402 = vmatprep.subr.mxu0 0.0
    %403 = vmatpush1.xpose.msra.mxu0 0.0
    %404 = vmatprep.subr.mxu0 0.0
    %405 = vmatpush1.xpose.msra.mxu0 0.0
    %406 = vmatprep.subr.mxu0 0.0
    %407 = vmatpush1.xpose.msra.mxu0 0.0
    %408 = vmatprep.subr.mxu0 0.0
    %409 = vmatpush1.xpose.msra.mxu0 0.0
    %410 = vmatprep.subr.mxu0 0.0
    %411 = vmatpush1.xpose.msra.mxu0 0.0
    %412 = vmatprep.subr.mxu0 0.0
    %413 = vmatpush1.xpose.msra.mxu0 0.0
    %414 = vmatprep.subr.mxu0 0.0
    %415 = vmatpush1.xpose.msra.mxu0 0.0
    %416 = vmatprep.subr.mxu0 0.0
    %417 = vmatpush1.xpose.msra.mxu0 0.0
    %418 = vmatprep.subr.mxu0 0.0
    %419 = vmatpush1.xpose.msra.mxu0 0.0
    %420 = vmatprep.subr.mxu0 0.0
    %421 = vmatpush1.xpose.msra.mxu0 0.0
    %422 = vmatprep.subr.mxu0 0.0
    %423 = vmatpush1.xpose.msra.mxu0 0.0
    %424 = vmatprep.subr.mxu0 0.0
    %425 = vmatpush1.xpose.msra.mxu0 0.0
    %426 = vmatprep.subr.mxu0 0.0
    %427 = vmatpush1.xpose.msra.mxu0 0.0
    %428 = vmatprep.subr.mxu0 0.0
    %429 = vmatpush1.xpose.msra.mxu0 0.0
    %430 = vmatprep.subr.mxu0 0.0
    %431 = vmatpush1.xpose.msra.mxu0 0.0
    %432 = vmatprep.subr.mxu0 0.0
    %433 = vmatpush1.xpose.msra.mxu0 0.0
    %434 = vmatprep.subr.mxu0 0.0
    %435 = vmatpush1.xpose.msra.mxu0 0.0
    %436 = vmatprep.subr.mxu0 0.0
    %437 = vmatpush1.xpose.msra.mxu0 0.0
    %438 = vmatprep.subr.mxu0 0.0
    %439 = vmatpush1.xpose.msra.mxu0 0.0
    %440 = vmatprep.subr.mxu0 0.0
    %441 = vmatpush1.xpose.msra.mxu0 0.0
    %442 = vmatprep.subr.mxu0 0.0
    %443 = vmatpush1.xpose.msra.mxu0 0.0
    %444 = vmatprep.subr.mxu0 0.0
    %445 = vmatpush1.xpose.msra.mxu0 0.0
    %446 = vmatprep.subr.mxu0 0.0
    %447 = vmatpush1.xpose.msra.mxu0 0.0
    %448 = vmatprep.subr.mxu0 0.0
    %449 = vmatpush1.xpose.msra.mxu0 0.0
    %450 = vmatprep.subr.mxu0 0.0
    %451 = vmatpush1.xpose.msra.mxu0 0.0
    %452 = vmatprep.mubr.f32.mxu0 0.0
    %453 = vmatmul.mubr.f32.gmra.mrb[0].mxu0 %v380
    %v454 = vpop.f32.mrb[0].mxu0
    %v455 = vadd.f32 %v32, %v454
    %v456 = vpop.f32.mrb[0].mxu0
    %457 = vmatprep.mubr.f32.mxu0 0.0
    %458 = vmatmul.mubr.f32.gmra.mrb[0].mxu0 %v382
    %v459 = vpop.f32.mrb[0].mxu0
    %v460 = vadd.f32 %v33, %v459
    %v461 = vpop.f32.mrb[0].mxu0
    %462 = vdwg.mxu0
    %v463 = vsel %vm260, %v455, -inf
    %464 = vmax.xlane.f32.xlu0 %v463
    %v465 = vpop.xlane.xlu0 %464
    %v466 = vsel %vm260, %v460, -inf
    %467 = vmax.xlane.f32.xlu0 %v466
    %v468 = vpop.xlane.xlu0 %467
    %v469 = vsub.f32 %v455, %v465
    %v470 = vsub.f32 %v460, %v468
    %v471 = vmul.f32 %v469, 1.442695
    %v472 = vpow.pop %v471
    %v473 = vmul.f32 %v470, 1.442695
    %v474 = vpow.pop %v473
    %v475 = vsel %vm260, %v472, 0.0
    %476 = vadd.xlane.f32.xlu0 %v475
    %v477 = vpop.xlane.xlu0 %476
    %v478 = vsel %vm260, %v474, 0.0
    %479 = vadd.xlane.f32.xlu0 %v478
    %v480 = vpop.xlane.xlu0 %479
    %v481 = vrcp.pop %v477
    %v482 = vmul.f32 %v472, %v481
    %v483 = vrcp.pop %v480
    %v484 = vmul.f32 %v474, %v483
    %485 = vrot.lane.b32.xlu0 %v162, 56
    %v486 = vpop.permute.xlu0 %485
    %487 = vrot.lane.b32.xlu0 %v167, 56
    %v488 = vpop.permute.xlu0 %487
    %v492 = vsel %vm260, %v482, 0
    %v495 = vsel %vm260, %v484, 0
    %497 = vmatprep.subr.mxu0 0.0
    %498 = vmatpush1.msra.mxu0 %v486
    %499 = vmatprep.subr.mxu0 0.0
    %500 = vmatpush1.msra.mxu0 %v488
    %501 = vmatprep.subr.mxu0 0.0
    %502 = vmatpush1.msra.mxu0 0.0
    %503 = vmatprep.subr.mxu0 0.0
    %504 = vmatpush1.msra.mxu0 0.0
    %505 = vmatprep.subr.mxu0 0.0
    %506 = vmatpush1.msra.mxu0 0.0
    %507 = vmatprep.subr.mxu0 0.0
    %508 = vmatpush1.msra.mxu0 0.0
    %509 = vmatprep.subr.mxu0 0.0
    %510 = vmatpush1.msra.mxu0 0.0
    %511 = vmatprep.subr.mxu0 0.0
    %512 = vmatpush1.msra.mxu0 0.0
    %513 = vmatprep.subr.mxu0 0.0
    %514 = vmatpush1.msra.mxu0 0.0
    %515 = vmatprep.subr.mxu0 0.0
    %516 = vmatpush1.msra.mxu0 0.0
    %517 = vmatprep.subr.mxu0 0.0
    %518 = vmatpush1.msra.mxu0 0.0
    %519 = vmatprep.subr.mxu0 0.0
    %520 = vmatpush1.msra.mxu0 0.0
    %521 = vmatprep.subr.mxu0 0.0
    %522 = vmatpush1.msra.mxu0 0.0
    %523 = vmatprep.subr.mxu0 0.0
    %524 = vmatpush1.msra.mxu0 0.0
    %525 = vmatprep.subr.mxu0 0.0
    %526 = vmatpush1.msra.mxu0 0.0
    %527 = vmatprep.subr.mxu0 0.0
    %528 = vmatpush1.msra.mxu0 0.0
    %529 = vmatprep.subr.mxu0 0.0
    %530 = vmatpush1.msra.mxu0 0.0
    %531 = vmatprep.subr.mxu0 0.0
    %532 = vmatpush1.msra.mxu0 0.0
    %533 = vmatprep.subr.mxu0 0.0
    %534 = vmatpush1.msra.mxu0 0.0
    %535 = vmatprep.subr.mxu0 0.0
    %536 = vmatpush1.msra.mxu0 0.0
    %537 = vmatprep.subr.mxu0 0.0
    %538 = vmatpush1.msra.mxu0 0.0
    %539 = vmatprep.subr.mxu0 0.0
    %540 = vmatpush1.msra.mxu0 0.0
    %541 = vmatprep.subr.mxu0 0.0
    %542 = vmatpush1.msra.mxu0 0.0
    %543 = vmatprep.subr.mxu0 0.0
    %544 = vmatpush1.msra.mxu0 0.0
    %545 = vmatprep.subr.mxu0 0.0
    %546 = vmatpush1.msra.mxu0 0.0
    %547 = vmatprep.subr.mxu0 0.0
    %548 = vmatpush1.msra.mxu0 0.0
    %549 = vmatprep.subr.mxu0 0.0
    %550 = vmatpush1.msra.mxu0 0.0
    %551 = vmatprep.subr.mxu0 0.0
    %552 = vmatpush1.msra.mxu0 0.0
    %553 = vmatprep.subr.mxu0 0.0
    %554 = vmatpush1.msra.mxu0 0.0
    %555 = vmatprep.subr.mxu0 0.0
    %556 = vmatpush1.msra.mxu0 0.0
    %557 = vmatprep.subr.mxu0 0.0
    %558 = vmatpush1.msra.mxu0 0.0
    %559 = vmatprep.subr.mxu0 0.0
    %560 = vmatpush1.msra.mxu0 0.0
    %561 = vmatprep.mubr.f32.mxu0 0.0
    %562 = vmatmul.mubr.f32.gmra.mrb[0].mxu0 %v492
    %v563 = vpop.f32.mrb[0].mxu0
    %v564 = vadd.f32 0.0, %v563
    %v565 = vpop.f32.mrb[0].mxu0
    %566 = vmatprep.mubr.f32.mxu0 0.0
    %567 = vmatmul.mubr.f32.gmra.mrb[0].mxu0 %v495
    %v568 = vpop.f32.mrb[0].mxu0
    %v569 = vadd.f32 0.0, %v568
    %v570 = vpop.f32.mrb[0].mxu0
    %571 = vdwg.mxu0
    %574 = vrot.lane.b32.xlu0 %v564, 8
    %v575 = vpop.permute.xlu0 %574
    %576 = vrot.lane.b32.xlu0 %v569, 8
    %v577 = vpop.permute.xlu0 %576
    %vm580 = vcmask 130112
    %581 = vst.msk [vmem:[#allocation2] sm:$0xff] %vm580, %v575
    %582 = vst.msk [vmem:[#allocation2 + $0x8] sm:$0xff] %vm580, %v577
    %583 = vrot.lane.b32.xlu0 %v162, 112
    %v584 = vpop.permute.xlu0 %583
    %585 = vrot.lane.b32.xlu0 %v167, 112
    %v586 = vpop.permute.xlu0 %585
    %587 = vrot.lane.b32.xlu0 %v162, 80
    %v588 = vpop.permute.xlu0 %587
    %589 = vrot.lane.b32.xlu0 %v167, 80
    %v590 = vpop.permute.xlu0 %589
    %v591 = vsel %vm176, %v584, 0
    %v593 = vsel %vm176, %v586, 0
    %v595 = vsel %vm176, %v588, 0
    %v597 = vsel %vm176, %v590, 0
    %599 = vmatprep.subr.mxu0 0.0
    %600 = vmatpush1.xpose.msra.mxu0 %v595
    %601 = vmatprep.subr.mxu0 0.0
    %602 = vmatpush1.xpose.msra.mxu0 %v597
    %603 = vmatprep.subr.mxu0 0.0
    %604 = vmatpush1.xpose.msra.mxu0 0.0
    %605 = vmatprep.subr.mxu0 0.0
    %606 = vmatpush1.xpose.msra.mxu0 0.0
    %607 = vmatprep.subr.mxu0 0.0
    %608 = vmatpush1.xpose.msra.mxu0 0.0
    %609 = vmatprep.subr.mxu0 0.0
    %610 = vmatpush1.xpose.msra.mxu0 0.0
    %611 = vmatprep.subr.mxu0 0.0
    %612 = vmatpush1.xpose.msra.mxu0 0.0
    %613 = vmatprep.subr.mxu0 0.0
    %614 = vmatpush1.xpose.msra.mxu0 0.0
    %615 = vmatprep.subr.mxu0 0.0
    %616 = vmatpush1.xpose.msra.mxu0 0.0
    %617 = vmatprep.subr.mxu0 0.0
    %618 = vmatpush1.xpose.msra.mxu0 0.0
    %619 = vmatprep.subr.mxu0 0.0
    %620 = vmatpush1.xpose.msra.mxu0 0.0
    %621 = vmatprep.subr.mxu0 0.0
    %622 = vmatpush1.xpose.msra.mxu0 0.0
    %623 = vmatprep.subr.mxu0 0.0
    %624 = vmatpush1.xpose.msra.mxu0 0.0
    %625 = vmatprep.subr.mxu0 0.0
    %626 = vmatpush1.xpose.msra.mxu0 0.0
    %627 = vmatprep.subr.mxu0 0.0
    %628 = vmatpush1.xpose.msra.mxu0 0.0
    %629 = vmatprep.subr.mxu0 0.0
    %630 = vmatpush1.xpose.msra.mxu0 0.0
    %631 = vmatprep.subr.mxu0 0.0
    %632 = vmatpush1.xpose.msra.mxu0 0.0
    %633 = vmatprep.subr.mxu0 0.0
    %634 = vmatpush1.xpose.msra.mxu0 0.0
    %635 = vmatprep.subr.mxu0 0.0
    %636 = vmatpush1.xpose.msra.mxu0 0.0
    %637 = vmatprep.subr.mxu0 0.0
    %638 = vmatpush1.xpose.msra.mxu0 0.0
    %639 = vmatprep.subr.mxu0 0.0
    %640 = vmatpush1.xpose.msra.mxu0 0.0
    %641 = vmatprep.subr.mxu0 0.0
    %642 = vmatpush1.xpose.msra.mxu0 0.0
    %643 = vmatprep.subr.mxu0 0.0
    %644 = vmatpush1.xpose.msra.mxu0 0.0
    %645 = vmatprep.subr.mxu0 0.0
    %646 = vmatpush1.xpose.msra.mxu0 0.0
    %647 = vmatprep.subr.mxu0 0.0
    %648 = vmatpush1.xpose.msra.mxu0 0.0
    %649 = vmatprep.subr.mxu0 0.0
    %650 = vmatpush1.xpose.msra.mxu0 0.0
    %651 = vmatprep.subr.mxu0 0.0
    %652 = vmatpush1.xpose.msra.mxu0 0.0
    %653 = vmatprep.subr.mxu0 0.0
    %654 = vmatpush1.xpose.msra.mxu0 0.0
    %655 = vmatprep.subr.mxu0 0.0
    %656 = vmatpush1.xpose.msra.mxu0 0.0
    %657 = vmatprep.subr.mxu0 0.0
    %658 = vmatpush1.xpose.msra.mxu0 0.0
    %659 = vmatprep.subr.mxu0 0.0
    %660 = vmatpush1.xpose.msra.mxu0 0.0
    %661 = vmatprep.subr.mxu0 0.0
    %662 = vmatpush1.xpose.msra.mxu0 0.0
    %663 = vmatprep.mubr.f32.mxu0 0.0
    %664 = vmatmul.mubr.f32.gmra.mrb[0].mxu0 %v591
    %v665 = vpop.f32.mrb[0].mxu0
    %v666 = vadd.f32 %v32, %v665
    %v667 = vpop.f32.mrb[0].mxu0
    %668 = vmatprep.mubr.f32.mxu0 0.0
    %669 = vmatmul.mubr.f32.gmra.mrb[0].mxu0 %v593
    %v670 = vpop.f32.mrb[0].mxu0
    %v671 = vadd.f32 %v33, %v670
    %v672 = vpop.f32.mrb[0].mxu0
    %673 = vdwg.mxu0
    %v674 = vsel %vm260, %v666, -inf
    %675 = vmax.xlane.f32.xlu0 %v674
    %v676 = vpop.xlane.xlu0 %675
    %v677 = vsel %vm260, %v671, -inf
    %678 = vmax.xlane.f32.xlu0 %v677
    %v679 = vpop.xlane.xlu0 %678
    %v680 = vsub.f32 %v666, %v676
    %v681 = vsub.f32 %v671, %v679
    %v682 = vmul.f32 %v680, 1.442695
    %v683 = vpow.pop %v682
    %v684 = vmul.f32 %v681, 1.442695
    %v685 = vpow.pop %v684
    %v686 = vsel %vm260, %v683, 0.0
    %687 = vadd.xlane.f32.xlu0 %v686
    %v688 = vpop.xlane.xlu0 %687
    %v689 = vsel %vm260, %v685, 0.0
    %690 = vadd.xlane.f32.xlu0 %v689
    %v691 = vpop.xlane.xlu0 %690
    %v692 = vrcp.pop %v688
    %v693 = vmul.f32 %v683, %v692
    %v694 = vrcp.pop %v691
    %v695 = vmul.f32 %v685, %v694
    %696 = vrot.lane.b32.xlu0 %v162, 48
    %v697 = vpop.permute.xlu0 %696
    %698 = vrot.lane.b32.xlu0 %v167, 48
    %v699 = vpop.permute.xlu0 %698
    %v703 = vsel %vm260, %v693, 0
    %v706 = vsel %vm260, %v695, 0
    %708 = vmatprep.subr.mxu0 0.0
    %709 = vmatpush1.msra.mxu0 %v697
    %710 = vmatprep.subr.mxu0 0.0
    %711 = vmatpush1.msra.mxu0 %v699
    %712 = vmatprep.subr.mxu0 0.0
    %713 = vmatpush1.msra.mxu0 0.0
    %714 = vmatprep.subr.mxu0 0.0
    %715 = vmatpush1.msra.mxu0 0.0
    %716 = vmatprep.subr.mxu0 0.0
    %717 = vmatpush1.msra.mxu0 0.0
    %718 = vmatprep.subr.mxu0 0.0
    %719 = vmatpush1.msra.mxu0 0.0
    %720 = vmatprep.subr.mxu0 0.0
    %721 = vmatpush1.msra.mxu0 0.0
    %722 = vmatprep.subr.mxu0 0.0
    %723 = vmatpush1.msra.mxu0 0.0
    %724 = vmatprep.subr.mxu0 0.0
    %725 = vmatpush1.msra.mxu0 0.0
    %726 = vmatprep.subr.mxu0 0.0
    %727 = vmatpush1.msra.mxu0 0.0
    %728 = vmatprep.subr.mxu0 0.0
    %729 = vmatpush1.msra.mxu0 0.0
    %730 = vmatprep.subr.mxu0 0.0
    %731 = vmatpush1.msra.mxu0 0.0
    %732 = vmatprep.subr.mxu0 0.0
    %733 = vmatpush1.msra.mxu0 0.0
    %734 = vmatprep.subr.mxu0 0.0
    %735 = vmatpush1.msra.mxu0 0.0
    %736 = vmatprep.subr.mxu0 0.0
    %737 = vmatpush1.msra.mxu0 0.0
    %738 = vmatprep.subr.mxu0 0.0
    %739 = vmatpush1.msra.mxu0 0.0
    %740 = vmatprep.subr.mxu0 0.0
    %741 = vmatpush1.msra.mxu0 0.0
    %742 = vmatprep.subr.mxu0 0.0
    %743 = vmatpush1.msra.mxu0 0.0
    %744 = vmatprep.subr.mxu0 0.0
    %745 = vmatpush1.msra.mxu0 0.0
    %746 = vmatprep.subr.mxu0 0.0
    %747 = vmatpush1.msra.mxu0 0.0
    %748 = vmatprep.subr.mxu0 0.0
    %749 = vmatpush1.msra.mxu0 0.0
    %750 = vmatprep.subr.mxu0 0.0
    %751 = vmatpush1.msra.mxu0 0.0
    %752 = vmatprep.subr.mxu0 0.0
    %753 = vmatpush1.msra.mxu0 0.0
    %754 = vmatprep.subr.mxu0 0.0
    %755 = vmatpush1.msra.mxu0 0.0
    %756 = vmatprep.subr.mxu0 0.0
    %757 = vmatpush1.msra.mxu0 0.0
    %758 = vmatprep.subr.mxu0 0.0
    %759 = vmatpush1.msra.mxu0 0.0
    %760 = vmatprep.subr.mxu0 0.0
    %761 = vmatpush1.msra.mxu0 0.0
    %762 = vmatprep.subr.mxu0 0.0
    %763 = vmatpush1.msra.mxu0 0.0
    %764 = vmatprep.subr.mxu0 0.0
    %765 = vmatpush1.msra.mxu0 0.0
    %766 = vmatprep.subr.mxu0 0.0
    %767 = vmatpush1.msra.mxu0 0.0
    %768 = vmatprep.subr.mxu0 0.0
    %769 = vmatpush1.msra.mxu0 0.0
    %770 = vmatprep.subr.mxu0 0.0
    %771 = vmatpush1.msra.mxu0 0.0
    %772 = vmatprep.mubr.f32.mxu0 0.0
    %773 = vmatmul.mubr.f32.gmra.mrb[0].mxu0 %v703
    %v774 = vpop.f32.mrb[0].mxu0
    %v775 = vadd.f32 0.0, %v774
    %v776 = vpop.f32.mrb[0].mxu0
    %777 = vmatprep.mubr.f32.mxu0 0.0
    %778 = vmatmul.mubr.f32.gmra.mrb[0].mxu0 %v706
    %v779 = vpop.f32.mrb[0].mxu0
    %v780 = vadd.f32 0.0, %v779
    %v781 = vpop.f32.mrb[0].mxu0
    %782 = vdwg.mxu0
    %785 = vrot.lane.b32.xlu0 %v775, 16
    %v786 = vpop.permute.xlu0 %785
    %787 = vrot.lane.b32.xlu0 %v780, 16
    %v788 = vpop.permute.xlu0 %787
    %vm791 = vcmask 195712
    %792 = vst.msk [vmem:[#allocation2] sm:$0xff] %vm791, %v786
    %793 = vst.msk [vmem:[#allocation2 + $0x8] sm:$0xff] %vm791, %v788
    %794 = vrot.lane.b32.xlu0 %v162, 104
    %v795 = vpop.permute.xlu0 %794
    %796 = vrot.lane.b32.xlu0 %v167, 104
    %v797 = vpop.permute.xlu0 %796
    %798 = vrot.lane.b32.xlu0 %v162, 72
    %v799 = vpop.permute.xlu0 %798
    %800 = vrot.lane.b32.xlu0 %v167, 72
    %v801 = vpop.permute.xlu0 %800
    %v802 = vsel %vm176, %v795, 0
    %v804 = vsel %vm176, %v797, 0
    %v806 = vsel %vm176, %v799, 0
    %v808 = vsel %vm176, %v801, 0
    %810 = vmatprep.subr.mxu0 0.0
    %811 = vmatpush1.xpose.msra.mxu0 %v806
    %812 = vmatprep.subr.mxu0 0.0
    %813 = vmatpush1.xpose.msra.mxu0 %v808
    %814 = vmatprep.subr.mxu0 0.0
    %815 = vmatpush1.xpose.msra.mxu0 0.0
    %816 = vmatprep.subr.mxu0 0.0
    %817 = vmatpush1.xpose.msra.mxu0 0.0
    %818 = vmatprep.subr.mxu0 0.0
    %819 = vmatpush1.xpose.msra.mxu0 0.0
    %820 = vmatprep.subr.mxu0 0.0
    %821 = vmatpush1.xpose.msra.mxu0 0.0
    %822 = vmatprep.subr.mxu0 0.0
    %823 = vmatpush1.xpose.msra.mxu0 0.0
    %824 = vmatprep.subr.mxu0 0.0
    %825 = vmatpush1.xpose.msra.mxu0 0.0
    %826 = vmatprep.subr.mxu0 0.0
    %827 = vmatpush1.xpose.msra.mxu0 0.0
    %828 = vmatprep.subr.mxu0 0.0
    %829 = vmatpush1.xpose.msra.mxu0 0.0
    %830 = vmatprep.subr.mxu0 0.0
    %831 = vmatpush1.xpose.msra.mxu0 0.0
    %832 = vmatprep.subr.mxu0 0.0
    %833 = vmatpush1.xpose.msra.mxu0 0.0
    %834 = vmatprep.subr.mxu0 0.0
    %835 = vmatpush1.xpose.msra.mxu0 0.0
    %836 = vmatprep.subr.mxu0 0.0
    %837 = vmatpush1.xpose.msra.mxu0 0.0
    %838 = vmatprep.subr.mxu0 0.0
    %839 = vmatpush1.xpose.msra.mxu0 0.0
    %840 = vmatprep.subr.mxu0 0.0
    %841 = vmatpush1.xpose.msra.mxu0 0.0
    %842 = vmatprep.subr.mxu0 0.0
    %843 = vmatpush1.xpose.msra.mxu0 0.0
    %844 = vmatprep.subr.mxu0 0.0
    %845 = vmatpush1.xpose.msra.mxu0 0.0
    %846 = vmatprep.subr.mxu0 0.0
    %847 = vmatpush1.xpose.msra.mxu0 0.0
    %848 = vmatprep.subr.mxu0 0.0
    %849 = vmatpush1.xpose.msra.mxu0 0.0
    %850 = vmatprep.subr.mxu0 0.0
    %851 = vmatpush1.xpose.msra.mxu0 0.0
    %852 = vmatprep.subr.mxu0 0.0
    %853 = vmatpush1.xpose.msra.mxu0 0.0
    %854 = vmatprep.subr.mxu0 0.0
    %855 = vmatpush1.xpose.msra.mxu0 0.0
    %856 = vmatprep.subr.mxu0 0.0
    %857 = vmatpush1.xpose.msra.mxu0 0.0
    %858 = vmatprep.subr.mxu0 0.0
    %859 = vmatpush1.xpose.msra.mxu0 0.0
    %860 = vmatprep.subr.mxu0 0.0
    %861 = vmatpush1.xpose.msra.mxu0 0.0
    %862 = vmatprep.subr.mxu0 0.0
    %863 = vmatpush1.xpose.msra.mxu0 0.0
    %864 = vmatprep.subr.mxu0 0.0
    %865 = vmatpush1.xpose.msra.mxu0 0.0
    %866 = vmatprep.subr.mxu0 0.0
    %867 = vmatpush1.xpose.msra.mxu0 0.0
    %868 = vmatprep.subr.mxu0 0.0
    %869 = vmatpush1.xpose.msra.mxu0 0.0
    %870 = vmatprep.subr.mxu0 0.0
    %871 = vmatpush1.xpose.msra.mxu0 0.0
    %872 = vmatprep.subr.mxu0 0.0
    %873 = vmatpush1.xpose.msra.mxu0 0.0
    %874 = vmatprep.mubr.f32.mxu0 0.0
    %875 = vmatmul.mubr.f32.gmra.mrb[0].mxu0 %v802
    %v876 = vpop.f32.mrb[0].mxu0
    %v877 = vadd.f32 %v32, %v876
    %v878 = vpop.f32.mrb[0].mxu0
    %879 = vmatprep.mubr.f32.mxu0 0.0
    %880 = vmatmul.mubr.f32.gmra.mrb[0].mxu0 %v804
    %v881 = vpop.f32.mrb[0].mxu0
    %v882 = vadd.f32 %v33, %v881
    %v883 = vpop.f32.mrb[0].mxu0
    %884 = vdwg.mxu0
    %v885 = vsel %vm260, %v877, -inf
    %886 = vmax.xlane.f32.xlu0 %v885
    %v887 = vpop.xlane.xlu0 %886
    %v888 = vsel %vm260, %v882, -inf
    %889 = vmax.xlane.f32.xlu0 %v888
    %v890 = vpop.xlane.xlu0 %889
    %v891 = vsub.f32 %v877, %v887
    %v892 = vsub.f32 %v882, %v890
    %v893 = vmul.f32 %v891, 1.442695
    %v894 = vpow.pop %v893
    %v895 = vmul.f32 %v892, 1.442695
    %v896 = vpow.pop %v895
    %v897 = vsel %vm260, %v894, 0.0
    %898 = vadd.xlane.f32.xlu0 %v897
    %v899 = vpop.xlane.xlu0 %898
    %v900 = vsel %vm260, %v896, 0.0
    %901 = vadd.xlane.f32.xlu0 %v900
    %v902 = vpop.xlane.xlu0 %901
    %v903 = vrcp.pop %v899
    %v904 = vmul.f32 %v894, %v903
    %v905 = vrcp.pop %v902
    %v906 = vmul.f32 %v896, %v905
    %907 = vrot.lane.b32.xlu0 %v162, 40
    %v908 = vpop.permute.xlu0 %907
    %909 = vrot.lane.b32.xlu0 %v167, 40
    %v910 = vpop.permute.xlu0 %909
    %v914 = vsel %vm260, %v904, 0
    %v917 = vsel %vm260, %v906, 0
    %919 = vmatprep.subr.mxu0 0.0
    %920 = vmatpush1.msra.mxu0 %v908
    %921 = vmatprep.subr.mxu0 0.0
    %922 = vmatpush1.msra.mxu0 %v910
    %923 = vmatprep.subr.mxu0 0.0
    %924 = vmatpush1.msra.mxu0 0.0
    %925 = vmatprep.subr.mxu0 0.0
    %926 = vmatpush1.msra.mxu0 0.0
    %927 = vmatprep.subr.mxu0 0.0
    %928 = vmatpush1.msra.mxu0 0.0
    %929 = vmatprep.subr.mxu0 0.0
    %930 = vmatpush1.msra.mxu0 0.0
    %931 = vmatprep.subr.mxu0 0.0
    %932 = vmatpush1.msra.mxu0 0.0
    %933 = vmatprep.subr.mxu0 0.0
    %934 = vmatpush1.msra.mxu0 0.0
    %935 = vmatprep.subr.mxu0 0.0
    %936 = vmatpush1.msra.mxu0 0.0
    %937 = vmatprep.subr.mxu0 0.0
    %938 = vmatpush1.msra.mxu0 0.0
    %939 = vmatprep.subr.mxu0 0.0
    %940 = vmatpush1.msra.mxu0 0.0
    %941 = vmatprep.subr.mxu0 0.0
    %942 = vmatpush1.msra.mxu0 0.0
    %943 = vmatprep.subr.mxu0 0.0
    %944 = vmatpush1.msra.mxu0 0.0
    %945 = vmatprep.subr.mxu0 0.0
    %946 = vmatpush1.msra.mxu0 0.0
    %947 = vmatprep.subr.mxu0 0.0
    %948 = vmatpush1.msra.mxu0 0.0
    %949 = vmatprep.subr.mxu0 0.0
    %950 = vmatpush1.msra.mxu0 0.0
    %951 = vmatprep.subr.mxu0 0.0
    %952 = vmatpush1.msra.mxu0 0.0
    %953 = vmatprep.subr.mxu0 0.0
    %954 = vmatpush1.msra.mxu0 0.0
    %955 = vmatprep.subr.mxu0 0.0
    %956 = vmatpush1.msra.mxu0 0.0
    %957 = vmatprep.subr.mxu0 0.0
    %958 = vmatpush1.msra.mxu0 0.0
    %959 = vmatprep.subr.mxu0 0.0
    %960 = vmatpush1.msra.mxu0 0.0
    %961 = vmatprep.subr.mxu0 0.0
    %962 = vmatpush1.msra.mxu0 0.0
    %963 = vmatprep.subr.mxu0 0.0
    %964 = vmatpush1.msra.mxu0 0.0
    %965 = vmatprep.subr.mxu0 0.0
    %966 = vmatpush1.msra.mxu0 0.0
    %967 = vmatprep.subr.mxu0 0.0
    %968 = vmatpush1.msra.mxu0 0.0
    %969 = vmatprep.subr.mxu0 0.0
    %970 = vmatpush1.msra.mxu0 0.0
    %971 = vmatprep.subr.mxu0 0.0
    %972 = vmatpush1.msra.mxu0 0.0
    %973 = vmatprep.subr.mxu0 0.0
    %974 = vmatpush1.msra.mxu0 0.0
    %975 = vmatprep.subr.mxu0 0.0
    %976 = vmatpush1.msra.mxu0 0.0
    %977 = vmatprep.subr.mxu0 0.0
    %978 = vmatpush1.msra.mxu0 0.0
    %979 = vmatprep.subr.mxu0 0.0
    %980 = vmatpush1.msra.mxu0 0.0
    %981 = vmatprep.subr.mxu0 0.0
    %982 = vmatpush1.msra.mxu0 0.0
    %983 = vmatprep.mubr.f32.mxu0 0.0
    %984 = vmatmul.mubr.f32.gmra.mrb[0].mxu0 %v914
    %v985 = vpop.f32.mrb[0].mxu0
    %v986 = vadd.f32 0.0, %v985
    %v987 = vpop.f32.mrb[0].mxu0
    %988 = vmatprep.mubr.f32.mxu0 0.0
    %989 = vmatmul.mubr.f32.gmra.mrb[0].mxu0 %v917
    %v990 = vpop.f32.mrb[0].mxu0
    %v991 = vadd.f32 0.0, %v990
    %v992 = vpop.f32.mrb[0].mxu0
    %993 = vdwg.mxu0
    %996 = vrot.lane.b32.xlu0 %v986, 24
    %v997 = vpop.permute.xlu0 %996
    %998 = vrot.lane.b32.xlu0 %v991, 24
    %v999 = vpop.permute.xlu0 %998
    %vm1002 = vcmask 261312
    %1003 = vst.msk [vmem:[#allocation2] sm:$0xff] %vm1002, %v997
    %1004 = vst.msk [vmem:[#allocation2 + $0x8] sm:$0xff] %vm1002, %v999
    %v1005 = vld [vmem:[#allocation2] sm:$0xff]
    %v1006 = vld [vmem:[#allocation2 + $0x8] sm:$0xff]
    %v1007 = vld [vmem:[#allocation3 + $0xc0] sm:$0xff]
    %v1008 = vld [vmem:[#allocation3 + $0xc8] sm:$0xff]
    %v1009 = vld [vmem:[#allocation3 + $0xd0] sm:$0xff]
    %v1010 = vld [vmem:[#allocation3 + $0xd8] sm:$0xff]
    %v1011 = vld [vmem:[#allocation3 + $0xe1] sm:$0x1]
    %v1012 = vlaneseq
    %v1013 = vshrl.u32 %v1012, 7
    %v1014 = vsub.s32 0, %v1013
    %v1015 = vrot.slane %v1011, %v1014
    %v1017 = vsel %vm36, %v1005, 0
    %v1020 = vsel %vm36, %v1006, 0
    %1022 = vmatprep.subr.mxu0 0.0
    %1023 = vmatpush1.msra.mxu0 %v1007
    %1024 = vmatprep.subr.mxu0 0.0
    %1025 = vmatpush1.msra.mxu0 %v1008
    %1026 = vmatprep.subr.mxu0 0.0
    %1027 = vmatpush1.msra.mxu0 %v1009
    %1028 = vmatprep.subr.mxu0 0.0
    %1029 = vmatpush1.msra.mxu0 %v1010
    %1030 = vmatprep.subr.mxu0 0.0
    %1031 = vmatpush1.msra.mxu0 0.0
    %1032 = vmatprep.subr.mxu0 0.0
    %1033 = vmatpush1.msra.mxu0 0.0
    %1034 = vmatprep.subr.mxu0 0.0
    %1035 = vmatpush1.msra.mxu0 0.0
    %1036 = vmatprep.subr.mxu0 0.0
    %1037 = vmatpush1.msra.mxu0 0.0
    %1038 = vmatprep.subr.mxu0 0.0
    %1039 = vmatpush1.msra.mxu0 0.0
    %1040 = vmatprep.subr.mxu0 0.0
    %1041 = vmatpush1.msra.mxu0 0.0
    %1042 = vmatprep.subr.mxu0 0.0
    %1043 = vmatpush1.msra.mxu0 0.0
    %1044 = vmatprep.subr.mxu0 0.0
    %1045 = vmatpush1.msra.mxu0 0.0
    %1046 = vmatprep.subr.mxu0 0.0
    %1047 = vmatpush1.msra.mxu0 0.0
    %1048 = vmatprep.subr.mxu0 0.0
    %1049 = vmatpush1.msra.mxu0 0.0
    %1050 = vmatprep.subr.mxu0 0.0
    %1051 = vmatpush1.msra.mxu0 0.0
    %1052 = vmatprep.subr.mxu0 0.0
    %1053 = vmatpush1.msra.mxu0 0.0
    %1054 = vmatprep.subr.mxu0 0.0
    %1055 = vmatpush1.msra.mxu0 0.0
    %1056 = vmatprep.subr.mxu0 0.0
    %1057 = vmatpush1.msra.mxu0 0.0
    %1058 = vmatprep.subr.mxu0 0.0
    %1059 = vmatpush1.msra.mxu0 0.0
    %1060 = vmatprep.subr.mxu0 0.0
    %1061 = vmatpush1.msra.mxu0 0.0
    %1062 = vmatprep.subr.mxu0 0.0
    %1063 = vmatpush1.msra.mxu0 0.0
    %1064 = vmatprep.subr.mxu0 0.0
    %1065 = vmatpush1.msra.mxu0 0.0
    %1066 = vmatprep.subr.mxu0 0.0
    %1067 = vmatpush1.msra.mxu0 0.0
    %1068 = vmatprep.subr.mxu0 0.0
    %1069 = vmatpush1.msra.mxu0 0.0
    %1070 = vmatprep.subr.mxu0 0.0
    %1071 = vmatpush1.msra.mxu0 0.0
    %1072 = vmatprep.subr.mxu0 0.0
    %1073 = vmatpush1.msra.mxu0 0.0
    %1074 = vmatprep.subr.mxu0 0.0
    %1075 = vmatpush1.msra.mxu0 0.0
    %1076 = vmatprep.subr.mxu0 0.0
    %1077 = vmatpush1.msra.mxu0 0.0
    %1078 = vmatprep.subr.mxu0 0.0
    %1079 = vmatpush1.msra.mxu0 0.0
    %1080 = vmatprep.subr.mxu0 0.0
    %1081 = vmatpush1.msra.mxu0 0.0
    %1082 = vmatprep.subr.mxu0 0.0
    %1083 = vmatpush1.msra.mxu0 0.0
    %1084 = vmatprep.subr.mxu0 0.0
    %1085 = vmatpush1.msra.mxu0 0.0
    %1086 = vmatprep.mubr.f32.mxu0 0.0
    %1087 = vmatmul.mubr.f32.gmra.mrb[0].mxu0 %v1017
    %v1088 = vpop.f32.mrb[0].mxu0
    %v1089 = vadd.f32 %v1015, %v1088
    %v1090 = vpop.f32.mrb[0].mxu0
    %1091 = vmatprep.mubr.f32.mxu0 0.0
    %1092 = vmatmul.mubr.f32.gmra.mrb[0].mxu0 %v1020
    %v1093 = vpop.f32.mrb[0].mxu0
    %v1094 = vadd.f32 %v1015, %v1093
    %v1095 = vpop.f32.mrb[0].mxu0
    %1096 = vdwg.mxu0
    %v1097 = vadd.f32 %v29, %v1089
    %v1098 = vadd.f32 %v30, %v1094
    %v1099 = vld [vmem:[#allocation3 + $0xe6] sm:$0x1]
    %v1100 = vld [vmem:[#allocation3 + $0xe7] sm:$0x1]
    %v1101 = vsel %vm36, %v1097, 0.0
    %1102 = vadd.xlane.f32.xlu0 %v1101
    %v1103 = vpop.xlane.xlu0 %1102
    %v1104 = vsel %vm36, %v1098, 0.0
    %1105 = vadd.xlane.f32.xlu0 %v1104
    %v1106 = vpop.xlane.xlu0 %1105
    %v1107 = vmul.f32 %v1103, %v43
    %v1108 = vmul.f32 %v1106, %v43
    %v1109 = vmul.f32 %v1097, %v1097
    %v1110 = vmul.f32 %v1098, %v1098
    %v1111 = vsel %vm36, %v1109, 0.0
    %1112 = vadd.xlane.f32.xlu0 %v1111
    %v1113 = vpop.xlane.xlu0 %1112
    %v1114 = vsel %vm36, %v1110, 0.0
    %1115 = vadd.xlane.f32.xlu0 %v1114
    %v1116 = vpop.xlane.xlu0 %1115
    %v1117 = vmul.f32 %v1113, %v43
    %v1118 = vmul.f32 %v1116, %v43
    %v1119 = vmul.f32 %v1107, %v1107
    %v1120 = vmul.f32 %v1108, %v1108
    %v1121 = vsub.f32 %v1117, %v1119
    %v1122 = vsub.f32 %v1118, %v1120
    %v1123 = vsub.f32 %v1097, %v1107
    %v1124 = vsub.f32 %v1098, %v1108
    %v1125 = vadd.f32 %v1121, 1e-05
    %v1126 = vadd.f32 %v1122, 1e-05
    %v1127 = vrsqrt.pop %v1125
    %v1128 = vrsqrt.pop %v1126
    %v1129 = vmul.f32 %v1123, %v1127
    %v1130 = vmul.f32 %v1124, %v1128
    %v1131 = vlaneseq
    %v1132 = vshrl.u32 %v1131, 7
    %v1133 = vsub.s32 0, %v1132
    %v1134 = vrot.slane %v1099, %v1133
    %v1135 = vmul.f32 %v1129, %v1134
    %v1136 = vmul.f32 %v1130, %v1134
    %v1137 = vlaneseq
    %v1138 = vshrl.u32 %v1137, 7
    %v1139 = vsub.s32 0, %v1138
    %v1140 = vrot.slane %v1100, %v1139
    %v1141 = vadd.f32 %v1135, %v1140
    %v1142 = vadd.f32 %v1136, %v1140
    %v1143 = vld [vmem:[#allocation3 + $0x20] sm:$0xff]
    %v1144 = vld [vmem:[#allocation3 + $0x28] sm:$0xff]
    %v1145 = vld [vmem:[#allocation3 + $0x30] sm:$0xff]
    %v1146 = vld [vmem:[#allocation3 + $0x38] sm:$0xff]
    %v1147 = vld [vmem:[#allocation3 + $0xe2] sm:$0x1]
    %v1148 = vlaneseq
    %v1149 = vshrl.u32 %v1148, 7
    %v1150 = vsub.s32 0, %v1149
    %v1151 = vrot.slane %v1147, %v1150
    %v1153 = vsel %vm36, %v1141, 0
    %v1156 = vsel %vm36, %v1142, 0
    %1158 = vmatprep.subr.mxu0 0.0
    %1159 = vmatpush1.msra.mxu0 %v1143
    %1160 = vmatprep.subr.mxu0 0.0
    %1161 = vmatpush1.msra.mxu0 %v1144
    %1162 = vmatprep.subr.mxu0 0.0
    %1163 = vmatpush1.msra.mxu0 %v1145
    %1164 = vmatprep.subr.mxu0 0.0
    %1165 = vmatpush1.msra.mxu0 %v1146
    %1166 = vmatprep.subr.mxu0 0.0
    %1167 = vmatpush1.msra.mxu0 0.0
    %1168 = vmatprep.subr.mxu0 0.0
    %1169 = vmatpush1.msra.mxu0 0.0
    %1170 = vmatprep.subr.mxu0 0.0
    %1171 = vmatpush1.msra.mxu0 0.0
    %1172 = vmatprep.subr.mxu0 0.0
    %1173 = vmatpush1.msra.mxu0 0.0
    %1174 = vmatprep.subr.mxu0 0.0
    %1175 = vmatpush1.msra.mxu0 0.0
    %1176 = vmatprep.subr.mxu0 0.0
    %1177 = vmatpush1.msra.mxu0 0.0
    %1178 = vmatprep.subr.mxu0 0.0
    %1179 = vmatpush1.msra.mxu0 0.0
    %1180 = vmatprep.subr.mxu0 0.0
    %1181 = vmatpush1.msra.mxu0 0.0
    %1182 = vmatprep.subr.mxu0 0.0
    %1183 = vmatpush1.msra.mxu0 0.0
    %1184 = vmatprep.subr.mxu0 0.0
    %1185 = vmatpush1.msra.mxu0 0.0
    %1186 = vmatprep.subr.mxu0 0.0
    %1187 = vmatpush1.msra.mxu0 0.0
    %1188 = vmatprep.subr.mxu0 0.0
    %1189 = vmatpush1.msra.mxu0 0.0
    %1190 = vmatprep.subr.mxu0 0.0
    %1191 = vmatpush1.msra.mxu0 0.0
    %1192 = vmatprep.subr.mxu0 0.0
    %1193 = vmatpush1.msra.mxu0 0.0
    %1194 = vmatprep.subr.mxu0 0.0
    %1195 = vmatpush1.msra.mxu0 0.0
    %1196 = vmatprep.subr.mxu0 0.0
    %1197 = vmatpush1.msra.mxu0 0.0
    %1198 = vmatprep.subr.mxu0 0.0
    %1199 = vmatpush1.msra.mxu0 0.0
    %1200 = vmatprep.subr.mxu0 0.0
    %1201 = vmatpush1.msra.mxu0 0.0
    %1202 = vmatprep.subr.mxu0 0.0
    %1203 = vmatpush1.msra.mxu0 0.0
    %1204 = vmatprep.subr.mxu0 0.0
    %1205 = vmatpush1.msra.mxu0 0.0
    %1206 = vmatprep.subr.mxu0 0.0
    %1207 = vmatpush1.msra.mxu0 0.0
    %1208 = vmatprep.subr.mxu0 0.0
    %1209 = vmatpush1.msra.mxu0 0.0
    %1210 = vmatprep.subr.mxu0 0.0
    %1211 = vmatpush1.msra.mxu0 0.0
    %1212 = vmatprep.subr.mxu0 0.0
    %1213 = vmatpush1.msra.mxu0 0.0
    %1214 = vmatprep.subr.mxu0 0.0
    %1215 = vmatpush1.msra.mxu0 0.0
    %1216 = vmatprep.subr.mxu0 0.0
    %1217 = vmatpush1.msra.mxu0 0.0
    %1218 = vmatprep.subr.mxu0 0.0
    %1219 = vmatpush1.msra.mxu0 0.0
    %1220 = vmatprep.subr.mxu0 0.0
    %1221 = vmatpush1.msra.mxu0 0.0
    %1222 = vmatprep.mubr.f32.mxu0 0.0
    %1223 = vmatmul.mubr.f32.gmra.mrb[0].mxu0 %v1153
    %v1224 = vpop.f32.mrb[0].mxu0
    %v1225 = vadd.f32 %v1151, %v1224
    %v1226 = vpop.f32.mrb[0].mxu0
    %1227 = vmatprep.mubr.f32.mxu0 0.0
    %1228 = vmatmul.mubr.f32.gmra.mrb[0].mxu0 %v1156
    %v1229 = vpop.f32.mrb[0].mxu0
    %v1230 = vadd.f32 %v1151, %v1229
    %v1231 = vpop.f32.mrb[0].mxu0
    %1232 = vdwg.mxu0
    %v1233 = vmul.f32 %v1225, 1.702
    %v1234 = vmul.f32 %v1230, 1.702
    %v1235 = vxor.u32 %v1233, 2147483648
    %v1236 = vxor.u32 %v1234, 2147483648
    %v1237 = vmul.f32 %v1235, 1.442695
    %v1238 = vpow.pop %v1237
    %v1239 = vmul.f32 %v1236, 1.442695
    %v1240 = vpow.pop %v1239
    %v1241 = vadd.f32 %v1238, 1.0
    %v1242 = vadd.f32 %v1240, 1.0
    %v1243 = vrcp.pop %v1241
    %v1244 = vmul.f32 1.0, %v1243
    %v1245 = vrcp.pop %v1242
    %v1246 = vmul.f32 1.0, %v1245
    %v1247 = vmul.f32 %v1225, %v1244
    %v1248 = vmul.f32 %v1230, %v1246
    %v1249 = vld [vmem:[#allocation3 + $0x40] sm:$0xff]
    %v1250 = vld [vmem:[#allocation3 + $0x48] sm:$0xff]
    %v1251 = vld [vmem:[#allocation3 + $0x50] sm:$0xff]
    %v1252 = vld [vmem:[#allocation3 + $0x58] sm:$0xff]
    %v1253 = vld [vmem:[#allocation3 + $0x60] sm:$0xff]
    %v1254 = vld [vmem:[#allocation3 + $0x68] sm:$0xff]
    %v1255 = vld [vmem:[#allocation3 + $0x70] sm:$0xff]
    %v1256 = vld [vmem:[#allocation3 + $0x78] sm:$0xff]
    %v1257 = vld [vmem:[#allocation3 + $0x80] sm:$0xff]
    %v1258 = vld [vmem:[#allocation3 + $0x88] sm:$0xff]
    %v1259 = vld [vmem:[#allocation3 + $0x90] sm:$0xff]
    %v1260 = vld [vmem:[#allocation3 + $0x98] sm:$0xff]
    %v1261 = vld [vmem:[#allocation3 + $0xa0] sm:$0xff]
    %v1262 = vld [vmem:[#allocation3 + $0xa8] sm:$0xff]
    %v1263 = vld [vmem:[#allocation3 + $0xb0] sm:$0xff]
    %v1264 = vld [vmem:[#allocation3 + $0xb8] sm:$0xff]
    %v1265 = vld [vmem:[#allocation3 + $0xe3] sm:$0x1]
    %v1266 = vlaneseq
    %v1267 = vshrl.u32 %v1266, 7
    %v1268 = vsub.s32 0, %v1267
    %v1269 = vrot.slane %v1265, %v1268
    %1270 = vmatprep.subr.mxu0 0.0
    %1271 = vmatpush1.msra.mxu0 %v1249
    %1272 = vmatprep.subr.mxu0 0.0
    %1273 = vmatpush1.msra.mxu0 %v1250
    %1274 = vmatprep.subr.mxu0 0.0
    %1275 = vmatpush1.msra.mxu0 %v1251
    %1276 = vmatprep.subr.mxu0 0.0
    %1277 = vmatpush1.msra.mxu0 %v1252
    %1278 = vmatprep.subr.mxu0 0.0
    %1279 = vmatpush1.msra.mxu0 %v1253
    %1280 = vmatprep.subr.mxu0 0.0
    %1281 = vmatpush1.msra.mxu0 %v1254
    %1282 = vmatprep.subr.mxu0 0.0
    %1283 = vmatpush1.msra.mxu0 %v1255
    %1284 = vmatprep.subr.mxu0 0.0
    %1285 = vmatpush1.msra.mxu0 %v1256
    %1286 = vmatprep.subr.mxu0 0.0
    %1287 = vmatpush1.msra.mxu0 %v1257
    %1288 = vmatprep.subr.mxu0 0.0
    %1289 = vmatpush1.msra.mxu0 %v1258
    %1290 = vmatprep.subr.mxu0 0.0
    %1291 = vmatpush1.msra.mxu0 %v1259
    %1292 = vmatprep.subr.mxu0 0.0
    %1293 = vmatpush1.msra.mxu0 %v1260
    %1294 = vmatprep.subr.mxu0 0.0
    %1295 = vmatpush1.msra.mxu0 %v1261
    %1296 = vmatprep.subr.mxu0 0.0
    %1297 = vmatpush1.msra.mxu0 %v1262
    %1298 = vmatprep.subr.mxu0 0.0
    %1299 = vmatpush1.msra.mxu0 %v1263
    %1300 = vmatprep.subr.mxu0 0.0
    %1301 = vmatpush1.msra.mxu0 %v1264
    %1302 = vmatprep.subr.mxu0 0.0
    %1303 = vmatpush1.msra.mxu0 0.0
    %1304 = vmatprep.subr.mxu0 0.0
    %1305 = vmatpush1.msra.mxu0 0.0
    %1306 = vmatprep.subr.mxu0 0.0
    %1307 = vmatpush1.msra.mxu0 0.0
    %1308 = vmatprep.subr.mxu0 0.0
    %1309 = vmatpush1.msra.mxu0 0.0
    %1310 = vmatprep.subr.mxu0 0.0
    %1311 = vmatpush1.msra.mxu0 0.0
    %1312 = vmatprep.subr.mxu0 0.0
    %1313 = vmatpush1.msra.mxu0 0.0
    %1314 = vmatprep.subr.mxu0 0.0
    %1315 = vmatpush1.msra.mxu0 0.0
    %1316 = vmatprep.subr.mxu0 0.0
    %1317 = vmatpush1.msra.mxu0 0.0
    %1318 = vmatprep.subr.mxu0 0.0
    %1319 = vmatpush1.msra.mxu0 0.0
    %1320 = vmatprep.subr.mxu0 0.0
    %1321 = vmatpush1.msra.mxu0 0.0
    %1322 = vmatprep.subr.mxu0 0.0
    %1323 = vmatpush1.msra.mxu0 0.0
    %1324 = vmatprep.subr.mxu0 0.0
    %1325 = vmatpush1.msra.mxu0 0.0
    %1326 = vmatprep.subr.mxu0 0.0
    %1327 = vmatpush1.msra.mxu0 0.0
    %1328 = vmatprep.subr.mxu0 0.0
    %1329 = vmatpush1.msra.mxu0 0.0
    %1330 = vmatprep.subr.mxu0 0.0
    %1331 = vmatpush1.msra.mxu0 0.0
    %1332 = vmatprep.subr.mxu0 0.0
    %1333 = vmatpush1.msra.mxu0 0.0
    %1334 = vmatprep.mubr.f32.mxu0 0.0
    %1335 = vmatmul.mubr.f32.gmra.mrb[0].mxu0 %v1247
    %v1336 = vpop.f32.mrb[0].mxu0
    %v1337 = vadd.f32 %v1269, %v1336
    %v1338 = vpop.f32.mrb[0].mxu0
    %1339 = vmatprep.mubr.f32.mxu0 0.0
    %1340 = vmatmul.mubr.f32.gmra.mrb[0].mxu0 %v1248
    %v1341 = vpop.f32.mrb[0].mxu0
    %v1342 = vadd.f32 %v1269, %v1341
    %v1343 = vpop.f32.mrb[0].mxu0
    %1344 = vdwg.mxu0
    %v1345 = vadd.f32 %v1097, %v1337
    %v1346 = vadd.f32 %v1098, %v1342
    %s1347 = scalar_lea.vmem [#allocation3], 232
    %v1348 = vld [vmem:[%s1347 + $0xe4] sm:$0x1]
    %v1349 = vld [vmem:[%s1347 + $0xe5] sm:$0x1]
    %v1350 = vsel %vm36, %v1345, 0.0
    %1351 = vadd.xlane.f32.xlu0 %v1350
    %v1352 = vpop.xlane.xlu0 %1351
    %v1353 = vsel %vm36, %v1346, 0.0
    %1354 = vadd.xlane.f32.xlu0 %v1353
    %v1355 = vpop.xlane.xlu0 %1354
    %v1356 = vmul.f32 %v1352, %v43
    %v1357 = vmul.f32 %v1355, %v43
    %v1358 = vmul.f32 %v1345, %v1345
    %v1359 = vmul.f32 %v1346, %v1346
    %v1360 = vsel %vm36, %v1358, 0.0
    %1361 = vadd.xlane.f32.xlu0 %v1360
    %v1362 = vpop.xlane.xlu0 %1361
    %v1363 = vsel %vm36, %v1359, 0.0
    %1364 = vadd.xlane.f32.xlu0 %v1363
    %v1365 = vpop.xlane.xlu0 %1364
    %v1366 = vmul.f32 %v1362, %v43
    %v1367 = vmul.f32 %v1365, %v43
    %v1368 = vmul.f32 %v1356, %v1356
    %v1369 = vmul.f32 %v1357, %v1357
    %v1370 = vsub.f32 %v1366, %v1368
    %v1371 = vsub.f32 %v1367, %v1369
    %v1372 = vsub.f32 %v1345, %v1356
    %v1373 = vsub.f32 %v1346, %v1357
    %v1374 = vadd.f32 %v1370, 1e-05
    %v1375 = vadd.f32 %v1371, 1e-05
    %v1376 = vrsqrt.pop %v1374
    %v1377 = vrsqrt.pop %v1375
    %v1378 = vmul.f32 %v1372, %v1376
    %v1379 = vmul.f32 %v1373, %v1377
    %v1380 = vlaneseq
    %v1381 = vshrl.u32 %v1380, 7
    %v1382 = vsub.s32 0, %v1381
    %v1383 = vrot.slane %v1348, %v1382
    %v1384 = vmul.f32 %v1378, %v1383
    %v1385 = vmul.f32 %v1379, %v1383
    %v1386 = vlaneseq
    %v1387 = vshrl.u32 %v1386, 7
    %v1388 = vsub.s32 0, %v1387
    %v1389 = vrot.slane %v1349, %v1388
    %v1390 = vadd.f32 %v1384, %v1389
    %v1391 = vadd.f32 %v1385, %v1389
    %v1392 = vld [vmem:[%s1347] sm:$0xff]
    %v1393 = vld [vmem:[%s1347 + $0x8] sm:$0xff]
    %v1394 = vld [vmem:[%s1347 + $0x10] sm:$0xff]
    %v1395 = vld [vmem:[%s1347 + $0x18] sm:$0xff]
    %v1396 = vld [vmem:[%s1347 + $0xe0] sm:$0x1]
    %v1397 = vlaneseq
    %v1398 = vshrl.u32 %v1397, 7
    %v1399 = vsub.s32 0, %v1398
    %v1400 = vrot.slane %v1396, %v1399
    %v1402 = vsel %vm36, %v1390, 0
    %v1405 = vsel %vm36, %v1391, 0
    %1407 = vmatprep.subr.mxu0 0.0
    %1408 = vmatpush1.msra.mxu0 %v1392
    %1409 = vmatprep.subr.mxu0 0.0
    %1410 = vmatpush1.msra.mxu0 %v1393
    %1411 = vmatprep.subr.mxu0 0.0
    %1412 = vmatpush1.msra.mxu0 %v1394
    %1413 = vmatprep.subr.mxu0 0.0
    %1414 = vmatpush1.msra.mxu0 %v1395
    %1415 = vmatprep.subr.mxu0 0.0
    %1416 = vmatpush1.msra.mxu0 0.0
    %1417 = vmatprep.subr.mxu0 0.0
    %1418 = vmatpush1.msra.mxu0 0.0
    %1419 = vmatprep.subr.mxu0 0.0
    %1420 = vmatpush1.msra.mxu0 0.0
    %1421 = vmatprep.subr.mxu0 0.0
    %1422 = vmatpush1.msra.mxu0 0.0
    %1423 = vmatprep.subr.mxu0 0.0
    %1424 = vmatpush1.msra.mxu0 0.0
    %1425 = vmatprep.subr.mxu0 0.0
    %1426 = vmatpush1.msra.mxu0 0.0
    %1427 = vmatprep.subr.mxu0 0.0
    %1428 = vmatpush1.msra.mxu0 0.0
    %1429 = vmatprep.subr.mxu0 0.0
    %1430 = vmatpush1.msra.mxu0 0.0
    %1431 = vmatprep.subr.mxu0 0.0
    %1432 = vmatpush1.msra.mxu0 0.0
    %1433 = vmatprep.subr.mxu0 0.0
    %1434 = vmatpush1.msra.mxu0 0.0
    %1435 = vmatprep.subr.mxu0 0.0
    %1436 = vmatpush1.msra.mxu0 0.0
    %1437 = vmatprep.subr.mxu0 0.0
    %1438 = vmatpush1.msra.mxu0 0.0
    %1439 = vmatprep.subr.mxu0 0.0
    %1440 = vmatpush1.msra.mxu0 0.0
    %1441 = vmatprep.subr.mxu0 0.0
    %1442 = vmatpush1.msra.mxu0 0.0
    %1443 = vmatprep.subr.mxu0 0.0
    %1444 = vmatpush1.msra.mxu0 0.0
    %1445 = vmatprep.subr.mxu0 0.0
    %1446 = vmatpush1.msra.mxu0 0.0
    %1447 = vmatprep.subr.mxu0 0.0
    %1448 = vmatpush1.msra.mxu0 0.0
    %1449 = vmatprep.subr.mxu0 0.0
    %1450 = vmatpush1.msra.mxu0 0.0
    %1451 = vmatprep.subr.mxu0 0.0
    %1452 = vmatpush1.msra.mxu0 0.0
    %1453 = vmatprep.subr.mxu0 0.0
    %1454 = vmatpush1.msra.mxu0 0.0
    %1455 = vmatprep.subr.mxu0 0.0
    %1456 = vmatpush1.msra.mxu0 0.0
    %1457 = vmatprep.subr.mxu0 0.0
    %1458 = vmatpush1.msra.mxu0 0.0
    %1459 = vmatprep.subr.mxu0 0.0
    %1460 = vmatpush1.msra.mxu0 0.0
    %1461 = vmatprep.subr.mxu0 0.0
    %1462 = vmatpush1.msra.mxu0 0.0
    %1463 = vmatprep.subr.mxu0 0.0
    %1464 = vmatpush1.msra.mxu0 0.0
    %1465 = vmatprep.subr.mxu0 0.0
    %1466 = vmatpush1.msra.mxu0 0.0
    %1467 = vmatprep.subr.mxu0 0.0
    %1468 = vmatpush1.msra.mxu0 0.0
    %1469 = vmatprep.subr.mxu0 0.0
    %1470 = vmatpush1.msra.mxu0 0.0
    %1471 = vmatprep.mubr.f32.mxu0 0.0
    %1472 = vmatmul.mubr.f32.gmra.mrb[0].mxu0 %v1402
    %v1473 = vpop.f32.mrb[0].mxu0
    %v1474 = vadd.f32 %v1400, %v1473
    %v1475 = vpop.f32.mrb[0].mxu0
    %1476 = vmatprep.mubr.f32.mxu0 0.0
    %1477 = vmatmul.mubr.f32.gmra.mrb[0].mxu0 %v1405
    %v1478 = vpop.f32.mrb[0].mxu0
    %v1479 = vadd.f32 %v1400, %v1478
    %v1480 = vpop.f32.mrb[0].mxu0
    %1481 = vdwg.mxu0
    %1484 = vrot.lane.b32.xlu0 %v1474, 96
    %v1485 = vpop.permute.xlu0 %1484
    %1486 = vrot.lane.b32.xlu0 %v1479, 96
    %v1487 = vpop.permute.xlu0 %1486
    %v1488 = vsel %vm176, %v1474, 0
    %v1490 = vsel %vm176, %v1479, 0
    %v1492 = vsel %vm176, %v1485, 0
    %v1494 = vsel %vm176, %v1487, 0
    %1496 = vmatprep.subr.mxu0 0.0
    %1497 = vmatpush1.xpose.msra.mxu0 %v1492
    %1498 = vmatprep.subr.mxu0 0.0
    %1499 = vmatpush1.xpose.msra.mxu0 %v1494
    %1500 = vmatprep.subr.mxu0 0.0
    %1501 = vmatpush1.xpose.msra.mxu0 0.0
    %1502 = vmatprep.subr.mxu0 0.0
    %1503 = vmatpush1.xpose.msra.mxu0 0.0
    %1504 = vmatprep.subr.mxu0 0.0
    %1505 = vmatpush1.xpose.msra.mxu0 0.0
    %1506 = vmatprep.subr.mxu0 0.0
    %1507 = vmatpush1.xpose.msra.mxu0 0.0
    %1508 = vmatprep.subr.mxu0 0.0
    %1509 = vmatpush1.xpose.msra.mxu0 0.0
    %1510 = vmatprep.subr.mxu0 0.0
    %1511 = vmatpush1.xpose.msra.mxu0 0.0
    %1512 = vmatprep.subr.mxu0 0.0
    %1513 = vmatpush1.xpose.msra.mxu0 0.0
    %1514 = vmatprep.subr.mxu0 0.0
    %1515 = vmatpush1.xpose.msra.mxu0 0.0
    %1516 = vmatprep.subr.mxu0 0.0
    %1517 = vmatpush1.xpose.msra.mxu0 0.0
    %1518 = vmatprep.subr.mxu0 0.0
    %1519 = vmatpush1.xpose.msra.mxu0 0.0
    %1520 = vmatprep.subr.mxu0 0.0
    %1521 = vmatpush1.xpose.msra.mxu0 0.0
    %1522 = vmatprep.subr.mxu0 0.0
    %1523 = vmatpush1.xpose.msra.mxu0 0.0
    %1524 = vmatprep.subr.mxu0 0.0
    %1525 = vmatpush1.xpose.msra.mxu0 0.0
    %1526 = vmatprep.subr.mxu0 0.0
    %1527 = vmatpush1.xpose.msra.mxu0 0.0
    %1528 = vmatprep.subr.mxu0 0.0
    %1529 = vmatpush1.xpose.msra.mxu0 0.0
    %1530 = vmatprep.subr.mxu0 0.0
    %1531 = vmatpush1.xpose.msra.mxu0 0.0
    %1532 = vmatprep.subr.mxu0 0.0
    %1533 = vmatpush1.xpose.msra.mxu0 0.0
    %1534 = vmatprep.subr.mxu0 0.0
    %1535 = vmatpush1.xpose.msra.mxu0 0.0
    %1536 = vmatprep.subr.mxu0 0.0
    %1537 = vmatpush1.xpose.msra.mxu0 0.0
    %1538 = vmatprep.subr.mxu0 0.0
    %1539 = vmatpush1.xpose.msra.mxu0 0.0
    %1540 = vmatprep.subr.mxu0 0.0
    %1541 = vmatpush1.xpose.msra.mxu0 0.0
    %1542 = vmatprep.subr.mxu0 0.0
    %1543 = vmatpush1.xpose.msra.mxu0 0.0
    %1544 = vmatprep.subr.mxu0 0.0
    %1545 = vmatpush1.xpose.msra.mxu0 0.0
    %1546 = vmatprep.subr.mxu0 0.0
    %1547 = vmatpush1.xpose.msra.mxu0 0.0
    %1548 = vmatprep.subr.mxu0 0.0
    %1549 = vmatpush1.xpose.msra.mxu0 0.0
    %1550 = vmatprep.subr.mxu0 0.0
    %1551 = vmatpush1.xpose.msra.mxu0 0.0
    %1552 = vmatprep.subr.mxu0 0.0
    %1553 = vmatpush1.xpose.msra.mxu0 0.0
    %1554 = vmatprep.subr.mxu0 0.0
    %1555 = vmatpush1.xpose.msra.mxu0 0.0
    %1556 = vmatprep.subr.mxu0 0.0
    %1557 = vmatpush1.xpose.msra.mxu0 0.0
    %1558 = vmatprep.subr.mxu0 0.0
    %1559 = vmatpush1.xpose.msra.mxu0 0.0
    %1560 = vmatprep.mubr.f32.mxu0 0.0
    %1561 = vmatmul.mubr.f32.gmra.mrb[0].mxu0 %v1488
    %v1562 = vpop.f32.mrb[0].mxu0
    %v1563 = vadd.f32 %v32, %v1562
    %v1564 = vpop.f32.mrb[0].mxu0
    %1565 = vmatprep.mubr.f32.mxu0 0.0
    %1566 = vmatmul.mubr.f32.gmra.mrb[0].mxu0 %v1490
    %v1567 = vpop.f32.mrb[0].mxu0
    %v1568 = vadd.f32 %v33, %v1567
    %v1569 = vpop.f32.mrb[0].mxu0
    %1570 = vdwg.mxu0
    %v1571 = vsel %vm260, %v1563, -inf
    %1572 = vmax.xlane.f32.xlu0 %v1571
    %v1573 = vpop.xlane.xlu0 %1572
    %v1574 = vsel %vm260, %v1568, -inf
    %1575 = vmax.xlane.f32.xlu0 %v1574
    %v1576 = vpop.xlane.xlu0 %1575
    %v1577 = vsub.f32 %v1563, %v1573
    %v1578 = vsub.f32 %v1568, %v1576
    %v1579 = vmul.f32 %v1577, 1.442695
    %v1580 = vpow.pop %v1579
    %v1581 = vmul.f32 %v1578, 1.442695
    %v1582 = vpow.pop %v1581
    %v1583 = vsel %vm260, %v1580, 0.0
    %1584 = vadd.xlane.f32.xlu0 %v1583
    %v1585 = vpop.xlane.xlu0 %1584
    %v1586 = vsel %vm260, %v1582, 0.0
    %1587 = vadd.xlane.f32.xlu0 %v1586
    %v1588 = vpop.xlane.xlu0 %1587
    %v1589 = vrcp.pop %v1585
    %v1590 = vmul.f32 %v1580, %v1589
    %v1591 = vrcp.pop %v1588
    %v1592 = vmul.f32 %v1582, %v1591
    %1593 = vrot.lane.b32.xlu0 %v1474, 64
    %v1594 = vpop.permute.xlu0 %1593
    %1595 = vrot.lane.b32.xlu0 %v1479, 64
    %v1596 = vpop.permute.xlu0 %1595
    %v1600 = vsel %vm260, %v1590, 0
    %v1603 = vsel %vm260, %v1592, 0
    %1605 = vmatprep.subr.mxu0 0.0
    %1606 = vmatpush1.msra.mxu0 %v1594
    %1607 = vmatprep.subr.mxu0 0.0
    %1608 = vmatpush1.msra.mxu0 %v1596
    %1609 = vmatprep.subr.mxu0 0.0
    %1610 = vmatpush1.msra.mxu0 0.0
    %1611 = vmatprep.subr.mxu0 0.0
    %1612 = vmatpush1.msra.mxu0 0.0
    %1613 = vmatprep.subr.mxu0 0.0
    %1614 = vmatpush1.msra.mxu0 0.0
    %1615 = vmatprep.subr.mxu0 0.0
    %1616 = vmatpush1.msra.mxu0 0.0
    %1617 = vmatprep.subr.mxu0 0.0
    %1618 = vmatpush1.msra.mxu0 0.0
    %1619 = vmatprep.subr.mxu0 0.0
    %1620 = vmatpush1.msra.mxu0 0.0
    %1621 = vmatprep.subr.mxu0 0.0
    %1622 = vmatpush1.msra.mxu0 0.0
    %1623 = vmatprep.subr.mxu0 0.0
    %1624 = vmatpush1.msra.mxu0 0.0
    %1625 = vmatprep.subr.mxu0 0.0
    %1626 = vmatpush1.msra.mxu0 0.0
    %1627 = vmatprep.subr.mxu0 0.0
    %1628 = vmatpush1.msra.mxu0 0.0
    %1629 = vmatprep.subr.mxu0 0.0
    %1630 = vmatpush1.msra.mxu0 0.0
    %1631 = vmatprep.subr.mxu0 0.0
    %1632 = vmatpush1.msra.mxu0 0.0
    %1633 = vmatprep.subr.mxu0 0.0
    %1634 = vmatpush1.msra.mxu0 0.0
    %1635 = vmatprep.subr.mxu0 0.0
    %1636 = vmatpush1.msra.mxu0 0.0
    %1637 = vmatprep.subr.mxu0 0.0
    %1638 = vmatpush1.msra.mxu0 0.0
    %1639 = vmatprep.subr.mxu0 0.0
    %1640 = vmatpush1.msra.mxu0 0.0
    %1641 = vmatprep.subr.mxu0 0.0
    %1642 = vmatpush1.msra.mxu0 0.0
    %1643 = vmatprep.subr.mxu0 0.0
    %1644 = vmatpush1.msra.mxu0 0.0
    %1645 = vmatprep.subr.mxu0 0.0
    %1646 = vmatpush1.msra.mxu0 0.0
    %1647 = vmatprep.subr.mxu0 0.0
    %1648 = vmatpush1.msra.mxu0 0.0
    %1649 = vmatprep.subr.mxu0 0.0
    %1650 = vmatpush1.msra.mxu0 0.0
    %1651 = vmatprep.subr.mxu0 0.0
    %1652 = vmatpush1.msra.mxu0 0.0
    %1653 = vmatprep.subr.mxu0 0.0
    %1654 = vmatpush1.msra.mxu0 0.0
    %1655 = vmatprep.subr.mxu0 0.0
    %1656 = vmatpush1.msra.mxu0 0.0
    %1657 = vmatprep.subr.mxu0 0.0
    %1658 = vmatpush1.msra.mxu0 0.0
    %1659 = vmatprep.subr.mxu0 0.0
    %1660 = vmatpush1.msra.mxu0 0.0
    %1661 = vmatprep.subr.mxu0 0.0
    %1662 = vmatpush1.msra.mxu0 0.0
    %1663 = vmatprep.subr.mxu0 0.0
    %1664 = vmatpush1.msra.mxu0 0.0
    %1665 = vmatprep.subr.mxu0 0.0
    %1666 = vmatpush1.msra.mxu0 0.0
    %1667 = vmatprep.subr.mxu0 0.0
    %1668 = vmatpush1.msra.mxu0 0.0
    %1669 = vmatprep.mubr.f32.mxu0 0.0
    %1670 = vmatmul.mubr.f32.gmra.mrb[0].mxu0 %v1600
    %v1671 = vpop.f32.mrb[0].mxu0
    %v1672 = vadd.f32 0.0, %v1671
    %v1673 = vpop.f32.mrb[0].mxu0
    %1674 = vmatprep.mubr.f32.mxu0 0.0
    %1675 = vmatmul.mubr.f32.gmra.mrb[0].mxu0 %v1603
    %v1676 = vpop.f32.mrb[0].mxu0
    %v1677 = vadd.f32 0.0, %v1676
    %v1678 = vpop.f32.mrb[0].mxu0
    %1679 = vdwg.mxu0
    %1680 = vst.msk [vmem:[#allocation2] sm:$0xff] %vm176, %v1672
    %1681 = vst.msk [vmem:[#allocation2 + $0x8] sm:$0xff] %vm176, %v1677
    %1682 = vrot.lane.b32.xlu0 %v1474, 120
    %v1683 = vpop.permute.xlu0 %1682
    %1684 = vrot.lane.b32.xlu0 %v1479, 120
    %v1685 = vpop.permute.xlu0 %1684
    %1686 = vrot.lane.b32.xlu0 %v1474, 88
    %v1687 = vpop.permute.xlu0 %1686
    %1688 = vrot.lane.b32.xlu0 %v1479, 88
    %v1689 = vpop.permute.xlu0 %1688
    %v1690 = vsel %vm176, %v1683, 0
    %v1692 = vsel %vm176, %v1685, 0
    %v1694 = vsel %vm176, %v1687, 0
    %v1696 = vsel %vm176, %v1689, 0
    %1698 = vmatprep.subr.mxu0 0.0
    %1699 = vmatpush1.xpose.msra.mxu0 %v1694
    %1700 = vmatprep.subr.mxu0 0.0
    %1701 = vmatpush1.xpose.msra.mxu0 %v1696
    %1702 = vmatprep.subr.mxu0 0.0
    %1703 = vmatpush1.xpose.msra.mxu0 0.0
    %1704 = vmatprep.subr.mxu0 0.0
    %1705 = vmatpush1.xpose.msra.mxu0 0.0
    %1706 = vmatprep.subr.mxu0 0.0
    %1707 = vmatpush1.xpose.msra.mxu0 0.0
    %1708 = vmatprep.subr.mxu0 0.0
    %1709 = vmatpush1.xpose.msra.mxu0 0.0
    %1710 = vmatprep.subr.mxu0 0.0
    %1711 = vmatpush1.xpose.msra.mxu0 0.0
    %1712 = vmatprep.subr.mxu0 0.0
    %1713 = vmatpush1.xpose.msra.mxu0 0.0
    %1714 = vmatprep.subr.mxu0 0.0
    %1715 = vmatpush1.xpose.msra.mxu0 0.0
    %1716 = vmatprep.subr.mxu0 0.0
    %1717 = vmatpush1.xpose.msra.mxu0 0.0
    %1718 = vmatprep.subr.mxu0 0.0
    %1719 = vmatpush1.xpose.msra.mxu0 0.0
    %1720 = vmatprep.subr.mxu0 0.0
    %1721 = vmatpush1.xpose.msra.mxu0 0.0
    %1722 = vmatprep.subr.mxu0 0.0
    %1723 = vmatpush1.xpose.msra.mxu0 0.0
    %1724 = vmatprep.subr.mxu0 0.0
    %1725 = vmatpush1.xpose.msra.mxu0 0.0
    %1726 = vmatprep.subr.mxu0 0.0
    %1727 = vmatpush1.xpose.msra.mxu0 0.0
    %1728 = vmatprep.subr.mxu0 0.0
    %1729 = vmatpush1.xpose.msra.mxu0 0.0
    %1730 = vmatprep.subr.mxu0 0.0
    %1731 = vmatpush1.xpose.msra.mxu0 0.0
    %1732 = vmatprep.subr.mxu0 0.0
    %1733 = vmatpush1.xpose.msra.mxu0 0.0
    %1734 = vmatprep.subr.mxu0 0.0
    %1735 = vmatpush1.xpose.msra.mxu0 0.0
    %1736 = vmatprep.subr.mxu0 0.0
    %1737 = vmatpush1.xpose.msra.mxu0 0.0
    %1738 = vmatprep.subr.mxu0 0.0
    %1739 = vmatpush1.xpose.msra.mxu0 0.0
    %1740 = vmatprep.subr.mxu0 0.0
    %1741 = vmatpush1.xpose.msra.mxu0 0.0
    %1742 = vmatprep.subr.mxu0 0.0
    %1743 = vmatpush1.xpose.msra.mxu0 0.0
    %1744 = vmatprep.subr.mxu0 0.0
    %1745 = vmatpush1.xpose.msra.mxu0 0.0
    %1746 = vmatprep.subr.mxu0 0.0
    %1747 = vmatpush1.xpose.msra.mxu0 0.0
    %1748 = vmatprep.subr.mxu0 0.0
    %1749 = vmatpush1.xpose.msra.mxu0 0.0
    %1750 = vmatprep.subr.mxu0 0.0
    %1751 = vmatpush1.xpose.msra.mxu0 0.0
    %1752 = vmatprep.subr.mxu0 0.0
    %1753 = vmatpush1.xpose.msra.mxu0 0.0
    %1754 = vmatprep.subr.mxu0 0.0
    %1755 = vmatpush1.xpose.msra.mxu0 0.0
    %1756 = vmatprep.subr.mxu0 0.0
    %1757 = vmatpush1.xpose.msra.mxu0 0.0
    %1758 = vmatprep.subr.mxu0 0.0
    %1759 = vmatpush1.xpose.msra.mxu0 0.0
    %1760 = vmatprep.subr.mxu0 0.0
    %1761 = vmatpush1.xpose.msra.mxu0 0.0
    %1762 = vmatprep.mubr.f32.mxu0 0.0
    %1763 = vmatmul.mubr.f32.gmra.mrb[0].mxu0 %v1690
    %v1764 = vpop.f32.mrb[0].mxu0
    %v1765 = vadd.f32 %v32, %v1764
    %v1766 = vpop.f32.mrb[0].mxu0
    %1767 = vmatprep.mubr.f32.mxu0 0.0
    %1768 = vmatmul.mubr.f32.gmra.mrb[0].mxu0 %v1692
    %v1769 = vpop.f32.mrb[0].mxu0
    %v1770 = vadd.f32 %v33, %v1769
    %v1771 = vpop.f32.mrb[0].mxu0
    %1772 = vdwg.mxu0
    %v1773 = vsel %vm260, %v1765, -inf
    %1774 = vmax.xlane.f32.xlu0 %v1773
    %v1775 = vpop.xlane.xlu0 %1774
    %v1776 = vsel %vm260, %v1770, -inf
    %1777 = vmax.xlane.f32.xlu0 %v1776
    %v1778 = vpop.xlane.xlu0 %1777
    %v1779 = vsub.f32 %v1765, %v1775
    %v1780 = vsub.f32 %v1770, %v1778
    %v1781 = vmul.f32 %v1779, 1.442695
    %v1782 = vpow.pop %v1781
    %v1783 = vmul.f32 %v1780, 1.442695
    %v1784 = vpow.pop %v1783
    %v1785 = vsel %vm260, %v1782, 0.0
    %1786 = vadd.xlane.f32.xlu0 %v1785
    %v1787 = vpop.xlane.xlu0 %1786
    %v1788 = vsel %vm260, %v1784, 0.0
    %1789 = vadd.xlane.f32.xlu0 %v1788
    %v1790 = vpop.xlane.xlu0 %1789
    %v1791 = vrcp.pop %v1787
    %v1792 = vmul.f32 %v1782, %v1791
    %v1793 = vrcp.pop %v1790
    %v1794 = vmul.f32 %v1784, %v1793
    %1795 = vrot.lane.b32.xlu0 %v1474, 56
    %v1796 = vpop.permute.xlu0 %1795
    %1797 = vrot.lane.b32.xlu0 %v1479, 56
    %v1798 = vpop.permute.xlu0 %1797
    %v1802 = vsel %vm260, %v1792, 0
    %v1805 = vsel %vm260, %v1794, 0
    %1807 = vmatprep.subr.mxu0 0.0
    %1808 = vmatpush1.msra.mxu0 %v1796
    %1809 = vmatprep.subr.mxu0 0.0
    %1810 = vmatpush1.msra.mxu0 %v1798
    %1811 = vmatprep.subr.mxu0 0.0
    %1812 = vmatpush1.msra.mxu0 0.0
    %1813 = vmatprep.subr.mxu0 0.0
    %1814 = vmatpush1.msra.mxu0 0.0
    %1815 = vmatprep.subr.mxu0 0.0
    %1816 = vmatpush1.msra.mxu0 0.0
    %1817 = vmatprep.subr.mxu0 0.0
    %1818 = vmatpush1.msra.mxu0 0.0
    %1819 = vmatprep.subr.mxu0 0.0
    %1820 = vmatpush1.msra.mxu0 0.0
    %1821 = vmatprep.subr.mxu0 0.0
    %1822 = vmatpush1.msra.mxu0 0.0
    %1823 = vmatprep.subr.mxu0 0.0
    %1824 = vmatpush1.msra.mxu0 0.0
    %1825 = vmatprep.subr.mxu0 0.0
    %1826 = vmatpush1.msra.mxu0 0.0
    %1827 = vmatprep.subr.mxu0 0.0
    %1828 = vmatpush1.msra.mxu0 0.0
    %1829 = vmatprep.subr.mxu0 0.0
    %1830 = vmatpush1.msra.mxu0 0.0
    %1831 = vmatprep.subr.mxu0 0.0
    %1832 = vmatpush1.msra.mxu0 0.0
    %1833 = vmatprep.subr.mxu0 0.0
    %1834 = vmatpush1.msra.mxu0 0.0
    %1835 = vmatprep.subr.mxu0 0.0
    %1836 = vmatpush1.msra.mxu0 0.0
    %1837 = vmatprep.subr.mxu0 0.0
    %1838 = vmatpush1.msra.mxu0 0.0
    %1839 = vmatprep.subr.mxu0 0.0
    %1840 = vmatpush1.msra.mxu0 0.0
    %1841 = vmatprep.subr.mxu0 0.0
    %1842 = vmatpush1.msra.mxu0 0.0
    %1843 = vmatprep.subr.mxu0 0.0
    %1844 = vmatpush1.msra.mxu0 0.0
    %1845 = vmatprep.subr.mxu0 0.0
    %1846 = vmatpush1.msra.mxu0 0.0
    %1847 = vmatprep.subr.mxu0 0.0
    %1848 = vmatpush1.msra.mxu0 0.0
    %1849 = vmatprep.subr.mxu0 0.0
    %1850 = vmatpush1.msra.mxu0 0.0
    %1851 = vmatprep.subr.mxu0 0.0
    %1852 = vmatpush1.msra.mxu0 0.0
    %1853 = vmatprep.subr.mxu0 0.0
    %1854 = vmatpush1.msra.mxu0 0.0
    %1855 = vmatprep.subr.mxu0 0.0
    %1856 = vmatpush1.msra.mxu0 0.0
    %1857 = vmatprep.subr.mxu0 0.0
    %1858 = vmatpush1.msra.mxu0 0.0
    %1859 = vmatprep.subr.mxu0 0.0
    %1860 = vmatpush1.msra.mxu0 0.0
    %1861 = vmatprep.subr.mxu0 0.0
    %1862 = vmatpush1.msra.mxu0 0.0
    %1863 = vmatprep.subr.mxu0 0.0
    %1864 = vmatpush1.msra.mxu0 0.0
    %1865 = vmatprep.subr.mxu0 0.0
    %1866 = vmatpush1.msra.mxu0 0.0
    %1867 = vmatprep.subr.mxu0 0.0
    %1868 = vmatpush1.msra.mxu0 0.0
    %1869 = vmatprep.subr.mxu0 0.0
    %1870 = vmatpush1.msra.mxu0 0.0
    %1871 = vmatprep.mubr.f32.mxu0 0.0
    %1872 = vmatmul.mubr.f32.gmra.mrb[0].mxu0 %v1802
    %v1873 = vpop.f32.mrb[0].mxu0
    %v1874 = vadd.f32 0.0, %v1873
    %v1875 = vpop.f32.mrb[0].mxu0
    %1876 = vmatprep.mubr.f32.mxu0 0.0
    %1877 = vmatmul.mubr.f32.gmra.mrb[0].mxu0 %v1805
    %v1878 = vpop.f32.mrb[0].mxu0
    %v1879 = vadd.f32 0.0, %v1878
    %v1880 = vpop.f32.mrb[0].mxu0
    %1881 = vdwg.mxu0
    %1884 = vrot.lane.b32.xlu0 %v1874, 8
    %v1885 = vpop.permute.xlu0 %1884
    %1886 = vrot.lane.b32.xlu0 %v1879, 8
    %v1887 = vpop.permute.xlu0 %1886
    %1890 = vst.msk [vmem:[#allocation2] sm:$0xff] %vm580, %v1885
    %1891 = vst.msk [vmem:[#allocation2 + $0x8] sm:$0xff] %vm580, %v1887
    %1892 = vrot.lane.b32.xlu0 %v1474, 112
    %v1893 = vpop.permute.xlu0 %1892
    %1894 = vrot.lane.b32.xlu0 %v1479, 112
    %v1895 = vpop.permute.xlu0 %1894
    %1896 = vrot.lane.b32.xlu0 %v1474, 80
    %v1897 = vpop.permute.xlu0 %1896
    %1898 = vrot.lane.b32.xlu0 %v1479, 80
    %v1899 = vpop.permute.xlu0 %1898
    %v1900 = vsel %vm176, %v1893, 0
    %v1902 = vsel %vm176, %v1895, 0
    %v1904 = vsel %vm176, %v1897, 0
    %v1906 = vsel %vm176, %v1899, 0
    %1908 = vmatprep.subr.mxu0 0.0
    %1909 = vmatpush1.xpose.msra.mxu0 %v1904
    %1910 = vmatprep.subr.mxu0 0.0
    %1911 = vmatpush1.xpose.msra.mxu0 %v1906
    %1912 = vmatprep.subr.mxu0 0.0
    %1913 = vmatpush1.xpose.msra.mxu0 0.0
    %1914 = vmatprep.subr.mxu0 0.0
    %1915 = vmatpush1.xpose.msra.mxu0 0.0
    %1916 = vmatprep.subr.mxu0 0.0
    %1917 = vmatpush1.xpose.msra.mxu0 0.0
    %1918 = vmatprep.subr.mxu0 0.0
    %1919 = vmatpush1.xpose.msra.mxu0 0.0
    %1920 = vmatprep.subr.mxu0 0.0
    %1921 = vmatpush1.xpose.msra.mxu0 0.0
    %1922 = vmatprep.subr.mxu0 0.0
    %1923 = vmatpush1.xpose.msra.mxu0 0.0
    %1924 = vmatprep.subr.mxu0 0.0
    %1925 = vmatpush1.xpose.msra.mxu0 0.0
    %1926 = vmatprep.subr.mxu0 0.0
    %1927 = vmatpush1.xpose.msra.mxu0 0.0
    %1928 = vmatprep.subr.mxu0 0.0
    %1929 = vmatpush1.xpose.msra.mxu0 0.0
    %1930 = vmatprep.subr.mxu0 0.0
    %1931 = vmatpush1.xpose.msra.mxu0 0.0
    %1932 = vmatprep.subr.mxu0 0.0
    %1933 = vmatpush1.xpose.msra.mxu0 0.0
    %1934 = vmatprep.subr.mxu0 0.0
    %1935 = vmatpush1.xpose.msra.mxu0 0.0
    %1936 = vmatprep.subr.mxu0 0.0
    %1937 = vmatpush1.xpose.msra.mxu0 0.0
    %1938 = vmatprep.subr.mxu0 0.0
    %1939 = vmatpush1.xpose.msra.mxu0 0.0
    %1940 = vmatprep.subr.mxu0 0.0
    %1941 = vmatpush1.xpose.msra.mxu0 0.0
    %1942 = vmatprep.subr.mxu0 0.0
    %1943 = vmatpush1.xpose.msra.mxu0 0.0
    %1944 = vmatprep.subr.mxu0 0.0
    %1945 = vmatpush1.xpose.msra.mxu0 0.0
    %1946 = vmatprep.subr.mxu0 0.0
    %1947 = vmatpush1.xpose.msra.mxu0 0.0
    %1948 = vmatprep.subr.mxu0 0.0
    %1949 = vmatpush1.xpose.msra.mxu0 0.0
    %1950 = vmatprep.subr.mxu0 0.0
    %1951 = vmatpush1.xpose.msra.mxu0 0.0
    %1952 = vmatprep.subr.mxu0 0.0
    %1953 = vmatpush1.xpose.msra.mxu0 0.0
    %1954 = vmatprep.subr.mxu0 0.0
    %1955 = vmatpush1.xpose.msra.mxu0 0.0
    %1956 = vmatprep.subr.mxu0 0.0
    %1957 = vmatpush1.xpose.msra.mxu0 0.0
    %1958 = vmatprep.subr.mxu0 0.0
    %1959 = vmatpush1.xpose.msra.mxu0 0.0
    %1960 = vmatprep.subr.mxu0 0.0
    %1961 = vmatpush1.xpose.msra.mxu0 0.0
    %1962 = vmatprep.subr.mxu0 0.0
    %1963 = vmatpush1.xpose.msra.mxu0 0.0
    %1964 = vmatprep.subr.mxu0 0.0
    %1965 = vmatpush1.xpose.msra.mxu0 0.0
    %1966 = vmatprep.subr.mxu0 0.0
    %1967 = vmatpush1.xpose.msra.mxu0 0.0
    %1968 = vmatprep.subr.mxu0 0.0
    %1969 = vmatpush1.xpose.msra.mxu0 0.0
    %1970 = vmatprep.subr.mxu0 0.0
    %1971 = vmatpush1.xpose.msra.mxu0 0.0
    %1972 = vmatprep.mubr.f32.mxu0 0.0
    %1973 = vmatmul.mubr.f32.gmra.mrb[0].mxu0 %v1900
    %v1974 = vpop.f32.mrb[0].mxu0
    %v1975 = vadd.f32 %v32, %v1974
    %v1976 = vpop.f32.mrb[0].mxu0
    %1977 = vmatprep.mubr.f32.mxu0 0.0
    %1978 = vmatmul.mubr.f32.gmra.mrb[0].mxu0 %v1902
    %v1979 = vpop.f32.mrb[0].mxu0
    %v1980 = vadd.f32 %v33, %v1979
    %v1981 = vpop.f32.mrb[0].mxu0
    %1982 = vdwg.mxu0
    %v1983 = vsel %vm260, %v1975, -inf
    %1984 = vmax.xlane.f32.xlu0 %v1983
    %v1985 = vpop.xlane.xlu0 %1984
    %v1986 = vsel %vm260, %v1980, -inf
    %1987 = vmax.xlane.f32.xlu0 %v1986
    %v1988 = vpop.xlane.xlu0 %1987
    %v1989 = vsub.f32 %v1975, %v1985
    %v1990 = vsub.f32 %v1980, %v1988
    %v1991 = vmul.f32 %v1989, 1.442695
    %v1992 = vpow.pop %v1991
    %v1993 = vmul.f32 %v1990, 1.442695
    %v1994 = vpow.pop %v1993
    %v1995 = vsel %vm260, %v1992, 0.0
    %1996 = vadd.xlane.f32.xlu0 %v1995
    %v1997 = vpop.xlane.xlu0 %1996
    %v1998 = vsel %vm260, %v1994, 0.0
    %1999 = vadd.xlane.f32.xlu0 %v1998
    %v2000 = vpop.xlane.xlu0 %1999
    %v2001 = vrcp.pop %v1997
    %v2002 = vmul.f32 %v1992, %v2001
    %v2003 = vrcp.pop %v2000
    %v2004 = vmul.f32 %v1994, %v2003
    %2005 = vrot.lane.b32.xlu0 %v1474, 48
    %v2006 = vpop.permute.xlu0 %2005
    %2007 = vrot.lane.b32.xlu0 %v1479, 48
    %v2008 = vpop.permute.xlu0 %2007
    %v2012 = vsel %vm260, %v2002, 0
    %v2015 = vsel %vm260, %v2004, 0
    %2017 = vmatprep.subr.mxu0 0.0
    %2018 = vmatpush1.msra.mxu0 %v2006
    %2019 = vmatprep.subr.mxu0 0.0
    %2020 = vmatpush1.msra.mxu0 %v2008
    %2021 = vmatprep.subr.mxu0 0.0
    %2022 = vmatpush1.msra.mxu0 0.0
    %2023 = vmatprep.subr.mxu0 0.0
    %2024 = vmatpush1.msra.mxu0 0.0
    %2025 = vmatprep.subr.mxu0 0.0
    %2026 = vmatpush1.msra.mxu0 0.0
    %2027 = vmatprep.subr.mxu0 0.0
    %2028 = vmatpush1.msra.mxu0 0.0
    %2029 = vmatprep.subr.mxu0 0.0
    %2030 = vmatpush1.msra.mxu0 0.0
    %2031 = vmatprep.subr.mxu0 0.0
    %2032 = vmatpush1.msra.mxu0 0.0
    %2033 = vmatprep.subr.mxu0 0.0
    %2034 = vmatpush1.msra.mxu0 0.0
    %2035 = vmatprep.subr.mxu0 0.0
    %2036 = vmatpush1.msra.mxu0 0.0
    %2037 = vmatprep.subr.mxu0 0.0
    %2038 = vmatpush1.msra.mxu0 0.0
    %2039 = vmatprep.subr.mxu0 0.0
    %2040 = vmatpush1.msra.mxu0 0.0
    %2041 = vmatprep.subr.mxu0 0.0
    %2042 = vmatpush1.msra.mxu0 0.0
    %2043 = vmatprep.subr.mxu0 0.0
    %2044 = vmatpush1.msra.mxu0 0.0
    %2045 = vmatprep.subr.mxu0 0.0
    %2046 = vmatpush1.msra.mxu0 0.0
    %2047 = vmatprep.subr.mxu0 0.0
    %2048 = vmatpush1.msra.mxu0 0.0
    %2049 = vmatprep.subr.mxu0 0.0
    %2050 = vmatpush1.msra.mxu0 0.0
    %2051 = vmatprep.subr.mxu0 0.0
    %2052 = vmatpush1.msra.mxu0 0.0
    %2053 = vmatprep.subr.mxu0 0.0
    %2054 = vmatpush1.msra.mxu0 0.0
    %2055 = vmatprep.subr.mxu0 0.0
    %2056 = vmatpush1.msra.mxu0 0.0
    %2057 = vmatprep.subr.mxu0 0.0
    %2058 = vmatpush1.msra.mxu0 0.0
    %2059 = vmatprep.subr.mxu0 0.0
    %2060 = vmatpush1.msra.mxu0 0.0
    %2061 = vmatprep.subr.mxu0 0.0
    %2062 = vmatpush1.msra.mxu0 0.0
    %2063 = vmatprep.subr.mxu0 0.0
    %2064 = vmatpush1.msra.mxu0 0.0
    %2065 = vmatprep.subr.mxu0 0.0
    %2066 = vmatpush1.msra.mxu0 0.0
    %2067 = vmatprep.subr.mxu0 0.0
    %2068 = vmatpush1.msra.mxu0 0.0
    %2069 = vmatprep.subr.mxu0 0.0
    %2070 = vmatpush1.msra.mxu0 0.0
    %2071 = vmatprep.subr.mxu0 0.0
    %2072 = vmatpush1.msra.mxu0 0.0
    %2073 = vmatprep.subr.mxu0 0.0
    %2074 = vmatpush1.msra.mxu0 0.0
    %2075 = vmatprep.subr.mxu0 0.0
    %2076 = vmatpush1.msra.mxu0 0.0
    %2077 = vmatprep.subr.mxu0 0.0
    %2078 = vmatpush1.msra.mxu0 0.0
    %2079 = vmatprep.subr.mxu0 0.0
    %2080 = vmatpush1.msra.mxu0 0.0
    %2081 = vmatprep.mubr.f32.mxu0 0.0
    %2082 = vmatmul.mubr.f32.gmra.mrb[0].mxu0 %v2012
    %v2083 = vpop.f32.mrb[0].mxu0
    %v2084 = vadd.f32 0.0, %v2083
    %v2085 = vpop.f32.mrb[0].mxu0
    %2086 = vmatprep.mubr.f32.mxu0 0.0
    %2087 = vmatmul.mubr.f32.gmra.mrb[0].mxu0 %v2015
    %v2088 = vpop.f32.mrb[0].mxu0
    %v2089 = vadd.f32 0.0, %v2088
    %v2090 = vpop.f32.mrb[0].mxu0
    %2091 = vdwg.mxu0
    %2094 = vrot.lane.b32.xlu0 %v2084, 16
    %v2095 = vpop.permute.xlu0 %2094
    %2096 = vrot.lane.b32.xlu0 %v2089, 16
    %v2097 = vpop.permute.xlu0 %2096
    %2100 = vst.msk [vmem:[#allocation2] sm:$0xff] %vm791, %v2095
    %2101 = vst.msk [vmem:[#allocation2 + $0x8] sm:$0xff] %vm791, %v2097
    %2102 = vrot.lane.b32.xlu0 %v1474, 104
    %v2103 = vpop.permute.xlu0 %2102
    %2104 = vrot.lane.b32.xlu0 %v1479, 104
    %v2105 = vpop.permute.xlu0 %2104
    %2106 = vrot.lane.b32.xlu0 %v1474, 72
    %v2107 = vpop.permute.xlu0 %2106
    %2108 = vrot.lane.b32.xlu0 %v1479, 72
    %v2109 = vpop.permute.xlu0 %2108
    %v2110 = vsel %vm176, %v2103, 0
    %v2112 = vsel %vm176, %v2105, 0
    %v2114 = vsel %vm176, %v2107, 0
    %v2116 = vsel %vm176, %v2109, 0
    %2118 = vmatprep.subr.mxu0 0.0
    %2119 = vmatpush1.xpose.msra.mxu0 %v2114
    %2120 = vmatprep.subr.mxu0 0.0
    %2121 = vmatpush1.xpose.msra.mxu0 %v2116
    %2122 = vmatprep.subr.mxu0 0.0
    %2123 = vmatpush1.xpose.msra.mxu0 0.0
    %2124 = vmatprep.subr.mxu0 0.0
    %2125 = vmatpush1.xpose.msra.mxu0 0.0
    %2126 = vmatprep.subr.mxu0 0.0
    %2127 = vmatpush1.xpose.msra.mxu0 0.0
    %2128 = vmatprep.subr.mxu0 0.0
    %2129 = vmatpush1.xpose.msra.mxu0 0.0
    %2130 = vmatprep.subr.mxu0 0.0
    %2131 = vmatpush1.xpose.msra.mxu0 0.0
    %2132 = vmatprep.subr.mxu0 0.0
    %2133 = vmatpush1.xpose.msra.mxu0 0.0
    %2134 = vmatprep.subr.mxu0 0.0
    %2135 = vmatpush1.xpose.msra.mxu0 0.0
    %2136 = vmatprep.subr.mxu0 0.0
    %2137 = vmatpush1.xpose.msra.mxu0 0.0
    %2138 = vmatprep.subr.mxu0 0.0
    %2139 = vmatpush1.xpose.msra.mxu0 0.0
    %2140 = vmatprep.subr.mxu0 0.0
    %2141 = vmatpush1.xpose.msra.mxu0 0.0
    %2142 = vmatprep.subr.mxu0 0.0
    %2143 = vmatpush1.xpose.msra.mxu0 0.0
    %2144 = vmatprep.subr.mxu0 0.0
    %2145 = vmatpush1.xpose.msra.mxu0 0.0
    %2146 = vmatprep.subr.mxu0 0.0
    %2147 = vmatpush1.xpose.msra.mxu0 0.0
    %2148 = vmatprep.subr.mxu0 0.0
    %2149 = vmatpush1.xpose.msra.mxu0 0.0
    %2150 = vmatprep.subr.mxu0 0.0
    %2151 = vmatpush1.xpose.msra.mxu0 0.0
    %2152 = vmatprep.subr.mxu0 0.0
    %2153 = vmatpush1.xpose.msra.mxu0 0.0
    %2154 = vmatprep.subr.mxu0 0.0
    %2155 = vmatpush1.xpose.msra.mxu0 0.0
    %2156 = vmatprep.subr.mxu0 0.0
    %2157 = vmatpush1.xpose.msra.mxu0 0.0
    %2158 = vmatprep.subr.mxu0 0.0
    %2159 = vmatpush1.xpose.msra.mxu0 0.0
    %2160 = vmatprep.subr.mxu0 0.0
    %2161 = vmatpush1.xpose.msra.mxu0 0.0
    %2162 = vmatprep.subr.mxu0 0.0
    %2163 = vmatpush1.xpose.msra.mxu0 0.0
    %2164 = vmatprep.subr.mxu0 0.0
    %2165 = vmatpush1.xpose.msra.mxu0 0.0
    %2166 = vmatprep.subr.mxu0 0.0
    %2167 = vmatpush1.xpose.msra.mxu0 0.0
    %2168 = vmatprep.subr.mxu0 0.0
    %2169 = vmatpush1.xpose.msra.mxu0 0.0
    %2170 = vmatprep.subr.mxu0 0.0
    %2171 = vmatpush1.xpose.msra.mxu0 0.0
    %2172 = vmatprep.subr.mxu0 0.0
    %2173 = vmatpush1.xpose.msra.mxu0 0.0
    %2174 = vmatprep.subr.mxu0 0.0
    %2175 = vmatpush1.xpose.msra.mxu0 0.0
    %2176 = vmatprep.subr.mxu0 0.0
    %2177 = vmatpush1.xpose.msra.mxu0 0.0
    %2178 = vmatprep.subr.mxu0 0.0
    %2179 = vmatpush1.xpose.msra.mxu0 0.0
    %2180 = vmatprep.subr.mxu0 0.0
    %2181 = vmatpush1.xpose.msra.mxu0 0.0
    %2182 = vmatprep.mubr.f32.mxu0 0.0
    %2183 = vmatmul.mubr.f32.gmra.mrb[0].mxu0 %v2110
    %v2184 = vpop.f32.mrb[0].mxu0
    %v2185 = vadd.f32 %v32, %v2184
    %v2186 = vpop.f32.mrb[0].mxu0
    %2187 = vmatprep.mubr.f32.mxu0 0.0
    %2188 = vmatmul.mubr.f32.gmra.mrb[0].mxu0 %v2112
    %v2189 = vpop.f32.mrb[0].mxu0
    %v2190 = vadd.f32 %v33, %v2189
    %v2191 = vpop.f32.mrb[0].mxu0
    %2192 = vdwg.mxu0
    %v2193 = vsel %vm260, %v2185, -inf
    %2194 = vmax.xlane.f32.xlu0 %v2193
    %v2195 = vpop.xlane.xlu0 %2194
    %v2196 = vsel %vm260, %v2190, -inf
    %2197 = vmax.xlane.f32.xlu0 %v2196
    %v2198 = vpop.xlane.xlu0 %2197
    %v2199 = vsub.f32 %v2185, %v2195
    %v2200 = vsub.f32 %v2190, %v2198
    %v2201 = vmul.f32 %v2199, 1.442695
    %v2202 = vpow.pop %v2201
    %v2203 = vmul.f32 %v2200, 1.442695
    %v2204 = vpow.pop %v2203
    %v2205 = vsel %vm260, %v2202, 0.0
    %2206 = vadd.xlane.f32.xlu0 %v2205
    %v2207 = vpop.xlane.xlu0 %2206
    %v2208 = vsel %vm260, %v2204, 0.0
    %2209 = vadd.xlane.f32.xlu0 %v2208
    %v2210 = vpop.xlane.xlu0 %2209
    %v2211 = vrcp.pop %v2207
    %v2212 = vmul.f32 %v2202, %v2211
    %v2213 = vrcp.pop %v2210
    %v2214 = vmul.f32 %v2204, %v2213
    %2215 = vrot.lane.b32.xlu0 %v1474, 40
    %v2216 = vpop.permute.xlu0 %2215
    %2217 = vrot.lane.b32.xlu0 %v1479, 40
    %v2218 = vpop.permute.xlu0 %2217
    %v2222 = vsel %vm260, %v2212, 0
    %v2225 = vsel %vm260, %v2214, 0
    %2227 = vmatprep.subr.mxu0 0.0
    %2228 = vmatpush1.msra.mxu0 %v2216
    %2229 = vmatprep.subr.mxu0 0.0
    %2230 = vmatpush1.msra.mxu0 %v2218
    %2231 = vmatprep.subr.mxu0 0.0
    %2232 = vmatpush1.msra.mxu0 0.0
    %2233 = vmatprep.subr.mxu0 0.0
    %2234 = vmatpush1.msra.mxu0 0.0
    %2235 = vmatprep.subr.mxu0 0.0
    %2236 = vmatpush1.msra.mxu0 0.0
    %2237 = vmatprep.subr.mxu0 0.0
    %2238 = vmatpush1.msra.mxu0 0.0
    %2239 = vmatprep.subr.mxu0 0.0
    %2240 = vmatpush1.msra.mxu0 0.0
    %2241 = vmatprep.subr.mxu0 0.0
    %2242 = vmatpush1.msra.mxu0 0.0
    %2243 = vmatprep.subr.mxu0 0.0
    %2244 = vmatpush1.msra.mxu0 0.0
    %2245 = vmatprep.subr.mxu0 0.0
    %2246 = vmatpush1.msra.mxu0 0.0
    %2247 = vmatprep.subr.mxu0 0.0
    %2248 = vmatpush1.msra.mxu0 0.0
    %2249 = vmatprep.subr.mxu0 0.0
    %2250 = vmatpush1.msra.mxu0 0.0
    %2251 = vmatprep.subr.mxu0 0.0
    %2252 = vmatpush1.msra.mxu0 0.0
    %2253 = vmatprep.subr.mxu0 0.0
    %2254 = vmatpush1.msra.mxu0 0.0
    %2255 = vmatprep.subr.mxu0 0.0
    %2256 = vmatpush1.msra.mxu0 0.0
    %2257 = vmatprep.subr.mxu0 0.0
    %2258 = vmatpush1.msra.mxu0 0.0
    %2259 = vmatprep.subr.mxu0 0.0
    %2260 = vmatpush1.msra.mxu0 0.0
    %2261 = vmatprep.subr.mxu0 0.0
    %2262 = vmatpush1.msra.mxu0 0.0
    %2263 = vmatprep.subr.mxu0 0.0
    %2264 = vmatpush1.msra.mxu0 0.0
    %2265 = vmatprep.subr.mxu0 0.0
    %2266 = vmatpush1.msra.mxu0 0.0
    %2267 = vmatprep.subr.mxu0 0.0
    %2268 = vmatpush1.msra.mxu0 0.0
    %2269 = vmatprep.subr.mxu0 0.0
    %2270 = vmatpush1.msra.mxu0 0.0
    %2271 = vmatprep.subr.mxu0 0.0
    %2272 = vmatpush1.msra.mxu0 0.0
    %2273 = vmatprep.subr.mxu0 0.0
    %2274 = vmatpush1.msra.mxu0 0.0
    %2275 = vmatprep.subr.mxu0 0.0
    %2276 = vmatpush1.msra.mxu0 0.0
    %2277 = vmatprep.subr.mxu0 0.0
    %2278 = vmatpush1.msra.mxu0 0.0
    %2279 = vmatprep.subr.mxu0 0.0
    %2280 = vmatpush1.msra.mxu0 0.0
    %2281 = vmatprep.subr.mxu0 0.0
    %2282 = vmatpush1.msra.mxu0 0.0
    %2283 = vmatprep.subr.mxu0 0.0
    %2284 = vmatpush1.msra.mxu0 0.0
    %2285 = vmatprep.subr.mxu0 0.0
    %2286 = vmatpush1.msra.mxu0 0.0
    %2287 = vmatprep.subr.mxu0 0.0
    %2288 = vmatpush1.msra.mxu0 0.0
    %2289 = vmatprep.subr.mxu0 0.0
    %2290 = vmatpush1.msra.mxu0 0.0
    %2291 = vmatprep.mubr.f32.mxu0 0.0
    %2292 = vmatmul.mubr.f32.gmra.mrb[0].mxu0 %v2222
    %v2293 = vpop.f32.mrb[0].mxu0
    %v2294 = vadd.f32 0.0, %v2293
    %v2295 = vpop.f32.mrb[0].mxu0
    %2296 = vmatprep.mubr.f32.mxu0 0.0
    %2297 = vmatmul.mubr.f32.gmra.mrb[0].mxu0 %v2225
    %v2298 = vpop.f32.mrb[0].mxu0
    %v2299 = vadd.f32 0.0, %v2298
    %v2300 = vpop.f32.mrb[0].mxu0
    %2301 = vdwg.mxu0
    %2304 = vrot.lane.b32.xlu0 %v2294, 24
    %v2305 = vpop.permute.xlu0 %2304
    %2306 = vrot.lane.b32.xlu0 %v2299, 24
    %v2307 = vpop.permute.xlu0 %2306
    %2310 = vst.msk [vmem:[#allocation2] sm:$0xff] %vm1002, %v2305
    %2311 = vst.msk [vmem:[#allocation2 + $0x8] sm:$0xff] %vm1002, %v2307
    %v2312 = vld [vmem:[#allocation2] sm:$0xff]
    %v2313 = vld [vmem:[#allocation2 + $0x8] sm:$0xff]
    %v2314 = vld [vmem:[%s1347 + $0xc0] sm:$0xff]
    %v2315 = vld [vmem:[%s1347 + $0xc8] sm:$0xff]
    %v2316 = vld [vmem:[%s1347 + $0xd0] sm:$0xff]
    %v2317 = vld [vmem:[%s1347 + $0xd8] sm:$0xff]
    %v2318 = vld [vmem:[%s1347 + $0xe1] sm:$0x1]
    %v2319 = vlaneseq
    %v2320 = vshrl.u32 %v2319, 7
    %v2321 = vsub.s32 0, %v2320
    %v2322 = vrot.slane %v2318, %v2321
    %v2324 = vsel %vm36, %v2312, 0
    %v2327 = vsel %vm36, %v2313, 0
    %2329 = vmatprep.subr.mxu0 0.0
    %2330 = vmatpush1.msra.mxu0 %v2314
    %2331 = vmatprep.subr.mxu0 0.0
    %2332 = vmatpush1.msra.mxu0 %v2315
    %2333 = vmatprep.subr.mxu0 0.0
    %2334 = vmatpush1.msra.mxu0 %v2316
    %2335 = vmatprep.subr.mxu0 0.0
    %2336 = vmatpush1.msra.mxu0 %v2317
    %2337 = vmatprep.subr.mxu0 0.0
    %2338 = vmatpush1.msra.mxu0 0.0
    %2339 = vmatprep.subr.mxu0 0.0
    %2340 = vmatpush1.msra.mxu0 0.0
    %2341 = vmatprep.subr.mxu0 0.0
    %2342 = vmatpush1.msra.mxu0 0.0
    %2343 = vmatprep.subr.mxu0 0.0
    %2344 = vmatpush1.msra.mxu0 0.0
    %2345 = vmatprep.subr.mxu0 0.0
    %2346 = vmatpush1.msra.mxu0 0.0
    %2347 = vmatprep.subr.mxu0 0.0
    %2348 = vmatpush1.msra.mxu0 0.0
    %2349 = vmatprep.subr.mxu0 0.0
    %2350 = vmatpush1.msra.mxu0 0.0
    %2351 = vmatprep.subr.mxu0 0.0
    %2352 = vmatpush1.msra.mxu0 0.0
    %2353 = vmatprep.subr.mxu0 0.0
    %2354 = vmatpush1.msra.mxu0 0.0
    %2355 = vmatprep.subr.mxu0 0.0
    %2356 = vmatpush1.msra.mxu0 0.0
    %2357 = vmatprep.subr.mxu0 0.0
    %2358 = vmatpush1.msra.mxu0 0.0
    %2359 = vmatprep.subr.mxu0 0.0
    %2360 = vmatpush1.msra.mxu0 0.0
    %2361 = vmatprep.subr.mxu0 0.0
    %2362 = vmatpush1.msra.mxu0 0.0
    %2363 = vmatprep.subr.mxu0 0.0
    %2364 = vmatpush1.msra.mxu0 0.0
    %2365 = vmatprep.subr.mxu0 0.0
    %2366 = vmatpush1.msra.mxu0 0.0
    %2367 = vmatprep.subr.mxu0 0.0
    %2368 = vmatpush1.msra.mxu0 0.0
    %2369 = vmatprep.subr.mxu0 0.0
    %2370 = vmatpush1.msra.mxu0 0.0
    %2371 = vmatprep.subr.mxu0 0.0
    %2372 = vmatpush1.msra.mxu0 0.0
    %2373 = vmatprep.subr.mxu0 0.0
    %2374 = vmatpush1.msra.mxu0 0.0
    %2375 = vmatprep.subr.mxu0 0.0
    %2376 = vmatpush1.msra.mxu0 0.0
    %2377 = vmatprep.subr.mxu0 0.0
    %2378 = vmatpush1.msra.mxu0 0.0
    %2379 = vmatprep.subr.mxu0 0.0
    %2380 = vmatpush1.msra.mxu0 0.0
    %2381 = vmatprep.subr.mxu0 0.0
    %2382 = vmatpush1.msra.mxu0 0.0
    %2383 = vmatprep.subr.mxu0 0.0
    %2384 = vmatpush1.msra.mxu0 0.0
    %2385 = vmatprep.subr.mxu0 0.0
    %2386 = vmatpush1.msra.mxu0 0.0
    %2387 = vmatprep.subr.mxu0 0.0
    %2388 = vmatpush1.msra.mxu0 0.0
    %2389 = vmatprep.subr.mxu0 0.0
    %2390 = vmatpush1.msra.mxu0 0.0
    %2391 = vmatprep.subr.mxu0 0.0
    %2392 = vmatpush1.msra.mxu0 0.0
    %2393 = vmatprep.mubr.f32.mxu0 0.0
    %2394 = vmatmul.mubr.f32.gmra.mrb[0].mxu0 %v2324
    %v2395 = vpop.f32.mrb[0].mxu0
    %v2396 = vadd.f32 %v2322, %v2395
    %v2397 = vpop.f32.mrb[0].mxu0
    %2398 = vmatprep.mubr.f32.mxu0 0.0
    %2399 = vmatmul.mubr.f32.gmra.mrb[0].mxu0 %v2327
    %v2400 = vpop.f32.mrb[0].mxu0
    %v2401 = vadd.f32 %v2322, %v2400
    %v2402 = vpop.f32.mrb[0].mxu0
    %2403 = vdwg.mxu0
    %v2404 = vadd.f32 %v1345, %v2396
    %v2405 = vadd.f32 %v1346, %v2401
    %v2406 = vld [vmem:[%s1347 + $0xe6] sm:$0x1]
    %v2407 = vld [vmem:[%s1347 + $0xe7] sm:$0x1]
    %v2408 = vsel %vm36, %v2404, 0.0
    %2409 = vadd.xlane.f32.xlu0 %v2408
    %v2410 = vpop.xlane.xlu0 %2409
    %v2411 = vsel %vm36, %v2405, 0.0
    %2412 = vadd.xlane.f32.xlu0 %v2411
    %v2413 = vpop.xlane.xlu0 %2412
    %v2414 = vmul.f32 %v2410, %v43
    %v2415 = vmul.f32 %v2413, %v43
    %v2416 = vmul.f32 %v2404, %v2404
    %v2417 = vmul.f32 %v2405, %v2405
    %v2418 = vsel %vm36, %v2416, 0.0
    %2419 = vadd.xlane.f32.xlu0 %v2418
    %v2420 = vpop.xlane.xlu0 %2419
    %v2421 = vsel %vm36, %v2417, 0.0
    %2422 = vadd.xlane.f32.xlu0 %v2421
    %v2423 = vpop.xlane.xlu0 %2422
    %v2424 = vmul.f32 %v2420, %v43
    %v2425 = vmul.f32 %v2423, %v43
    %v2426 = vmul.f32 %v2414, %v2414
    %v2427 = vmul.f32 %v2415, %v2415
    %v2428 = vsub.f32 %v2424, %v2426
    %v2429 = vsub.f32 %v2425, %v2427
    %v2430 = vsub.f32 %v2404, %v2414
    %v2431 = vsub.f32 %v2405, %v2415
    %v2432 = vadd.f32 %v2428, 1e-05
    %v2433 = vadd.f32 %v2429, 1e-05
    %v2434 = vrsqrt.pop %v2432
    %v2435 = vrsqrt.pop %v2433
    %v2436 = vmul.f32 %v2430, %v2434
    %v2437 = vmul.f32 %v2431, %v2435
    %v2438 = vlaneseq
    %v2439 = vshrl.u32 %v2438, 7
    %v2440 = vsub.s32 0, %v2439
    %v2441 = vrot.slane %v2406, %v2440
    %v2442 = vmul.f32 %v2436, %v2441
    %v2443 = vmul.f32 %v2437, %v2441
    %v2444 = vlaneseq
    %v2445 = vshrl.u32 %v2444, 7
    %v2446 = vsub.s32 0, %v2445
    %v2447 = vrot.slane %v2407, %v2446
    %v2448 = vadd.f32 %v2442, %v2447
    %v2449 = vadd.f32 %v2443, %v2447
    %v2450 = vld [vmem:[%s1347 + $0x20] sm:$0xff]
    %v2451 = vld [vmem:[%s1347 + $0x28] sm:$0xff]
    %v2452 = vld [vmem:[%s1347 + $0x30] sm:$0xff]
    %v2453 = vld [vmem:[%s1347 + $0x38] sm:$0xff]
    %v2454 = vld [vmem:[%s1347 + $0xe2] sm:$0x1]
    %v2455 = vlaneseq
    %v2456 = vshrl.u32 %v2455, 7
    %v2457 = vsub.s32 0, %v2456
    %v2458 = vrot.slane %v2454, %v2457
    %v2460 = vsel %vm36, %v2448, 0
    %v2463 = vsel %vm36, %v2449, 0
    %2465 = vmatprep.subr.mxu0 0.0
    %2466 = vmatpush1.msra.mxu0 %v2450
    %2467 = vmatprep.subr.mxu0 0.0
    %2468 = vmatpush1.msra.mxu0 %v2451
    %2469 = vmatprep.subr.mxu0 0.0
    %2470 = vmatpush1.msra.mxu0 %v2452
    %2471 = vmatprep.subr.mxu0 0.0
    %2472 = vmatpush1.msra.mxu0 %v2453
    %2473 = vmatprep.subr.mxu0 0.0
    %2474 = vmatpush1.msra.mxu0 0.0
    %2475 = vmatprep.subr.mxu0 0.0
    %2476 = vmatpush1.msra.mxu0 0.0
    %2477 = vmatprep.subr.mxu0 0.0
    %2478 = vmatpush1.msra.mxu0 0.0
    %2479 = vmatprep.subr.mxu0 0.0
    %2480 = vmatpush1.msra.mxu0 0.0
    %2481 = vmatprep.subr.mxu0 0.0
    %2482 = vmatpush1.msra.mxu0 0.0
    %2483 = vmatprep.subr.mxu0 0.0
    %2484 = vmatpush1.msra.mxu0 0.0
    %2485 = vmatprep.subr.mxu0 0.0
    %2486 = vmatpush1.msra.mxu0 0.0
    %2487 = vmatprep.subr.mxu0 0.0
    %2488 = vmatpush1.msra.mxu0 0.0
    %2489 = vmatprep.subr.mxu0 0.0
    %2490 = vmatpush1.msra.mxu0 0.0
    %2491 = vmatprep.subr.mxu0 0.0
    %2492 = vmatpush1.msra.mxu0 0.0
    %2493 = vmatprep.subr.mxu0 0.0
    %2494 = vmatpush1.msra.mxu0 0.0
    %2495 = vmatprep.subr.mxu0 0.0
    %2496 = vmatpush1.msra.mxu0 0.0
    %2497 = vmatprep.subr.mxu0 0.0
    %2498 = vmatpush1.msra.mxu0 0.0
    %2499 = vmatprep.subr.mxu0 0.0
    %2500 = vmatpush1.msra.mxu0 0.0
    %2501 = vmatprep.subr.mxu0 0.0
    %2502 = vmatpush1.msra.mxu0 0.0
    %2503 = vmatprep.subr.mxu0 0.0
    %2504 = vmatpush1.msra.mxu0 0.0
    %2505 = vmatprep.subr.mxu0 0.0
    %2506 = vmatpush1.msra.mxu0 0.0
    %2507 = vmatprep.subr.mxu0 0.0
    %2508 = vmatpush1.msra.mxu0 0.0
    %2509 = vmatprep.subr.mxu0 0.0
    %2510 = vmatpush1.msra.mxu0 0.0
    %2511 = vmatprep.subr.mxu0 0.0
    %2512 = vmatpush1.msra.mxu0 0.0
    %2513 = vmatprep.subr.mxu0 0.0
    %2514 = vmatpush1.msra.mxu0 0.0
    %2515 = vmatprep.subr.mxu0 0.0
    %2516 = vmatpush1.msra.mxu0 0.0
    %2517 = vmatprep.subr.mxu0 0.0
    %2518 = vmatpush1.msra.mxu0 0.0
    %2519 = vmatprep.subr.mxu0 0.0
    %2520 = vmatpush1.msra.mxu0 0.0
    %2521 = vmatprep.subr.mxu0 0.0
    %2522 = vmatpush1.msra.mxu0 0.0
    %2523 = vmatprep.subr.mxu0 0.0
    %2524 = vmatpush1.msra.mxu0 0.0
    %2525 = vmatprep.subr.mxu0 0.0
    %2526 = vmatpush1.msra.mxu0 0.0
    %2527 = vmatprep.subr.mxu0 0.0
    %2528 = vmatpush1.msra.mxu0 0.0
    %2529 = vmatprep.mubr.f32.mxu0 0.0
    %2530 = vmatmul.mubr.f32.gmra.mrb[0].mxu0 %v2460
    %v2531 = vpop.f32.mrb[0].mxu0
    %v2532 = vadd.f32 %v2458, %v2531
    %v2533 = vpop.f32.mrb[0].mxu0
    %2534 = vmatprep.mubr.f32.mxu0 0.0
    %2535 = vmatmul.mubr.f32.gmra.mrb[0].mxu0 %v2463
    %v2536 = vpop.f32.mrb[0].mxu0
    %v2537 = vadd.f32 %v2458, %v2536
    %v2538 = vpop.f32.mrb[0].mxu0
    %2539 = vdwg.mxu0
    %v2540 = vmul.f32 %v2532, 1.702
    %v2541 = vmul.f32 %v2537, 1.702
    %v2542 = vxor.u32 %v2540, 2147483648
    %v2543 = vxor.u32 %v2541, 2147483648
    %v2544 = vmul.f32 %v2542, 1.442695
    %v2545 = vpow.pop %v2544
    %v2546 = vmul.f32 %v2543, 1.442695
    %v2547 = vpow.pop %v2546
    %v2548 = vadd.f32 %v2545, 1.0
    %v2549 = vadd.f32 %v2547, 1.0
    %v2550 = vrcp.pop %v2548
    %v2551 = vmul.f32 1.0, %v2550
    %v2552 = vrcp.pop %v2549
    %v2553 = vmul.f32 1.0, %v2552
    %v2554 = vmul.f32 %v2532, %v2551
    %v2555 = vmul.f32 %v2537, %v2553
    %v2556 = vld [vmem:[%s1347 + $0x40] sm:$0xff]
    %v2557 = vld [vmem:[%s1347 + $0x48] sm:$0xff]
    %v2558 = vld [vmem:[%s1347 + $0x50] sm:$0xff]
    %v2559 = vld [vmem:[%s1347 + $0x58] sm:$0xff]
    %v2560 = vld [vmem:[%s1347 + $0x60] sm:$0xff]
    %v2561 = vld [vmem:[%s1347 + $0x68] sm:$0xff]
    %v2562 = vld [vmem:[%s1347 + $0x70] sm:$0xff]
    %v2563 = vld [vmem:[%s1347 + $0x78] sm:$0xff]
    %v2564 = vld [vmem:[%s1347 + $0x80] sm:$0xff]
    %v2565 = vld [vmem:[%s1347 + $0x88] sm:$0xff]
    %v2566 = vld [vmem:[%s1347 + $0x90] sm:$0xff]
    %v2567 = vld [vmem:[%s1347 + $0x98] sm:$0xff]
    %v2568 = vld [vmem:[%s1347 + $0xa0] sm:$0xff]
    %v2569 = vld [vmem:[%s1347 + $0xa8] sm:$0xff]
    %v2570 = vld [vmem:[%s1347 + $0xb0] sm:$0xff]
    %v2571 = vld [vmem:[%s1347 + $0xb8] sm:$0xff]
    %v2572 = vld [vmem:[%s1347 + $0xe3] sm:$0x1]
    %v2573 = vlaneseq
    %v2574 = vshrl.u32 %v2573, 7
    %v2575 = vsub.s32 0, %v2574
    %v2576 = vrot.slane %v2572, %v2575
    %2577 = vmatprep.subr.mxu0 0.0
    %2578 = vmatpush1.msra.mxu0 %v2556
    %2579 = vmatprep.subr.mxu0 0.0
    %2580 = vmatpush1.msra.mxu0 %v2557
    %2581 = vmatprep.subr.mxu0 0.0
    %2582 = vmatpush1.msra.mxu0 %v2558
    %2583 = vmatprep.subr.mxu0 0.0
    %2584 = vmatpush1.msra.mxu0 %v2559
    %2585 = vmatprep.subr.mxu0 0.0
    %2586 = vmatpush1.msra.mxu0 %v2560
    %2587 = vmatprep.subr.mxu0 0.0
    %2588 = vmatpush1.msra.mxu0 %v2561
    %2589 = vmatprep.subr.mxu0 0.0
    %2590 = vmatpush1.msra.mxu0 %v2562
    %2591 = vmatprep.subr.mxu0 0.0
    %2592 = vmatpush1.msra.mxu0 %v2563
    %2593 = vmatprep.subr.mxu0 0.0
    %2594 = vmatpush1.msra.mxu0 %v2564
    %2595 = vmatprep.subr.mxu0 0.0
    %2596 = vmatpush1.msra.mxu0 %v2565
    %2597 = vmatprep.subr.mxu0 0.0
    %2598 = vmatpush1.msra.mxu0 %v2566
    %2599 = vmatprep.subr.mxu0 0.0
    %2600 = vmatpush1.msra.mxu0 %v2567
    %2601 = vmatprep.subr.mxu0 0.0
    %2602 = vmatpush1.msra.mxu0 %v2568
    %2603 = vmatprep.subr.mxu0 0.0
    %2604 = vmatpush1.msra.mxu0 %v2569
    %2605 = vmatprep.subr.mxu0 0.0
    %2606 = vmatpush1.msra.mxu0 %v2570
    %2607 = vmatprep.subr.mxu0 0.0
    %2608 = vmatpush1.msra.mxu0 %v2571
    %2609 = vmatprep.subr.mxu0 0.0
    %2610 = vmatpush1.msra.mxu0 0.0
    %2611 = vmatprep.subr.mxu0 0.0
    %2612 = vmatpush1.msra.mxu0 0.0
    %2613 = vmatprep.subr.mxu0 0.0
    %2614 = vmatpush1.msra.mxu0 0.0
    %2615 = vmatprep.subr.mxu0 0.0
    %2616 = vmatpush1.msra.mxu0 0.0
    %2617 = vmatprep.subr.mxu0 0.0
    %2618 = vmatpush1.msra.mxu0 0.0
    %2619 = vmatprep.subr.mxu0 0.0
    %2620 = vmatpush1.msra.mxu0 0.0
    %2621 = vmatprep.subr.mxu0 0.0
    %2622 = vmatpush1.msra.mxu0 0.0
    %2623 = vmatprep.subr.mxu0 0.0
    %2624 = vmatpush1.msra.mxu0 0.0
    %2625 = vmatprep.subr.mxu0 0.0
    %2626 = vmatpush1.msra.mxu0 0.0
    %2627 = vmatprep.subr.mxu0 0.0
    %2628 = vmatpush1.msra.mxu0 0.0
    %2629 = vmatprep.subr.mxu0 0.0
    %2630 = vmatpush1.msra.mxu0 0.0
    %2631 = vmatprep.subr.mxu0 0.0
    %2632 = vmatpush1.msra.mxu0 0.0
    %2633 = vmatprep.subr.mxu0 0.0
    %2634 = vmatpush1.msra.mxu0 0.0
    %2635 = vmatprep.subr.mxu0 0.0
    %2636 = vmatpush1.msra.mxu0 0.0
    %2637 = vmatprep.subr.mxu0 0.0
    %2638 = vmatpush1.msra.mxu0 0.0
    %2639 = vmatprep.subr.mxu0 0.0
    %2640 = vmatpush1.msra.mxu0 0.0
    %2641 = vmatprep.mubr.f32.mxu0 0.0
    %2642 = vmatmul.mubr.f32.gmra.mrb[0].mxu0 %v2554
    %v2643 = vpop.f32.mrb[0].mxu0
    %v2644 = vadd.f32 %v2576, %v2643
    %v2645 = vpop.f32.mrb[0].mxu0
    %2646 = vmatprep.mubr.f32.mxu0 0.0
    %2647 = vmatmul.mubr.f32.gmra.mrb[0].mxu0 %v2555
    %v2648 = vpop.f32.mrb[0].mxu0
    %v2649 = vadd.f32 %v2576, %v2648
    %v2650 = vpop.f32.mrb[0].mxu0
    %2651 = vdwg.mxu0
    %v2652 = vadd.f32 %v2404, %v2644
    %v2653 = vadd.f32 %v2405, %v2649
    %v2655 = vsel %vm260, %v31, 0
    %2657 = vmatprep.subr.mxu0 0.0
    %2658 = vmatpush1.msra.mxu0 %v2652
    %2659 = vmatprep.subr.mxu0 0.0
    %2660 = vmatpush1.msra.mxu0 %v2653
    %2661 = vmatprep.subr.mxu0 0.0
    %2662 = vmatpush1.msra.mxu0 0.0
    %2663 = vmatprep.subr.mxu0 0.0
    %2664 = vmatpush1.msra.mxu0 0.0
    %2665 = vmatprep.subr.mxu0 0.0
    %2666 = vmatpush1.msra.mxu0 0.0
    %2667 = vmatprep.subr.mxu0 0.0
    %2668 = vmatpush1.msra.mxu0 0.0
    %2669 = vmatprep.subr.mxu0 0.0
    %2670 = vmatpush1.msra.mxu0 0.0
    %2671 = vmatprep.subr.mxu0 0.0
    %2672 = vmatpush1.msra.mxu0 0.0
    %2673 = vmatprep.subr.mxu0 0.0
    %2674 = vmatpush1.msra.mxu0 0.0
    %2675 = vmatprep.subr.mxu0 0.0
    %2676 = vmatpush1.msra.mxu0 0.0
    %2677 = vmatprep.subr.mxu0 0.0
    %2678 = vmatpush1.msra.mxu0 0.0
    %2679 = vmatprep.subr.mxu0 0.0
    %2680 = vmatpush1.msra.mxu0 0.0
    %2681 = vmatprep.subr.mxu0 0.0
    %2682 = vmatpush1.msra.mxu0 0.0
    %2683 = vmatprep.subr.mxu0 0.0
    %2684 = vmatpush1.msra.mxu0 0.0
    %2685 = vmatprep.subr.mxu0 0.0
    %2686 = vmatpush1.msra.mxu0 0.0
    %2687 = vmatprep.subr.mxu0 0.0
    %2688 = vmatpush1.msra.mxu0 0.0
    %2689 = vmatprep.subr.mxu0 0.0
    %2690 = vmatpush1.msra.mxu0 0.0
    %2691 = vmatprep.subr.mxu0 0.0
    %2692 = vmatpush1.msra.mxu0 0.0
    %2693 = vmatprep.subr.mxu0 0.0
    %2694 = vmatpush1.msra.mxu0 0.0
    %2695 = vmatprep.subr.mxu0 0.0
    %2696 = vmatpush1.msra.mxu0 0.0
    %2697 = vmatprep.subr.mxu0 0.0
    %2698 = vmatpush1.msra.mxu0 0.0
    %2699 = vmatprep.subr.mxu0 0.0
    %2700 = vmatpush1.msra.mxu0 0.0
    %2701 = vmatprep.subr.mxu0 0.0
    %2702 = vmatpush1.msra.mxu0 0.0
    %2703 = vmatprep.subr.mxu0 0.0
    %2704 = vmatpush1.msra.mxu0 0.0
    %2705 = vmatprep.subr.mxu0 0.0
    %2706 = vmatpush1.msra.mxu0 0.0
    %2707 = vmatprep.subr.mxu0 0.0
    %2708 = vmatpush1.msra.mxu0 0.0
    %2709 = vmatprep.subr.mxu0 0.0
    %2710 = vmatpush1.msra.mxu0 0.0
    %2711 = vmatprep.subr.mxu0 0.0
    %2712 = vmatpush1.msra.mxu0 0.0
    %2713 = vmatprep.subr.mxu0 0.0
    %2714 = vmatpush1.msra.mxu0 0.0
    %2715 = vmatprep.subr.mxu0 0.0
    %2716 = vmatpush1.msra.mxu0 0.0
    %2717 = vmatprep.subr.mxu0 0.0
    %2718 = vmatpush1.msra.mxu0 0.0
    %2719 = vmatprep.subr.mxu0 0.0
    %2720 = vmatpush1.msra.mxu0 0.0
    %2721 = vmatprep.mubr.f32.mxu0 0.0
    %2722 = vmatmul.mubr.f32.gmra.mrb[0].mxu0 %v2655
    %v2723 = vpop.f32.mrb[0].mxu0
    %v2724 = vadd.f32 0.0, %v2723
    %v2725 = vpop.f32.mrb[0].mxu0
    %2726 = vdwg.mxu0
    %v2727 = vld [vmem:[%s1 + $0x30] sm:$0x1]
    %v2728 = vld [vmem:[%s1 + $0x31] sm:$0x1]
    %vm2729 = vcmask 254976
    %v2730 = vsel %vm2729, %v2724, 0.0
    %2731 = vadd.xlane.f32.xlu0 %v2730
    %v2732 = vpop.xlane.xlu0 %2731
    %v2733 = vmul.f32 %v2732, %v43
    %v2734 = vmul.f32 %v2724, %v2724
    %v2735 = vsel %vm2729, %v2734, 0.0
    %2736 = vadd.xlane.f32.xlu0 %v2735
    %v2737 = vpop.xlane.xlu0 %2736
    %v2738 = vmul.f32 %v2737, %v43
    %v2739 = vmul.f32 %v2733, %v2733
    %v2740 = vsub.f32 %v2738, %v2739
    %v2741 = vsub.f32 %v2724, %v2733
    %v2742 = vadd.f32 %v2740, 1e-05
    %v2743 = vrsqrt.pop %v2742
    %v2744 = vmul.f32 %v2741, %v2743
    %v2745 = vlaneseq
    %v2746 = vshrl.u32 %v2745, 7
    %v2747 = vsub.s32 0, %v2746
    %v2748 = vrot.slane %v2727, %v2747
    %v2749 = vmul.f32 %v2744, %v2748
    %v2750 = vlaneseq
    %v2751 = vshrl.u32 %v2750, 7
    %v2752 = vsub.s32 0, %v2751
    %v2753 = vrot.slane %v2728, %v2752
    %v2754 = vadd.f32 %v2749, %v2753
    %v2755 = vld [vmem:[%s1 + $0x10] sm:$0xff]
    %v2756 = vld [vmem:[%s1 + $0x18] sm:$0xff]
    %v2757 = vld [vmem:[%s1 + $0x20] sm:$0xff]
    %v2758 = vld [vmem:[%s1 + $0x28] sm:$0xff]
    %v2760 = vsel %vm36, %v2754, 0
    %2762 = vmatprep.subr.mxu0 0.0
    %2763 = vmatpush1.msra.mxu0 %v2755
    %2764 = vmatprep.subr.mxu0 0.0
    %2765 = vmatpush1.msra.mxu0 %v2756
    %2766 = vmatprep.subr.mxu0 0.0
    %2767 = vmatpush1.msra.mxu0 %v2757
    %2768 = vmatprep.subr.mxu0 0.0
    %2769 = vmatpush1.msra.mxu0 %v2758
    %2770 = vmatprep.subr.mxu0 0.0
    %2771 = vmatpush1.msra.mxu0 0.0
    %2772 = vmatprep.subr.mxu0 0.0
    %2773 = vmatpush1.msra.mxu0 0.0
    %2774 = vmatprep.subr.mxu0 0.0
    %2775 = vmatpush1.msra.mxu0 0.0
    %2776 = vmatprep.subr.mxu0 0.0
    %2777 = vmatpush1.msra.mxu0 0.0
    %2778 = vmatprep.subr.mxu0 0.0
    %2779 = vmatpush1.msra.mxu0 0.0
    %2780 = vmatprep.subr.mxu0 0.0
    %2781 = vmatpush1.msra.mxu0 0.0
    %2782 = vmatprep.subr.mxu0 0.0
    %2783 = vmatpush1.msra.mxu0 0.0
    %2784 = vmatprep.subr.mxu0 0.0
    %2785 = vmatpush1.msra.mxu0 0.0
    %2786 = vmatprep.subr.mxu0 0.0
    %2787 = vmatpush1.msra.mxu0 0.0
    %2788 = vmatprep.subr.mxu0 0.0
    %2789 = vmatpush1.msra.mxu0 0.0
    %2790 = vmatprep.subr.mxu0 0.0
    %2791 = vmatpush1.msra.mxu0 0.0
    %2792 = vmatprep.subr.mxu0 0.0
    %2793 = vmatpush1.msra.mxu0 0.0
    %2794 = vmatprep.subr.mxu0 0.0
    %2795 = vmatpush1.msra.mxu0 0.0
    %2796 = vmatprep.subr.mxu0 0.0
    %2797 = vmatpush1.msra.mxu0 0.0
    %2798 = vmatprep.subr.mxu0 0.0
    %2799 = vmatpush1.msra.mxu0 0.0
    %2800 = vmatprep.subr.mxu0 0.0
    %2801 = vmatpush1.msra.mxu0 0.0
    %2802 = vmatprep.subr.mxu0 0.0
    %2803 = vmatpush1.msra.mxu0 0.0
    %2804 = vmatprep.subr.mxu0 0.0
    %2805 = vmatpush1.msra.mxu0 0.0
    %2806 = vmatprep.subr.mxu0 0.0
    %2807 = vmatpush1.msra.mxu0 0.0
    %2808 = vmatprep.subr.mxu0 0.0
    %2809 = vmatpush1.msra.mxu0 0.0
    %2810 = vmatprep.subr.mxu0 0.0
    %2811 = vmatpush1.msra.mxu0 0.0
    %2812 = vmatprep.subr.mxu0 0.0
    %2813 = vmatpush1.msra.mxu0 0.0
    %2814 = vmatprep.subr.mxu0 0.0
    %2815 = vmatpush1.msra.mxu0 0.0
    %2816 = vmatprep.subr.mxu0 0.0
    %2817 = vmatpush1.msra.mxu0 0.0
    %2818 = vmatprep.subr.mxu0 0.0
    %2819 = vmatpush1.msra.mxu0 0.0
    %2820 = vmatprep.subr.mxu0 0.0
    %2821 = vmatpush1.msra.mxu0 0.0
    %2822 = vmatprep.subr.mxu0 0.0
    %2823 = vmatpush1.msra.mxu0 0.0
    %2824 = vmatprep.subr.mxu0 0.0
    %2825 = vmatpush1.msra.mxu0 0.0
    %2826 = vmatprep.mubr.f32.mxu0 0.0
    %2827 = vmatmul.mubr.f32.gmra.mrb[0].mxu0 %v2760
    %v2828 = vpop.f32.mrb[0].mxu0
    %v2829 = vadd.f32 0.0, %v2828
    %v2830 = vpop.f32.mrb[0].mxu0
    %2831 = vdwg.mxu0
    %vm2832 = vcmask 123904
    %2833 = vst.msk [vmem:[#allocation6] sm:$0x3] %vm2832, %v2829
    // Predicated region
    $region18: #{text_encoder_forward.1} parent=1 // pred_check
      _
    $region19: #{text_encoder_forward.1} parent=1 // pred_check_branch
      %2835 = sbr.rel (0) target = $region21
    $region20: #{text_encoder_forward.1} parent=1 // pred_region
      %s2837 = ssub.s32 32, 32
      %2838 = vsyncadd [#allocation5], %s2837
      %s2840 = sshll.u32 [#allocation6], 4
      %s2841 = int_to_ptr.vmem [resolvable:$true] %s2840
      %2843 = dma.vmem_to_hbm [thread:$0]  %s2841, 32, %s3, [#allocation5]
    $region21: #{text_encoder_forward.1} parent=1 // pred_fallthru
      _
    // Predicated region
    $region22: #{text_encoder_forward.1} parent=1 // pred_check
      _
    $region23: #{text_encoder_forward.1} parent=1 // pred_check_branch
      %2845 = sbr.rel (0) target = $region25
    $region24: #{text_encoder_forward.1} parent=1 // pred_region
      %2846 = dma.done [#allocation5], 32
    $region25: #{text_encoder_forward.1} parent=1 // pred_fallthru
      _
    %2847 = vsyncpa [#allocation4], 1
    %2848 = vsyncpa [#allocation5], 1

</llo_original>
